<compile_context>
chip_gen: v7x
topology: tpu7x:2x2x1
jax: 0.10.0
libtpu: 0.0.40
codegen_flags: <defaults>
</compile_context>

<pallas_src>
import functools
import math

import jax
import jax.numpy as jnp
from jax.experimental import pallas as pl
from jax.experimental.pallas import tpu as pltpu


# ----------------------------------------------------------------------------
# Fused decoder-layer kernel (b_tile batch elements per grid step)
# ----------------------------------------------------------------------------
def decoder_layer_kernel(
        x_ref, enc_ref, mmask_ref, emask_ref,
        wqkv1_ref, wo1_ref, g1_ref, b1_ref,
        wq2_ref, wkv2_ref, wo2_ref, g2_ref, b2_ref,
        w1_ref, w2_ref, g3_ref, b3_ref,
        out_ref, mattn_ref, xattn_ref,
        *, n_heads, dim_k, dim_v, b_tile, s_q, s_kv, compute_dtype):
    H, dk, dv = n_heads, dim_k, dim_v
    scale = 1.0 / math.sqrt(dk)

    def mm(a, w_ref):
        # MXU matmul: operands in compute_dtype, accumulation in f32.
        return jnp.dot(a.astype(compute_dtype), w_ref[...],
                       preferred_element_type=jnp.float32)

    def layernorm(v, g_ref, b_ref, eps=1e-5):
        mean = jnp.mean(v, axis=-1, keepdims=True)
        var = jnp.mean((v - mean) ** 2, axis=-1, keepdims=True)
        return (v - mean) * jax.lax.rsqrt(var + eps) * g_ref[...] + b_ref[...]

    def attention(q_all, k_all, v_all, mask_ref, attn_ref, s_k):
        """q_all [b_tile*s_q, H*dk], k_all/v_all [b_tile*s_k, H*dk|H*dv]."""
        ctx_rows = []
        for bi in range(b_tile):
            q_b = q_all[bi * s_q:(bi + 1) * s_q]
            k_b = k_all[bi * s_k:(bi + 1) * s_k]
            v_b = v_all[bi * s_k:(bi + 1) * s_k]
            # Head views via cheap static lane slices of the packed projections.
            qh = jnp.stack([q_b[:, h * dk:(h + 1) * dk] for h in range(H)], axis=0)
            kh = jnp.stack([k_b[:, h * dk:(h + 1) * dk] for h in range(H)], axis=0)
            vh = jnp.stack([v_b[:, h * dv:(h + 1) * dv] for h in range(H)], axis=0)

            s = jnp.einsum("hqd,hkd->hqk",
                           qh.astype(compute_dtype), kh.astype(compute_dtype),
                           preferred_element_type=jnp.float32)
            # Exact masked_fill(-1e9) semantics (also correct for fully-masked
            # rows, which then softmax to the uniform distribution).
            s = jnp.where(mask_ref[bi][None] > 0.5, jnp.float32(-1e9), s)
            s = s - jnp.max(s, axis=-1, keepdims=True)
            e = jnp.exp(s)
            attn = e / jnp.sum(e, axis=-1, keepdims=True)   # exact normalization
            attn_ref[bi] = attn                              # [H, s_q, s_k] store

            ctx = jnp.einsum("hqk,hkv->hqv",
                             attn.astype(compute_dtype), vh.astype(compute_dtype),
                             preferred_element_type=jnp.float32)
            # Lane-pack the heads so the output projection is ONE matmul.
            ctx_rows.append(jnp.concatenate([ctx[h] for h in range(H)], axis=-1))
        return ctx_rows[0] if b_tile == 1 else jnp.concatenate(ctx_rows, axis=0)

    x = x_ref[...]        # [b_tile*s_q, D] f32
    enc = enc_ref[...]    # [b_tile*s_kv, D] f32

    # --- 1) masked self-attention (+ residual + LayerNorm) -------------------
    qkv = mm(x, wqkv1_ref)                       # one packed projection matmul
    q1 = qkv[:, :H * dk] * scale                 # scale on q (H*dk, not H*Sk)
    k1 = qkv[:, H * dk:2 * H * dk]
    v1 = qkv[:, 2 * H * dk:2 * H * dk + H * dv]
    ctx1 = attention(q1, k1, v1, mmask_ref, mattn_ref, s_q)
    h1 = layernorm(mm(ctx1, wo1_ref) + x, g1_ref, b1_ref)

    # --- 2) cross-attention over encoder outputs (+ residual + LayerNorm) ----
    q2 = mm(h1, wq2_ref) * scale
    kv2 = mm(enc, wkv2_ref)                      # fused K/V projection
    k2 = kv2[:, :H * dk]
    v2 = kv2[:, H * dk:H * dk + H * dv]
    ctx2 = attention(q2, k2, v2, emask_ref, xattn_ref, s_kv)
    h2 = layernorm(mm(ctx2, wo2_ref) + h1, g2_ref, b2_ref)

    # --- 3) feed-forward (+ residual + LayerNorm) -----------------------------
    f = jnp.maximum(mm(h2, w1_ref), 0.0)
    y = mm(f, w2_ref)
    out_ref[...] = layernorm(y + h2, g3_ref, b3_ref)


# ----------------------------------------------------------------------------
# Wrapper
# ----------------------------------------------------------------------------
def decoder_layer(params, inputs, enc_outputs, masked_atten_mask, enc_atten_mask,
                  *, compute_dtype=jnp.bfloat16, b_tile=None):
    B, Sq, D = inputs.shape
    Sk = enc_outputs.shape[1]
    pm, pc, pf = params["masked_atten"], params["atten"], params["ffnet"]
    H, dk, dv = pm["n_heads"], pm["dim_k"], pm["dim_v"]
    F = pf["w1"].shape[1]

    if b_tile is None:
        # Fold as much batch as possible into the matmul M dimension while
        # keeping >=2 "parallel" grid steps so both v7x TensorCores have work.
        b_tile = B // 2 if (B % 2 == 0 and B >= 4) else 1
    assert B % b_tile == 0, "batch must be divisible by b_tile"
    grid = (B // b_tile,)
    mq, mk = b_tile * Sq, b_tile * Sk

    # Wrapper-side layout plumbing: fused + compute_dtype weights, 2-D row views.
    wqkv1 = jnp.concatenate([pm["wq"], pm["wk"], pm["wv"]], axis=1).astype(compute_dtype)
    wo1 = pm["wo"].astype(compute_dtype)
    wq2 = pc["wq"].astype(compute_dtype)
    wkv2 = jnp.concatenate([pc["wk"], pc["wv"]], axis=1).astype(compute_dtype)
    wo2 = pc["wo"].astype(compute_dtype)
    w1 = pf["w1"].astype(compute_dtype)
    w2 = pf["w2"].astype(compute_dtype)
    x2d = inputs.reshape(B * Sq, D)
    enc2d = enc_outputs.reshape(B * Sk, D)

    kernel = functools.partial(
        decoder_layer_kernel, n_heads=H, dim_k=dk, dim_v=dv,
        b_tile=b_tile, s_q=Sq, s_kv=Sk, compute_dtype=compute_dtype)

    def rep(shape):
        # Replicated (grid-invariant) weight block.
        # TODO(synk): on v7x, single-buffer these (pipeline_mode=pl.Buffered(1))
        # to halve their VMEM footprint at production D/F.
        return pl.BlockSpec(shape, lambda i: (0,) * len(shape))

    in_specs = [
        pl.BlockSpec((mq, D), lambda i: (i, 0)),             # decoder rows
        pl.BlockSpec((mk, D), lambda i: (i, 0)),             # encoder rows
        pl.BlockSpec((b_tile, Sq, Sq), lambda i: (i, 0, 0)),  # self-attn mask
        pl.BlockSpec((b_tile, Sq, Sk), lambda i: (i, 0, 0)),  # cross-attn mask
        rep(wqkv1.shape), rep(wo1.shape), rep((1, D)), rep((1, D)),
        rep(wq2.shape), rep(wkv2.shape), rep(wo2.shape), rep((1, D)), rep((1, D)),
        rep(w1.shape), rep(w2.shape), rep((1, D)), rep((1, D)),
    ]
    out_specs = (
        pl.BlockSpec((mq, D), lambda i: (i, 0)),
        pl.BlockSpec((b_tile, H, Sq, Sq), lambda i: (i, 0, 0, 0)),
        pl.BlockSpec((b_tile, H, Sq, Sk), lambda i: (i, 0, 0, 0)),
    )
    out_shape = (
        jax.ShapeDtypeStruct((B * Sq, D), jnp.float32),
        jax.ShapeDtypeStruct((B, H, Sq, Sq), jnp.float32),
        jax.ShapeDtypeStruct((B, H, Sq, Sk), jnp.float32),
    )

    # Scoped-VMEM limit sized from the (double-buffered) block footprint plus
    # headroom for in-kernel activations; capped at v7x's 64 MiB physical VMEM.
    wbytes = jnp.dtype(compute_dtype).itemsize
    block_bytes = 4 * (2 * mq * D + mk * D + b_tile * Sq * (Sq + Sk)
                       + b_tile * H * Sq * (Sq + Sk) + 6 * D)
    block_bytes += wbytes * int(wqkv1.size + wo1.size + wq2.size + wkv2.size
                                + wo2.size + w1.size + w2.size)
    act_bytes = 4 * (mq * (3 * H * dk + F + 4 * D)
                     + 2 * b_tile * H * Sq * max(Sq, Sk))
    vmem_limit = int(min(64 * 2 ** 20, max(16 * 2 ** 20, 2 * block_bytes + act_bytes)))

    out2d, mattn, xattn = pl.pallas_call(
        kernel,
        out_shape=out_shape,
        grid=grid,
        in_specs=in_specs,
        out_specs=out_specs,
        compiler_params=pltpu.CompilerParams(
            dimension_semantics=("parallel",),
            vmem_limit_bytes=vmem_limit),
    )(
        x2d, enc2d, masked_atten_mask, enc_atten_mask,
        wqkv1, wo1, pm["gamma"], pm["beta"],
        wq2, wkv2, wo2, pc["gamma"], pc["beta"],
        w1, w2, pf["gamma"], pf["beta"],
    )
    return out2d.reshape(B, Sq, D), mattn, xattn


# ----------------------------------------------------------------------------
# Pure-JAX reference (exact f32 matmuls; correctness check only)
# ----------------------------------------------------------------------------
_HIGHEST = jax.lax.Precision.HIGHEST


def _ref_ln(x, gamma, beta, eps=1e-5):
    mean = jnp.mean(x, axis=-1, keepdims=True)
    var = jnp.mean((x - mean) ** 2, axis=-1, keepdims=True)
    return (x - mean) / jnp.sqrt(var + eps) * gamma + beta


def _ref_mha(q_in, kv_in, mask, p):
    B, Sq, D = q_in.shape
    Sk = kv_in.shape[1]
    H, dk, dv = p["n_heads"], p["dim_k"], p["dim_v"]
    q = jnp.dot(q_in, p["wq"], precision=_HIGHEST).reshape(B, Sq, H, dk).transpose(0, 2, 1, 3)
    k = jnp.dot(kv_in, p["wk"], precision=_HIGHEST).reshape(B, Sk, H, dk).transpose(0, 2, 1, 3)
    v = jnp.dot(kv_in, p["wv"], precision=_HIGHEST).reshape(B, Sk, H, dv).transpose(0, 2, 1, 3)
    scores = jnp.einsum("bhqd,bhkd->bhqk", q, k, precision=_HIGHEST) / math.sqrt(dk)
    scores = jnp.where(mask[:, None] > 0.5, -1e9, scores)
    attn = jax.nn.softmax(scores, axis=-1)
    ctx = jnp.einsum("bhqk,bhkd->bhqd", attn, v, precision=_HIGHEST)
    ctx = ctx.transpose(0, 2, 1, 3).reshape(B, Sq, H * dv)
    out = jnp.dot(ctx, p["wo"], precision=_HIGHEST) + q_in
    return _ref_ln(out, p["gamma"][0], p["beta"][0]), attn


def _ref_ffn(x, p):
    y = jnp.maximum(jnp.dot(x, p["w1"], precision=_HIGHEST), 0.0)
    y = jnp.dot(y, p["w2"], precision=_HIGHEST)
    return _ref_ln(y + x, p["gamma"][0], p["beta"][0])


def _ref_decoder_layer(params, inputs, enc_outputs, m_mask, e_mask):
    o, ma = _ref_mha(inputs, inputs, m_mask, params["masked_atten"])
    o, a = _ref_mha(o, enc_outputs, e_mask, params["atten"])
    o = _ref_ffn(o, params["ffnet"])
    return o, ma, a


# ----------------------------------------------------------------------------
# Parameter / input construction
# ----------------------------------------------------------------------------
def make_mha_params(key, dim, n_heads):
    dk = dv = dim // n_heads
    k1, k2, k3, k4 = jax.random.split(key, 4)
    s = 1.0 / math.sqrt(dim)
    return {
        "n_heads": n_heads, "dim_k": dk, "dim_v": dv,
        "wq": jax.random.normal(k1, (dim, n_heads * dk), jnp.float32) * s,
        "wk": jax.random.normal(k2, (dim, n_heads * dk), jnp.float32) * s,
        "wv": jax.random.normal(k3, (dim, n_heads * dv), jnp.float32) * s,
        "wo": jax.random.normal(k4, (n_heads * dv, dim), jnp.float32) * s,
        "gamma": jnp.ones((1, dim), jnp.float32),
        "beta": jnp.zeros((1, dim), jnp.float32),
    }


def make_ffn_params(key, dim, ff_dim):
    k1, k2 = jax.random.split(key, 2)
    return {
        "w1": jax.random.normal(k1, (dim, ff_dim), jnp.float32) / math.sqrt(dim),
        "w2": jax.random.normal(k2, (ff_dim, dim), jnp.float32) / math.sqrt(ff_dim),
        "gamma": jnp.ones((1, dim), jnp.float32),
        "beta": jnp.zeros((1, dim), jnp.float32),
    }


if __name__ == "__main__":
    B, S_dec, S_enc = 2, 8, 16
    dim, ff_dim, n_heads = 32, 64, 4

    key = jax.random.PRNGKey(0)
    k_in, k_enc, k_ma, k_a, k_ff = jax.random.split(key, 5)

    params = {
        "masked_atten": make_mha_params(k_ma, dim, n_heads),
        "atten": make_mha_params(k_a, dim, n_heads),
        "ffnet": make_ffn_params(k_ff, dim, ff_dim),
    }

    inputs = jax.random.normal(k_in, (B, S_dec, dim), jnp.float32)
    enc_outputs = jax.random.normal(k_enc, (B, S_enc, dim), jnp.float32)

    # Causal (subsequent) mask for decoder self-attention: 1.0 == masked.
    causal = jnp.triu(jnp.ones((S_dec, S_dec), jnp.float32), k=1)
    masked_atten_mask = jnp.broadcast_to(causal, (B, S_dec, S_dec))
    # Encoder padding mask: batch 1 has its last 4 encoder positions padded.
    pad = jnp.zeros((B, S_enc), jnp.float32).at[1, -4:].set(1.0)
    enc_atten_mask = jnp.broadcast_to(pad[:, None, :], (B, S_dec, S_enc))

    ref_out, ref_ma, ref_a = _ref_decoder_layer(
        params, inputs, enc_outputs, masked_atten_mask, enc_atten_mask)

    # ---- f32 MXU operands: parity check against the exact-f32 reference ----
    out, mattn, xattn = decoder_layer(
        params, inputs, enc_outputs, masked_atten_mask, enc_atten_mask,
        compute_dtype=jnp.float32)
    jax.block_until_ready((out, mattn, xattn))

    assert out.shape == (B, S_dec, dim)
    assert mattn.shape == (B, n_heads, S_dec, S_dec)
    assert xattn.shape == (B, n_heads, S_dec, S_enc)
    # Exact softmax normalization: probabilities sum to 1 (no approx reciprocal).
    assert jnp.allclose(jnp.sum(mattn, -1), 1.0, atol=1e-5)
    assert jnp.allclose(jnp.sum(xattn, -1), 1.0, atol=1e-5)
    # Envelope covers only XLA-vs-Mosaic differences in f32 MXU pass counts;
    # masking and softmax are computed exactly.
    assert jnp.allclose(out, ref_out, atol=2e-2, rtol=2e-2)
    assert jnp.allclose(mattn, ref_ma, atol=1e-2, rtol=1e-2)
    assert jnp.allclose(xattn, ref_a, atol=1e-2, rtol=1e-2)

    # ---- bf16 MXU operands (production default): coarse sanity bound only ----
    out_bf, ma_bf, a_bf = decoder_layer(
        params, inputs, enc_outputs, masked_atten_mask, enc_atten_mask,
        compute_dtype=jnp.bfloat16)
    jax.block_until_ready((out_bf, ma_bf, a_bf))
    assert jnp.allclose(out_bf, ref_out, atol=1e-1, rtol=1e-1)
    assert jnp.allclose(ma_bf, ref_ma, atol=1e-1, rtol=1e-1)
    assert jnp.allclose(a_bf, ref_a, atol=1e-1, rtol=1e-1)

    print("KERNEL_OK")
</pallas_src>

<mosaic_0001>
module attributes {stable_mosaic.version = 11 : i64} {
  func.func @decoder_layer_kernel(%arg0: i32, %arg1: memref<8x32xf32, #tpu.memory_space<vmem>>, %arg2: memref<16x32xf32, #tpu.memory_space<vmem>>, %arg3: memref<1x8x8xf32, #tpu.memory_space<vmem>>, %arg4: memref<1x8x16xf32, #tpu.memory_space<vmem>>, %arg5: memref<32x96xf32, #tpu.memory_space<vmem>>, %arg6: memref<32x32xf32, #tpu.memory_space<vmem>>, %arg7: memref<1x32xf32, #tpu.memory_space<vmem>>, %arg8: memref<1x32xf32, #tpu.memory_space<vmem>>, %arg9: memref<32x32xf32, #tpu.memory_space<vmem>>, %arg10: memref<32x64xf32, #tpu.memory_space<vmem>>, %arg11: memref<32x32xf32, #tpu.memory_space<vmem>>, %arg12: memref<1x32xf32, #tpu.memory_space<vmem>>, %arg13: memref<1x32xf32, #tpu.memory_space<vmem>>, %arg14: memref<32x64xf32, #tpu.memory_space<vmem>>, %arg15: memref<64x32xf32, #tpu.memory_space<vmem>>, %arg16: memref<1x32xf32, #tpu.memory_space<vmem>>, %arg17: memref<1x32xf32, #tpu.memory_space<vmem>>, %arg18: memref<8x32xf32, #tpu.memory_space<vmem>>, %arg19: memref<1x4x8x8xf32, #tpu.memory_space<vmem>>, %arg20: memref<1x4x8x16xf32, #tpu.memory_space<vmem>>) attributes {dimension_semantics = [#tpu.dimension_semantics<parallel>], iteration_bounds = array<i64: 2>, scalar_prefetch = 0 : i64, scratch_operands = 0 : i64, tpu.core_type = #tpu.core_type<tc>, window_params = [{transform_indices = @transform_0, window_bounds = array<i64: 8, 32>}, {transform_indices = @transform_1, window_bounds = array<i64: 16, 32>}, {transform_indices = @transform_2, window_bounds = array<i64: 1, 8, 8>}, {transform_indices = @transform_3, window_bounds = array<i64: 1, 8, 16>}, {pipeline_mode = #tpu.pipeline_mode<synchronous>, transform_indices = @transform_4, window_bounds = array<i64: 32, 96>}, {pipeline_mode = #tpu.pipeline_mode<synchronous>, transform_indices = @transform_5, window_bounds = array<i64: 32, 32>}, {pipeline_mode = #tpu.pipeline_mode<synchronous>, transform_indices = @transform_6, window_bounds = array<i64: 1, 32>}, {pipeline_mode = #tpu.pipeline_mode<synchronous>, transform_indices = @transform_7, window_bounds = array<i64: 1, 32>}, {pipeline_mode = #tpu.pipeline_mode<synchronous>, transform_indices = @transform_8, window_bounds = array<i64: 32, 32>}, {pipeline_mode = #tpu.pipeline_mode<synchronous>, transform_indices = @transform_9, window_bounds = array<i64: 32, 64>}, {pipeline_mode = #tpu.pipeline_mode<synchronous>, transform_indices = @transform_10, window_bounds = array<i64: 32, 32>}, {pipeline_mode = #tpu.pipeline_mode<synchronous>, transform_indices = @transform_11, window_bounds = array<i64: 1, 32>}, {pipeline_mode = #tpu.pipeline_mode<synchronous>, transform_indices = @transform_12, window_bounds = array<i64: 1, 32>}, {pipeline_mode = #tpu.pipeline_mode<synchronous>, transform_indices = @transform_13, window_bounds = array<i64: 32, 64>}, {pipeline_mode = #tpu.pipeline_mode<synchronous>, transform_indices = @transform_14, window_bounds = array<i64: 64, 32>}, {pipeline_mode = #tpu.pipeline_mode<synchronous>, transform_indices = @transform_15, window_bounds = array<i64: 1, 32>}, {pipeline_mode = #tpu.pipeline_mode<synchronous>, transform_indices = @transform_16, window_bounds = array<i64: 1, 32>}, {transform_indices = @transform_17, window_bounds = array<i64: 8, 32>}, {transform_indices = @transform_18, window_bounds = array<i64: 1, 4, 8, 8>}, {transform_indices = @transform_19, window_bounds = array<i64: 1, 4, 8, 16>}]} {
    %c0 = arith.constant 0 : index
    %c0_0 = arith.constant 0 : index
    %0 = vector.load %arg1[%c0, %c0_0] : memref<8x32xf32, #tpu.memory_space<vmem>>, vector<8x32xf32>
    %c0_1 = arith.constant 0 : index
    %c0_2 = arith.constant 0 : index
    %1 = vector.load %arg2[%c0_1, %c0_2] : memref<16x32xf32, #tpu.memory_space<vmem>>, vector<16x32xf32>
    %c0_3 = arith.constant 0 : index
    %c0_4 = arith.constant 0 : index
    %2 = vector.load %arg5[%c0_3, %c0_4] : memref<32x96xf32, #tpu.memory_space<vmem>>, vector<32x96xf32>
    %cst = arith.constant dense<0.000000e+00> : vector<8x96xf32>
    %3 = tpu.matmul %0, %2, %cst {dimension_numbers = #tpu.dot_dimension_numbers<[1], [0], [0], [1], [0, 0, 1, 1], [], []>} : vector<8x32xf32>, vector<32x96xf32>, vector<8x96xf32> -> vector<8x96xf32>
    %4 = vector.extract_strided_slice %3 {offsets = [0, 0], sizes = [8, 32], strides = [1, 1]} : vector<8x96xf32> to vector<8x32xf32>
    %cst_5 = arith.constant 0.353553385 : f32
    %5 = vector.broadcast %cst_5 : f32 to vector<8x32xf32>
    %6 = arith.mulf %4, %5 : vector<8x32xf32>
    %7 = vector.extract_strided_slice %3 {offsets = [0, 32], sizes = [8, 32], strides = [1, 1]} : vector<8x96xf32> to vector<8x32xf32>
    %8 = vector.extract_strided_slice %3 {offsets = [0, 64], sizes = [8, 32], strides = [1, 1]} : vector<8x96xf32> to vector<8x32xf32>
    %9 = vector.extract_strided_slice %6 {offsets = [0, 0], sizes = [8, 8], strides = [1, 1]} : vector<8x32xf32> to vector<8x8xf32>
    %10 = vector.extract_strided_slice %6 {offsets = [0, 8], sizes = [8, 8], strides = [1, 1]} : vector<8x32xf32> to vector<8x8xf32>
    %11 = vector.extract_strided_slice %6 {offsets = [0, 16], sizes = [8, 8], strides = [1, 1]} : vector<8x32xf32> to vector<8x8xf32>
    %12 = vector.extract_strided_slice %6 {offsets = [0, 24], sizes = [8, 8], strides = [1, 1]} : vector<8x32xf32> to vector<8x8xf32>
    %13 = vector.shape_cast %9 : vector<8x8xf32> to vector<1x8x8xf32>
    %14 = vector.shape_cast %10 : vector<8x8xf32> to vector<1x8x8xf32>
    %15 = vector.shape_cast %11 : vector<8x8xf32> to vector<1x8x8xf32>
    %16 = vector.shape_cast %12 : vector<8x8xf32> to vector<1x8x8xf32>
    %17 = tpu.concatenate %13, %14, %15, %16 in 0 : vector<1x8x8xf32>, vector<1x8x8xf32>, vector<1x8x8xf32>, vector<1x8x8xf32> -> vector<4x8x8xf32>
    %18 = vector.extract_strided_slice %7 {offsets = [0, 0], sizes = [8, 8], strides = [1, 1]} : vector<8x32xf32> to vector<8x8xf32>
    %19 = vector.extract_strided_slice %7 {offsets = [0, 8], sizes = [8, 8], strides = [1, 1]} : vector<8x32xf32> to vector<8x8xf32>
    %20 = vector.extract_strided_slice %7 {offsets = [0, 16], sizes = [8, 8], strides = [1, 1]} : vector<8x32xf32> to vector<8x8xf32>
    %21 = vector.extract_strided_slice %7 {offsets = [0, 24], sizes = [8, 8], strides = [1, 1]} : vector<8x32xf32> to vector<8x8xf32>
    %22 = vector.shape_cast %18 : vector<8x8xf32> to vector<1x8x8xf32>
    %23 = vector.shape_cast %19 : vector<8x8xf32> to vector<1x8x8xf32>
    %24 = vector.shape_cast %20 : vector<8x8xf32> to vector<1x8x8xf32>
    %25 = vector.shape_cast %21 : vector<8x8xf32> to vector<1x8x8xf32>
    %26 = tpu.concatenate %22, %23, %24, %25 in 0 : vector<1x8x8xf32>, vector<1x8x8xf32>, vector<1x8x8xf32>, vector<1x8x8xf32> -> vector<4x8x8xf32>
    %27 = vector.extract_strided_slice %8 {offsets = [0, 0], sizes = [8, 8], strides = [1, 1]} : vector<8x32xf32> to vector<8x8xf32>
    %28 = vector.extract_strided_slice %8 {offsets = [0, 8], sizes = [8, 8], strides = [1, 1]} : vector<8x32xf32> to vector<8x8xf32>
    %29 = vector.extract_strided_slice %8 {offsets = [0, 16], sizes = [8, 8], strides = [1, 1]} : vector<8x32xf32> to vector<8x8xf32>
    %30 = vector.extract_strided_slice %8 {offsets = [0, 24], sizes = [8, 8], strides = [1, 1]} : vector<8x32xf32> to vector<8x8xf32>
    %31 = vector.shape_cast %27 : vector<8x8xf32> to vector<1x8x8xf32>
    %32 = vector.shape_cast %28 : vector<8x8xf32> to vector<1x8x8xf32>
    %33 = vector.shape_cast %29 : vector<8x8xf32> to vector<1x8x8xf32>
    %34 = vector.shape_cast %30 : vector<8x8xf32> to vector<1x8x8xf32>
    %35 = tpu.concatenate %31, %32, %33, %34 in 0 : vector<1x8x8xf32>, vector<1x8x8xf32>, vector<1x8x8xf32>, vector<1x8x8xf32> -> vector<4x8x8xf32>
    "tpu.trace_start"() <{level = 10 : i32, message = "hqd,hkd->hqk"}> : () -> ()
    %cst_6 = arith.constant dense<0.000000e+00> : vector<4x8x8xf32>
    %36 = tpu.matmul %17, %26, %cst_6 {dimension_numbers = #tpu.dot_dimension_numbers<[2], [2], [1], [1], [0, 0, 0, 1, 1, 1], [0], [0]>} : vector<4x8x8xf32>, vector<4x8x8xf32>, vector<4x8x8xf32> -> vector<4x8x8xf32>
    "tpu.trace_stop"() : () -> ()
    %c0_7 = arith.constant 0 : index
    %c0_8 = arith.constant 0 : index
    %c0_9 = arith.constant 0 : index
    %37 = vector.load %arg3[%c0_7, %c0_8, %c0_9] : memref<1x8x8xf32, #tpu.memory_space<vmem>>, vector<1x8x8xf32>
    %38 = vector.shape_cast %37 : vector<1x8x8xf32> to vector<8x8xf32>
    %39 = vector.shape_cast %38 : vector<8x8xf32> to vector<1x8x8xf32>
    %cst_10 = arith.constant 5.000000e-01 : f32
    %40 = vector.broadcast %cst_10 : f32 to vector<1x8x8xf32>
    %41 = arith.cmpf ogt, %39, %40 : vector<1x8x8xf32>
    %cst_11 = arith.constant -1.000000e+09 : f32
    %42 = vector.shape_cast %41 : vector<1x8x8xi1> to vector<1x8x8xi1>
    %43 = vector.broadcast %42 : vector<1x8x8xi1> to vector<4x8x8xi1>
    %44 = vector.broadcast %cst_11 : f32 to vector<4x8x8xf32>
    %45 = arith.select %43, %44, %36 : vector<4x8x8xi1>, vector<4x8x8xf32>
    %cst_12 = arith.constant dense<0xFF800000> : vector<4x8xf32>
    %46 = vector.multi_reduction <maximumf>, %45, %cst_12 [2] : vector<4x8x8xf32> to vector<4x8xf32>
    %47 = vector.shape_cast %46 : vector<4x8xf32> to vector<4x8x1xf32>
    %48 = vector.broadcast %47 : vector<4x8x1xf32> to vector<4x8x8xf32>
    %49 = arith.subf %45, %48 : vector<4x8x8xf32>
    %50 = math.exp %49 : vector<4x8x8xf32>
    %cst_13 = arith.constant dense<0.000000e+00> : vector<4x8xf32>
    %51 = vector.multi_reduction <add>, %50, %cst_13 [2] : vector<4x8x8xf32> to vector<4x8xf32>
    %52 = vector.shape_cast %51 : vector<4x8xf32> to vector<4x8x1xf32>
    %53 = vector.broadcast %52 : vector<4x8x1xf32> to vector<4x8x8xf32>
    %54 = arith.divf %50, %53 : vector<4x8x8xf32>
    %c0_14 = arith.constant 0 : index
    %c0_15 = arith.constant 0 : index
    %c0_16 = arith.constant 0 : index
    %c0_17 = arith.constant 0 : index
    %55 = vector.load %arg19[%c0_14, %c0_15, %c0_16, %c0_17] : memref<1x4x8x8xf32, #tpu.memory_space<vmem>>, vector<1x4x8x8xf32>
    %56 = vector.shape_cast %55 : vector<1x4x8x8xf32> to vector<4x8x8xf32>
    %57 = vector.shape_cast %54 : vector<4x8x8xf32> to vector<1x4x8x8xf32>
    tpu.vector_store %arg19[%c0_14, %c0_15, %c0_16, %c0_17], %57 {strides = array<i32>} : memref<1x4x8x8xf32, #tpu.memory_space<vmem>>, vector<1x4x8x8xf32>,
    "tpu.trace_start"() <{level = 10 : i32, message = "hqk,hkv->hqv"}> : () -> ()
    %cst_18 = arith.constant dense<0.000000e+00> : vector<4x8x8xf32>
    %58 = tpu.matmul %54, %35, %cst_18 {dimension_numbers = #tpu.dot_dimension_numbers<[2], [1], [1], [2], [0, 0, 0, 1, 1, 2], [0], [0]>} : vector<4x8x8xf32>, vector<4x8x8xf32>, vector<4x8x8xf32> -> vector<4x8x8xf32>
    "tpu.trace_stop"() : () -> ()
    %59 = vector.extract_strided_slice %58 {offsets = [0, 0, 0], sizes = [1, 8, 8], strides = [1, 1, 1]} : vector<4x8x8xf32> to vector<1x8x8xf32>
    %60 = vector.shape_cast %59 : vector<1x8x8xf32> to vector<8x8xf32>
    %61 = vector.extract_strided_slice %58 {offsets = [1, 0, 0], sizes = [1, 8, 8], strides = [1, 1, 1]} : vector<4x8x8xf32> to vector<1x8x8xf32>
    %62 = vector.shape_cast %61 : vector<1x8x8xf32> to vector<8x8xf32>
    %63 = vector.extract_strided_slice %58 {offsets = [2, 0, 0], sizes = [1, 8, 8], strides = [1, 1, 1]} : vector<4x8x8xf32> to vector<1x8x8xf32>
    %64 = vector.shape_cast %63 : vector<1x8x8xf32> to vector<8x8xf32>
    %65 = vector.extract_strided_slice %58 {offsets = [3, 0, 0], sizes = [1, 8, 8], strides = [1, 1, 1]} : vector<4x8x8xf32> to vector<1x8x8xf32>
    %66 = vector.shape_cast %65 : vector<1x8x8xf32> to vector<8x8xf32>
    %67 = tpu.concatenate %60, %62, %64, %66 in 1 : vector<8x8xf32>, vector<8x8xf32>, vector<8x8xf32>, vector<8x8xf32> -> vector<8x32xf32>
    %c0_19 = arith.constant 0 : index
    %c0_20 = arith.constant 0 : index
    %68 = vector.load %arg6[%c0_19, %c0_20] : memref<32x32xf32, #tpu.memory_space<vmem>>, vector<32x32xf32>
    %cst_21 = arith.constant dense<0.000000e+00> : vector<8x32xf32>
    %69 = tpu.matmul %67, %68, %cst_21 {dimension_numbers = #tpu.dot_dimension_numbers<[1], [0], [0], [1], [0, 0, 1, 1], [], []>} : vector<8x32xf32>, vector<32x32xf32>, vector<8x32xf32> -> vector<8x32xf32>
    %70 = arith.addf %69, %0 : vector<8x32xf32>
    %cst_22 = arith.constant dense<0.000000e+00> : vector<8xf32>
    %71 = vector.multi_reduction <add>, %70, %cst_22 [1] : vector<8x32xf32> to vector<8xf32>
    %72 = vector.shape_cast %71 : vector<8xf32> to vector<8x1xf32>
    %cst_23 = arith.constant 3.200000e+01 : f32
    %73 = vector.broadcast %cst_23 : f32 to vector<8x1xf32>
    %74 = arith.divf %72, %73 : vector<8x1xf32>
    %75 = vector.broadcast %74 : vector<8x1xf32> to vector<8x32xf32>
    %76 = arith.subf %70, %75 : vector<8x32xf32>
    %77 = arith.mulf %76, %76 : vector<8x32xf32>
    %cst_24 = arith.constant dense<0.000000e+00> : vector<8xf32>
    %78 = vector.multi_reduction <add>, %77, %cst_24 [1] : vector<8x32xf32> to vector<8xf32>
    %79 = vector.shape_cast %78 : vector<8xf32> to vector<8x1xf32>
    %cst_25 = arith.constant 3.200000e+01 : f32
    %80 = vector.broadcast %cst_25 : f32 to vector<8x1xf32>
    %81 = arith.divf %79, %80 : vector<8x1xf32>
    %82 = vector.broadcast %74 : vector<8x1xf32> to vector<8x32xf32>
    %83 = arith.subf %70, %82 : vector<8x32xf32>
    %cst_26 = arith.constant 9.99999974E-6 : f32
    %84 = vector.broadcast %cst_26 : f32 to vector<8x1xf32>
    %85 = arith.addf %81, %84 : vector<8x1xf32>
    %86 = math.rsqrt %85 : vector<8x1xf32>
    %87 = vector.broadcast %86 : vector<8x1xf32> to vector<8x32xf32>
    %88 = arith.mulf %83, %87 : vector<8x32xf32>
    %c0_27 = arith.constant 0 : index
    %c0_28 = arith.constant 0 : index
    %89 = vector.load %arg7[%c0_27, %c0_28] : memref<1x32xf32, #tpu.memory_space<vmem>>, vector<1x32xf32>
    %90 = vector.broadcast %89 : vector<1x32xf32> to vector<8x32xf32>
    %91 = arith.mulf %88, %90 : vector<8x32xf32>
    %c0_29 = arith.constant 0 : index
    %c0_30 = arith.constant 0 : index
    %92 = vector.load %arg8[%c0_29, %c0_30] : memref<1x32xf32, #tpu.memory_space<vmem>>, vector<1x32xf32>
    %93 = vector.broadcast %92 : vector<1x32xf32> to vector<8x32xf32>
    %94 = arith.addf %91, %93 : vector<8x32xf32>
    %c0_31 = arith.constant 0 : index
    %c0_32 = arith.constant 0 : index
    %95 = vector.load %arg9[%c0_31, %c0_32] : memref<32x32xf32, #tpu.memory_space<vmem>>, vector<32x32xf32>
    %cst_33 = arith.constant dense<0.000000e+00> : vector<8x32xf32>
    %96 = tpu.matmul %94, %95, %cst_33 {dimension_numbers = #tpu.dot_dimension_numbers<[1], [0], [0], [1], [0, 0, 1, 1], [], []>} : vector<8x32xf32>, vector<32x32xf32>, vector<8x32xf32> -> vector<8x32xf32>
    %cst_34 = arith.constant 0.353553385 : f32
    %97 = vector.broadcast %cst_34 : f32 to vector<8x32xf32>
    %98 = arith.mulf %96, %97 : vector<8x32xf32>
    %c0_35 = arith.constant 0 : index
    %c0_36 = arith.constant 0 : index
    %99 = vector.load %arg10[%c0_35, %c0_36] : memref<32x64xf32, #tpu.memory_space<vmem>>, vector<32x64xf32>
    %cst_37 = arith.constant dense<0.000000e+00> : vector<16x64xf32>
    %100 = tpu.matmul %1, %99, %cst_37 {dimension_numbers = #tpu.dot_dimension_numbers<[1], [0], [0], [1], [0, 0, 1, 1], [], []>} : vector<16x32xf32>, vector<32x64xf32>, vector<16x64xf32> -> vector<16x64xf32>
    %101 = vector.extract_strided_slice %100 {offsets = [0, 0], sizes = [16, 32], strides = [1, 1]} : vector<16x64xf32> to vector<16x32xf32>
    %102 = vector.extract_strided_slice %100 {offsets = [0, 32], sizes = [16, 32], strides = [1, 1]} : vector<16x64xf32> to vector<16x32xf32>
    %103 = vector.extract_strided_slice %98 {offsets = [0, 0], sizes = [8, 8], strides = [1, 1]} : vector<8x32xf32> to vector<8x8xf32>
    %104 = vector.extract_strided_slice %98 {offsets = [0, 8], sizes = [8, 8], strides = [1, 1]} : vector<8x32xf32> to vector<8x8xf32>
    %105 = vector.extract_strided_slice %98 {offsets = [0, 16], sizes = [8, 8], strides = [1, 1]} : vector<8x32xf32> to vector<8x8xf32>
    %106 = vector.extract_strided_slice %98 {offsets = [0, 24], sizes = [8, 8], strides = [1, 1]} : vector<8x32xf32> to vector<8x8xf32>
    %107 = vector.shape_cast %103 : vector<8x8xf32> to vector<1x8x8xf32>
    %108 = vector.shape_cast %104 : vector<8x8xf32> to vector<1x8x8xf32>
    %109 = vector.shape_cast %105 : vector<8x8xf32> to vector<1x8x8xf32>
    %110 = vector.shape_cast %106 : vector<8x8xf32> to vector<1x8x8xf32>
    %111 = tpu.concatenate %107, %108, %109, %110 in 0 : vector<1x8x8xf32>, vector<1x8x8xf32>, vector<1x8x8xf32>, vector<1x8x8xf32> -> vector<4x8x8xf32>
    %112 = vector.extract_strided_slice %101 {offsets = [0, 0], sizes = [16, 8], strides = [1, 1]} : vector<16x32xf32> to vector<16x8xf32>
    %113 = vector.extract_strided_slice %101 {offsets = [0, 8], sizes = [16, 8], strides = [1, 1]} : vector<16x32xf32> to vector<16x8xf32>
    %114 = vector.extract_strided_slice %101 {offsets = [0, 16], sizes = [16, 8], strides = [1, 1]} : vector<16x32xf32> to vector<16x8xf32>
    %115 = vector.extract_strided_slice %101 {offsets = [0, 24], sizes = [16, 8], strides = [1, 1]} : vector<16x32xf32> to vector<16x8xf32>
    %116 = vector.shape_cast %112 : vector<16x8xf32> to vector<1x16x8xf32>
    %117 = vector.shape_cast %113 : vector<16x8xf32> to vector<1x16x8xf32>
    %118 = vector.shape_cast %114 : vector<16x8xf32> to vector<1x16x8xf32>
    %119 = vector.shape_cast %115 : vector<16x8xf32> to vector<1x16x8xf32>
    %120 = tpu.concatenate %116, %117, %118, %119 in 0 : vector<1x16x8xf32>, vector<1x16x8xf32>, vector<1x16x8xf32>, vector<1x16x8xf32> -> vector<4x16x8xf32>
    %121 = vector.extract_strided_slice %102 {offsets = [0, 0], sizes = [16, 8], strides = [1, 1]} : vector<16x32xf32> to vector<16x8xf32>
    %122 = vector.extract_strided_slice %102 {offsets = [0, 8], sizes = [16, 8], strides = [1, 1]} : vector<16x32xf32> to vector<16x8xf32>
    %123 = vector.extract_strided_slice %102 {offsets = [0, 16], sizes = [16, 8], strides = [1, 1]} : vector<16x32xf32> to vector<16x8xf32>
    %124 = vector.extract_strided_slice %102 {offsets = [0, 24], sizes = [16, 8], strides = [1, 1]} : vector<16x32xf32> to vector<16x8xf32>
    %125 = vector.shape_cast %121 : vector<16x8xf32> to vector<1x16x8xf32>
    %126 = vector.shape_cast %122 : vector<16x8xf32> to vector<1x16x8xf32>
    %127 = vector.shape_cast %123 : vector<16x8xf32> to vector<1x16x8xf32>
    %128 = vector.shape_cast %124 : vector<16x8xf32> to vector<1x16x8xf32>
    %129 = tpu.concatenate %125, %126, %127, %128 in 0 : vector<1x16x8xf32>, vector<1x16x8xf32>, vector<1x16x8xf32>, vector<1x16x8xf32> -> vector<4x16x8xf32>
    "tpu.trace_start"() <{level = 10 : i32, message = "hqd,hkd->hqk"}> : () -> ()
    %cst_38 = arith.constant dense<0.000000e+00> : vector<4x8x16xf32>
    %130 = tpu.matmul %111, %120, %cst_38 {dimension_numbers = #tpu.dot_dimension_numbers<[2], [2], [1], [1], [0, 0, 0, 1, 1, 1], [0], [0]>} : vector<4x8x8xf32>, vector<4x16x8xf32>, vector<4x8x16xf32> -> vector<4x8x16xf32>
    "tpu.trace_stop"() : () -> ()
    %c0_39 = arith.constant 0 : index
    %c0_40 = arith.constant 0 : index
    %c0_41 = arith.constant 0 : index
    %131 = vector.load %arg4[%c0_39, %c0_40, %c0_41] : memref<1x8x16xf32, #tpu.memory_space<vmem>>, vector<1x8x16xf32>
    %132 = vector.shape_cast %131 : vector<1x8x16xf32> to vector<8x16xf32>
    %133 = vector.shape_cast %132 : vector<8x16xf32> to vector<1x8x16xf32>
    %cst_42 = arith.constant 5.000000e-01 : f32
    %134 = vector.broadcast %cst_42 : f32 to vector<1x8x16xf32>
    %135 = arith.cmpf ogt, %133, %134 : vector<1x8x16xf32>
    %cst_43 = arith.constant -1.000000e+09 : f32
    %136 = vector.shape_cast %135 : vector<1x8x16xi1> to vector<1x8x16xi1>
    %137 = vector.broadcast %136 : vector<1x8x16xi1> to vector<4x8x16xi1>
    %138 = vector.broadcast %cst_43 : f32 to vector<4x8x16xf32>
    %139 = arith.select %137, %138, %130 : vector<4x8x16xi1>, vector<4x8x16xf32>
    %cst_44 = arith.constant dense<0xFF800000> : vector<4x8xf32>
    %140 = vector.multi_reduction <maximumf>, %139, %cst_44 [2] : vector<4x8x16xf32> to vector<4x8xf32>
    %141 = vector.shape_cast %140 : vector<4x8xf32> to vector<4x8x1xf32>
    %142 = vector.broadcast %141 : vector<4x8x1xf32> to vector<4x8x16xf32>
    %143 = arith.subf %139, %142 : vector<4x8x16xf32>
    %144 = math.exp %143 : vector<4x8x16xf32>
    %cst_45 = arith.constant dense<0.000000e+00> : vector<4x8xf32>
    %145 = vector.multi_reduction <add>, %144, %cst_45 [2] : vector<4x8x16xf32> to vector<4x8xf32>
    %146 = vector.shape_cast %145 : vector<4x8xf32> to vector<4x8x1xf32>
    %147 = vector.broadcast %146 : vector<4x8x1xf32> to vector<4x8x16xf32>
    %148 = arith.divf %144, %147 : vector<4x8x16xf32>
    %c0_46 = arith.constant 0 : index
    %c0_47 = arith.constant 0 : index
    %c0_48 = arith.constant 0 : index
    %c0_49 = arith.constant 0 : index
    %149 = vector.load %arg20[%c0_46, %c0_47, %c0_48, %c0_49] : memref<1x4x8x16xf32, #tpu.memory_space<vmem>>, vector<1x4x8x16xf32>
    %150 = vector.shape_cast %149 : vector<1x4x8x16xf32> to vector<4x8x16xf32>
    %151 = vector.shape_cast %148 : vector<4x8x16xf32> to vector<1x4x8x16xf32>
    tpu.vector_store %arg20[%c0_46, %c0_47, %c0_48, %c0_49], %151 {strides = array<i32>} : memref<1x4x8x16xf32, #tpu.memory_space<vmem>>, vector<1x4x8x16xf32>,
    "tpu.trace_start"() <{level = 10 : i32, message = "hqk,hkv->hqv"}> : () -> ()
    %cst_50 = arith.constant dense<0.000000e+00> : vector<4x8x8xf32>
    %152 = tpu.matmul %148, %129, %cst_50 {dimension_numbers = #tpu.dot_dimension_numbers<[2], [1], [1], [2], [0, 0, 0, 1, 1, 2], [0], [0]>} : vector<4x8x16xf32>, vector<4x16x8xf32>, vector<4x8x8xf32> -> vector<4x8x8xf32>
    "tpu.trace_stop"() : () -> ()
    %153 = vector.extract_strided_slice %152 {offsets = [0, 0, 0], sizes = [1, 8, 8], strides = [1, 1, 1]} : vector<4x8x8xf32> to vector<1x8x8xf32>
    %154 = vector.shape_cast %153 : vector<1x8x8xf32> to vector<8x8xf32>
    %155 = vector.extract_strided_slice %152 {offsets = [1, 0, 0], sizes = [1, 8, 8], strides = [1, 1, 1]} : vector<4x8x8xf32> to vector<1x8x8xf32>
    %156 = vector.shape_cast %155 : vector<1x8x8xf32> to vector<8x8xf32>
    %157 = vector.extract_strided_slice %152 {offsets = [2, 0, 0], sizes = [1, 8, 8], strides = [1, 1, 1]} : vector<4x8x8xf32> to vector<1x8x8xf32>
    %158 = vector.shape_cast %157 : vector<1x8x8xf32> to vector<8x8xf32>
    %159 = vector.extract_strided_slice %152 {offsets = [3, 0, 0], sizes = [1, 8, 8], strides = [1, 1, 1]} : vector<4x8x8xf32> to vector<1x8x8xf32>
    %160 = vector.shape_cast %159 : vector<1x8x8xf32> to vector<8x8xf32>
    %161 = tpu.concatenate %154, %156, %158, %160 in 1 : vector<8x8xf32>, vector<8x8xf32>, vector<8x8xf32>, vector<8x8xf32> -> vector<8x32xf32>
    %c0_51 = arith.constant 0 : index
    %c0_52 = arith.constant 0 : index
    %162 = vector.load %arg11[%c0_51, %c0_52] : memref<32x32xf32, #tpu.memory_space<vmem>>, vector<32x32xf32>
    %cst_53 = arith.constant dense<0.000000e+00> : vector<8x32xf32>
    %163 = tpu.matmul %161, %162, %cst_53 {dimension_numbers = #tpu.dot_dimension_numbers<[1], [0], [0], [1], [0, 0, 1, 1], [], []>} : vector<8x32xf32>, vector<32x32xf32>, vector<8x32xf32> -> vector<8x32xf32>
    %164 = arith.addf %163, %94 : vector<8x32xf32>
    %cst_54 = arith.constant dense<0.000000e+00> : vector<8xf32>
    %165 = vector.multi_reduction <add>, %164, %cst_54 [1] : vector<8x32xf32> to vector<8xf32>
    %166 = vector.shape_cast %165 : vector<8xf32> to vector<8x1xf32>
    %cst_55 = arith.constant 3.200000e+01 : f32
    %167 = vector.broadcast %cst_55 : f32 to vector<8x1xf32>
    %168 = arith.divf %166, %167 : vector<8x1xf32>
    %169 = vector.broadcast %168 : vector<8x1xf32> to vector<8x32xf32>
    %170 = arith.subf %164, %169 : vector<8x32xf32>
    %171 = arith.mulf %170, %170 : vector<8x32xf32>
    %cst_56 = arith.constant dense<0.000000e+00> : vector<8xf32>
    %172 = vector.multi_reduction <add>, %171, %cst_56 [1] : vector<8x32xf32> to vector<8xf32>
    %173 = vector.shape_cast %172 : vector<8xf32> to vector<8x1xf32>
    %cst_57 = arith.constant 3.200000e+01 : f32
    %174 = vector.broadcast %cst_57 : f32 to vector<8x1xf32>
    %175 = arith.divf %173, %174 : vector<8x1xf32>
    %176 = vector.broadcast %168 : vector<8x1xf32> to vector<8x32xf32>
    %177 = arith.subf %164, %176 : vector<8x32xf32>
    %cst_58 = arith.constant 9.99999974E-6 : f32
    %178 = vector.broadcast %cst_58 : f32 to vector<8x1xf32>
    %179 = arith.addf %175, %178 : vector<8x1xf32>
    %180 = math.rsqrt %179 : vector<8x1xf32>
    %181 = vector.broadcast %180 : vector<8x1xf32> to vector<8x32xf32>
    %182 = arith.mulf %177, %181 : vector<8x32xf32>
    %c0_59 = arith.constant 0 : index
    %c0_60 = arith.constant 0 : index
    %183 = vector.load %arg12[%c0_59, %c0_60] : memref<1x32xf32, #tpu.memory_space<vmem>>, vector<1x32xf32>
    %184 = vector.broadcast %183 : vector<1x32xf32> to vector<8x32xf32>
    %185 = arith.mulf %182, %184 : vector<8x32xf32>
    %c0_61 = arith.constant 0 : index
    %c0_62 = arith.constant 0 : index
    %186 = vector.load %arg13[%c0_61, %c0_62] : memref<1x32xf32, #tpu.memory_space<vmem>>, vector<1x32xf32>
    %187 = vector.broadcast %186 : vector<1x32xf32> to vector<8x32xf32>
    %188 = arith.addf %185, %187 : vector<8x32xf32>
    %c0_63 = arith.constant 0 : index
    %c0_64 = arith.constant 0 : index
    %189 = vector.load %arg14[%c0_63, %c0_64] : memref<32x64xf32, #tpu.memory_space<vmem>>, vector<32x64xf32>
    %cst_65 = arith.constant dense<0.000000e+00> : vector<8x64xf32>
    %190 = tpu.matmul %188, %189, %cst_65 {dimension_numbers = #tpu.dot_dimension_numbers<[1], [0], [0], [1], [0, 0, 1, 1], [], []>} : vector<8x32xf32>, vector<32x64xf32>, vector<8x64xf32> -> vector<8x64xf32>
    %cst_66 = arith.constant 0.000000e+00 : f32
    %191 = vector.broadcast %cst_66 : f32 to vector<8x64xf32>
    %192 = arith.maximumf %190, %191 : vector<8x64xf32>
    %c0_67 = arith.constant 0 : index
    %c0_68 = arith.constant 0 : index
    %193 = vector.load %arg15[%c0_67, %c0_68] : memref<64x32xf32, #tpu.memory_space<vmem>>, vector<64x32xf32>
    %cst_69 = arith.constant dense<0.000000e+00> : vector<8x32xf32>
    %194 = tpu.matmul %192, %193, %cst_69 {dimension_numbers = #tpu.dot_dimension_numbers<[1], [0], [0], [1], [0, 0, 1, 1], [], []>} : vector<8x64xf32>, vector<64x32xf32>, vector<8x32xf32> -> vector<8x32xf32>
    %195 = arith.addf %194, %188 : vector<8x32xf32>
    %cst_70 = arith.constant dense<0.000000e+00> : vector<8xf32>
    %196 = vector.multi_reduction <add>, %195, %cst_70 [1] : vector<8x32xf32> to vector<8xf32>
    %197 = vector.shape_cast %196 : vector<8xf32> to vector<8x1xf32>
    %cst_71 = arith.constant 3.200000e+01 : f32
    %198 = vector.broadcast %cst_71 : f32 to vector<8x1xf32>
    %199 = arith.divf %197, %198 : vector<8x1xf32>
    %200 = vector.broadcast %199 : vector<8x1xf32> to vector<8x32xf32>
    %201 = arith.subf %195, %200 : vector<8x32xf32>
    %202 = arith.mulf %201, %201 : vector<8x32xf32>
    %cst_72 = arith.constant dense<0.000000e+00> : vector<8xf32>
    %203 = vector.multi_reduction <add>, %202, %cst_72 [1] : vector<8x32xf32> to vector<8xf32>
    %204 = vector.shape_cast %203 : vector<8xf32> to vector<8x1xf32>
    %cst_73 = arith.constant 3.200000e+01 : f32
    %205 = vector.broadcast %cst_73 : f32 to vector<8x1xf32>
    %206 = arith.divf %204, %205 : vector<8x1xf32>
    %207 = vector.broadcast %199 : vector<8x1xf32> to vector<8x32xf32>
    %208 = arith.subf %195, %207 : vector<8x32xf32>
    %cst_74 = arith.constant 9.99999974E-6 : f32
    %209 = vector.broadcast %cst_74 : f32 to vector<8x1xf32>
    %210 = arith.addf %206, %209 : vector<8x1xf32>
    %211 = math.rsqrt %210 : vector<8x1xf32>
    %212 = vector.broadcast %211 : vector<8x1xf32> to vector<8x32xf32>
    %213 = arith.mulf %208, %212 : vector<8x32xf32>
    %c0_75 = arith.constant 0 : index
    %c0_76 = arith.constant 0 : index
    %214 = vector.load %arg16[%c0_75, %c0_76] : memref<1x32xf32, #tpu.memory_space<vmem>>, vector<1x32xf32>
    %215 = vector.broadcast %214 : vector<1x32xf32> to vector<8x32xf32>
    %216 = arith.mulf %213, %215 : vector<8x32xf32>
    %c0_77 = arith.constant 0 : index
    %c0_78 = arith.constant 0 : index
    %217 = vector.load %arg17[%c0_77, %c0_78] : memref<1x32xf32, #tpu.memory_space<vmem>>, vector<1x32xf32>
    %218 = vector.broadcast %217 : vector<1x32xf32> to vector<8x32xf32>
    %219 = arith.addf %216, %218 : vector<8x32xf32>
    %c0_79 = arith.constant 0 : index
    %c0_80 = arith.constant 0 : index
    %220 = vector.load %arg18[%c0_79, %c0_80] : memref<8x32xf32, #tpu.memory_space<vmem>>, vector<8x32xf32>
    tpu.vector_store %arg18[%c0_79, %c0_80], %219 {strides = array<i32>} : memref<8x32xf32, #tpu.memory_space<vmem>>, vector<8x32xf32>,
    return
  }
  func.func @transform_0(%arg0: i32) -> (i32, i32) {
    %c0_i32 = arith.constant 0 : i32
    %c0_i32_0 = arith.constant 0 : i32
    return %arg0, %c0_i32 : i32, i32
  }
  func.func @transform_1(%arg0: i32) -> (i32, i32) {
    %c0_i32 = arith.constant 0 : i32
    %c0_i32_0 = arith.constant 0 : i32
    return %arg0, %c0_i32 : i32, i32
  }
  func.func @transform_2(%arg0: i32) -> (i32, i32, i32) {
    %c0_i32 = arith.constant 0 : i32
    %c0_i32_0 = arith.constant 0 : i32
    %c0_i32_1 = arith.constant 0 : i32
    return %arg0, %c0_i32, %c0_i32_0 : i32, i32, i32
  }
  func.func @transform_3(%arg0: i32) -> (i32, i32, i32) {
    %c0_i32 = arith.constant 0 : i32
    %c0_i32_0 = arith.constant 0 : i32
    %c0_i32_1 = arith.constant 0 : i32
    return %arg0, %c0_i32, %c0_i32_0 : i32, i32, i32
  }
  func.func @transform_4(%arg0: i32) -> (i32, i32) {
    %c0_i32 = arith.constant 0 : i32
    %c0_i32_0 = arith.constant 0 : i32
    %c0_i32_1 = arith.constant 0 : i32
    return %c0_i32, %c0_i32_0 : i32, i32
  }
  func.func @transform_5(%arg0: i32) -> (i32, i32) {
    %c0_i32 = arith.constant 0 : i32
    %c0_i32_0 = arith.constant 0 : i32
    %c0_i32_1 = arith.constant 0 : i32
    return %c0_i32, %c0_i32_0 : i32, i32
  }
  func.func @transform_6(%arg0: i32) -> (i32, i32) {
    %c0_i32 = arith.constant 0 : i32
    %c0_i32_0 = arith.constant 0 : i32
    %c0_i32_1 = arith.constant 0 : i32
    return %c0_i32, %c0_i32_0 : i32, i32
  }
  func.func @transform_7(%arg0: i32) -> (i32, i32) {
    %c0_i32 = arith.constant 0 : i32
    %c0_i32_0 = arith.constant 0 : i32
    %c0_i32_1 = arith.constant 0 : i32
    return %c0_i32, %c0_i32_0 : i32, i32
  }
  func.func @transform_8(%arg0: i32) -> (i32, i32) {
    %c0_i32 = arith.constant 0 : i32
    %c0_i32_0 = arith.constant 0 : i32
    %c0_i32_1 = arith.constant 0 : i32
    return %c0_i32, %c0_i32_0 : i32, i32
  }
  func.func @transform_9(%arg0: i32) -> (i32, i32) {
    %c0_i32 = arith.constant 0 : i32
    %c0_i32_0 = arith.constant 0 : i32
    %c0_i32_1 = arith.constant 0 : i32
    return %c0_i32, %c0_i32_0 : i32, i32
  }
  func.func @transform_10(%arg0: i32) -> (i32, i32) {
    %c0_i32 = arith.constant 0 : i32
    %c0_i32_0 = arith.constant 0 : i32
    %c0_i32_1 = arith.constant 0 : i32
    return %c0_i32, %c0_i32_0 : i32, i32
  }
  func.func @transform_11(%arg0: i32) -> (i32, i32) {
    %c0_i32 = arith.constant 0 : i32
    %c0_i32_0 = arith.constant 0 : i32
    %c0_i32_1 = arith.constant 0 : i32
    return %c0_i32, %c0_i32_0 : i32, i32
  }
  func.func @transform_12(%arg0: i32) -> (i32, i32) {
    %c0_i32 = arith.constant 0 : i32
    %c0_i32_0 = arith.constant 0 : i32
    %c0_i32_1 = arith.constant 0 : i32
    return %c0_i32, %c0_i32_0 : i32, i32
  }
  func.func @transform_13(%arg0: i32) -> (i32, i32) {
    %c0_i32 = arith.constant 0 : i32
    %c0_i32_0 = arith.constant 0 : i32
    %c0_i32_1 = arith.constant 0 : i32
    return %c0_i32, %c0_i32_0 : i32, i32
  }
  func.func @transform_14(%arg0: i32) -> (i32, i32) {
    %c0_i32 = arith.constant 0 : i32
    %c0_i32_0 = arith.constant 0 : i32
    %c0_i32_1 = arith.constant 0 : i32
    return %c0_i32, %c0_i32_0 : i32, i32
  }
  func.func @transform_15(%arg0: i32) -> (i32, i32) {
    %c0_i32 = arith.constant 0 : i32
    %c0_i32_0 = arith.constant 0 : i32
    %c0_i32_1 = arith.constant 0 : i32
    return %c0_i32, %c0_i32_0 : i32, i32
  }
  func.func @transform_16(%arg0: i32) -> (i32, i32) {
    %c0_i32 = arith.constant 0 : i32
    %c0_i32_0 = arith.constant 0 : i32
    %c0_i32_1 = arith.constant 0 : i32
    return %c0_i32, %c0_i32_0 : i32, i32
  }
  func.func @transform_17(%arg0: i32) -> (i32, i32) {
    %c0_i32 = arith.constant 0 : i32
    %c0_i32_0 = arith.constant 0 : i32
    return %arg0, %c0_i32 : i32, i32
  }
  func.func @transform_18(%arg0: i32) -> (i32, i32, i32, i32) {
    %c0_i32 = arith.constant 0 : i32
    %c0_i32_0 = arith.constant 0 : i32
    %c0_i32_1 = arith.constant 0 : i32
    %c0_i32_2 = arith.constant 0 : i32
    return %arg0, %c0_i32, %c0_i32_0, %c0_i32_1 : i32, i32, i32, i32
  }
  func.func @transform_19(%arg0: i32) -> (i32, i32, i32, i32) {
    %c0_i32 = arith.constant 0 : i32
    %c0_i32_0 = arith.constant 0 : i32
    %c0_i32_1 = arith.constant 0 : i32
    %c0_i32_2 = arith.constant 0 : i32
    return %arg0, %c0_i32, %c0_i32_0, %c0_i32_1 : i32, i32, i32, i32
  }
}

</mosaic_0001>

<llo_original>
// kernel: tpu_custom_call.1
$region0: #{tpu_custom_call.1}
  #allocation0 [shape = 'u32[]', space=smem, size = 0x4, offset = 0x4, fixed_abs, tag = 'smem constant byte address 0x4 - core index']
  #allocation1 [shape = 'u32[144,128]{1,0:T(1,128)}', space=vmem, size = 0x12000, scoped, tag = 'internal scratch']
  %s0 = inlined_call_operand.hbm [shape: f32[16,32], index: 0, kind: input, shape index: {}]
  %s1 = inlined_call_operand.vmem [shape: f32[32,32], index: 1, kind: input, shape index: {}]
  %s2 = inlined_call_operand.hbm [shape: f32[2,8,8], index: 2, kind: input, shape index: {}]
  %s3 = inlined_call_operand.hbm [shape: f32[2,8,16], index: 3, kind: input, shape index: {}]
  %s4 = inlined_call_operand.vmem [shape: f32[32,96], index: 4, kind: input, shape index: {}]
  %s5 = inlined_call_operand.vmem [shape: f32[32,32], index: 5, kind: input, shape index: {}]
  %s6 = inlined_call_operand.vmem [shape: f32[1,32], index: 6, kind: input, shape index: {}]
  %s7 = inlined_call_operand.vmem [shape: f32[1,32], index: 7, kind: input, shape index: {}]
  %s8 = inlined_call_operand.hbm [shape: f32[32,32], index: 8, kind: input, shape index: {}]
  %s9 = inlined_call_operand.hbm [shape: f32[32,64], index: 9, kind: input, shape index: {}]
  %s10 = inlined_call_operand.hbm [shape: f32[32,32], index: 10, kind: input, shape index: {}]
  %s11 = inlined_call_operand.vmem [shape: f32[1,32], index: 11, kind: input, shape index: {}]
  %s12 = inlined_call_operand.vmem [shape: f32[1,32], index: 12, kind: input, shape index: {}]
  %s13 = inlined_call_operand.hbm [shape: f32[32,64], index: 13, kind: input, shape index: {}]
  %s14 = inlined_call_operand.vmem [shape: f32[64,32], index: 14, kind: input, shape index: {}]
  %s15 = inlined_call_operand.vmem [shape: f32[1,32], index: 15, kind: input, shape index: {}]
  %s16 = inlined_call_operand.vmem [shape: f32[1,32], index: 16, kind: input, shape index: {}]
  %s17 = inlined_call_operand.hbm [shape: f32[16,32], index: 17, kind: output, shape index: {0}]
  %s18 = inlined_call_operand.hbm [shape: f32[2,4,8,8], index: 18, kind: output, shape index: {1}]
  %s19 = inlined_call_operand.hbm [shape: f32[2,4,8,16], index: 19, kind: output, shape index: {2}]
  %20 = xla_tuple %s17, %s18, %s19
  %s21 = sld [smem:[#allocation0]]
  $region145: #{tpu_custom_call.1} parent=0
    _
  %s23 = ssub.s32 1, %s21
  %s24 = scalar_select 0, %s23, %s21
  $region1: #{tpu_custom_call.1} parent=0
    #allocation2 [shape = 'u8[8192]{0}', space=vmem, size = 0x2000, scoped, tag = 'input window, operand 0']
    #allocation3 [shape = 's32[2]{0}', space=sflag, size = 0x8, scoped, tag = 'scoped memory for tpu_custom_call.1']
    #allocation4 [shape = 's32[2]{0}', space=sflag, size = 0x8, scoped, tag = 'scoped memory for tpu_custom_call.1']
    #allocation5 [shape = 'u8[8192]{0}', space=vmem, size = 0x2000, scoped, tag = 'input window, operand 2']
    #allocation6 [shape = 's32[2]{0}', space=sflag, size = 0x8, scoped, tag = 'scoped memory for tpu_custom_call.1']
    #allocation7 [shape = 'u8[8192]{0}', space=vmem, size = 0x2000, scoped, tag = 'input window, operand 3']
    #allocation8 [shape = 'u8[16384]{0}', space=vmem, size = 0x4000, scoped, tag = 'input window, operand 8, single buffered']
    #allocation9 [shape = 's32[1]{0}', space=sflag, size = 0x4, scoped, tag = 'scoped memory for tpu_custom_call.1']
    #allocation10 [shape = 'u8[16384]{0}', space=vmem, size = 0x4000, scoped, tag = 'input window, operand 9, single buffered']
    #allocation11 [shape = 'u8[16384]{0}', space=vmem, size = 0x4000, scoped, tag = 'input window, operand 10, single buffered']
    #allocation12 [shape = 's32[1]{0}', space=sflag, size = 0x4, scoped, tag = 'scoped memory for tpu_custom_call.1']
    #allocation13 [shape = 'u8[16384]{0}', space=vmem, size = 0x4000, scoped, tag = 'input window, operand 13, single buffered']
    #allocation14 [shape = 'u8[8192]{0}', space=vmem, size = 0x2000, scoped, tag = 'output window, operand 0']
    #allocation15 [shape = 'u8[32768]{0}', space=vmem, size = 0x8000, scoped, tag = 'output window, operand 1']
    #allocation16 [shape = 's32[2]{0}', space=sflag, size = 0x8, scoped, tag = 'scoped memory for tpu_custom_call.1']
    #allocation17 [shape = 'u8[32768]{0}', space=vmem, size = 0x8000, scoped, tag = 'output window, operand 2']
    %25 = vsyncpa [#allocation3], 0
    %s26 = scalar_lea.sflag [#allocation3], 1
    %27 = vsyncpa %s26, 0
    %28 = vsyncpa [#allocation6], 0
    %s29 = scalar_lea.sflag [#allocation6], 1
    %30 = vsyncpa %s29, 0
    %31 = vsyncpa [#allocation9], 0
    %32 = vsyncpa [#allocation12], 0
    %33 = vsyncpa [#allocation4], 0
    %s34 = scalar_lea.sflag [#allocation4], 1
    %35 = vsyncpa %s34, 0
    %36 = vsyncpa [#allocation16], 0
    %s37 = scalar_lea.sflag [#allocation16], 1
    %38 = vsyncpa %s37, 0
    loop: start=0, step=1, limit=4
    $region2: #{tpu_custom_call.1} parent=1 // loop_pre_header
      _
    $region3: #{tpu_custom_call.1} parent=1 // loop_header
      %s40 = sphi 0, %s44
      %p41 = scmp.ge.s32.totalorder %s40, 4
      %s50 = sphi 0, %s52
      %s53 = sphi 0, %s50
      %s54 = sphi 0, %s53
      %s70 = sphi 0, %s54
      %s76 = sphi 0, %s78
      %s79 = sphi 0, %s76
      %s80 = sphi 0, %s79
      %s96 = sphi 0, %s80
      %s102 = sphi 0, %s104
      %s105 = sphi 0, %s102
      %s106 = sphi 0, %s105
      %s122 = sphi 0, %s106
      %s128 = sphi 0, %s130
      %s131 = sphi 0, %s128
      %s132 = sphi 0, %s131
      %s148 = sphi 0, %s132
      %s152 = sphi 0, %s152
      %s154 = sphi 0, %s152
      %s155 = sphi 0, %s154
      %s169 = sphi 0, %s155
      %s173 = sphi 0, %s173
      %s175 = sphi 0, %s173
      %s176 = sphi 0, %s175
      %s190 = sphi 0, %s176
      %s194 = sphi 0, %s194
      %s196 = sphi 0, %s194
      %s197 = sphi 0, %s196
      %s211 = sphi 0, %s197
      %s215 = sphi 0, %s215
      %s217 = sphi 0, %s215
      %s218 = sphi 0, %s217
      %s232 = sphi 0, %s218
      %s236 = sphi 0, %s236
      %s238 = sphi 0, %s236
      %s239 = sphi 0, %s238
      %s253 = sphi 0, %s239
      %s257 = sphi 0, %s257
      %s259 = sphi 0, %s257
      %s260 = sphi 0, %s259
      %s274 = sphi 0, %s260
      %s278 = sphi 0, %s278
      %s280 = sphi 0, %s278
      %s281 = sphi 0, %s280
      %s295 = sphi 0, %s281
      %s299 = sphi 0, %s299
      %s301 = sphi 0, %s299
      %s302 = sphi 0, %s301
      %s316 = sphi 0, %s302
      %s320 = sphi 0, %s320
      %s322 = sphi 0, %s320
      %s323 = sphi 0, %s322
      %s337 = sphi 0, %s323
      %s341 = sphi 0, %s341
      %s343 = sphi 0, %s341
      %s344 = sphi 0, %s343
      %s358 = sphi 0, %s344
      %s362 = sphi 0, %s362
      %s364 = sphi 0, %s362
      %s365 = sphi 0, %s364
      %s379 = sphi 0, %s365
      %s383 = sphi 0, %s383
      %s385 = sphi 0, %s383
      %s386 = sphi 0, %s385
      %s400 = sphi 0, %s386
      %s404 = sphi 0, %s404
      %s406 = sphi 0, %s404
      %s407 = sphi 0, %s406
      %s421 = sphi 0, %s407
      %s427 = sphi 0, %s429
      %s430 = sphi 0, %s427
      %s431 = sphi 0, %s430
      %s447 = sphi 0, %s431
      %s453 = sphi 0, %s455
      %s456 = sphi 0, %s453
      %s457 = sphi 0, %s456
      %s473 = sphi 0, %s457
      %s479 = sphi 0, %s481
      %s482 = sphi 0, %s479
      %s483 = sphi 0, %s482
      %s499 = sphi 0, %s483
    $region4: #{tpu_custom_call.1} parent=1 // loop_header_branch
      %43 = sbr.rel (%p41) target = $region8
    $region5: #{tpu_custom_call.1} parent=1 // loop_body
      %s45 = ssub.s32 %s40, 1
      %s46 = ssub.s32 %s40, 2
      %s47 = sadd.s32 %s40, 1
      %s48 = ssub.s32 %s40, %s47
      %p49 = scmp.eq.s32.totalorder %s48, 0
      %s51 = sadd.s32 %s50, 1
      %s52 = scalar_select %p49, %s50, %s51
      %p55 = pneg %p49
      %p56 = scmp.eq.s32.totalorder %s40, 1
      %p57 = por %p55, %p56
      %p58 = scmp.ne.s32.totalorder %s50, %s53
      %p59 = scmp.eq.s32.totalorder %s40, 0
      %p60 = por %p58, %p59
      %p61 = scmp.ne.s32.totalorder %s50, %s53
      %p62 = scmp.eq.s32.totalorder %s45, 1
      %p63 = por %p61, %p62
      %p64 = scmp.ne.s32.totalorder %s53, %s54
      %p65 = scmp.eq.s32.totalorder %s45, 0
      %p66 = por %p64, %p65
      %p67 = scmp.ne.s32.totalorder %s53, %s54
      %p68 = scmp.eq.s32.totalorder %s46, 1
      %p69 = por %p67, %p68
      %p71 = scmp.ne.s32.totalorder %s54, %s70
      %p72 = scmp.eq.s32.totalorder %s46, 0
      %p73 = por %p71, %p72
      %s74 = ssub.s32 %s40, %s47
      %p75 = scmp.eq.s32.totalorder %s74, 0
      %s77 = sadd.s32 %s76, 1
      %s78 = scalar_select %p75, %s76, %s77
      %p81 = pneg %p75
      %p82 = scmp.eq.s32.totalorder %s40, 1
      %p83 = por %p81, %p82
      %p84 = scmp.ne.s32.totalorder %s76, %s79
      %p85 = scmp.eq.s32.totalorder %s40, 0
      %p86 = por %p84, %p85
      %p87 = scmp.ne.s32.totalorder %s76, %s79
      %p88 = scmp.eq.s32.totalorder %s45, 1
      %p89 = por %p87, %p88
      %p90 = scmp.ne.s32.totalorder %s79, %s80
      %p91 = scmp.eq.s32.totalorder %s45, 0
      %p92 = por %p90, %p91
      %p93 = scmp.ne.s32.totalorder %s79, %s80
      %p94 = scmp.eq.s32.totalorder %s46, 1
      %p95 = por %p93, %p94
      %p97 = scmp.ne.s32.totalorder %s80, %s96
      %p98 = scmp.eq.s32.totalorder %s46, 0
      %p99 = por %p97, %p98
      %s100 = ssub.s32 %s40, %s47
      %p101 = scmp.eq.s32.totalorder %s100, 0
      %s103 = sadd.s32 %s102, 1
      %s104 = scalar_select %p101, %s102, %s103
      %p107 = pneg %p101
      %p108 = scmp.eq.s32.totalorder %s40, 1
      %p109 = por %p107, %p108
      %p110 = scmp.ne.s32.totalorder %s102, %s105
      %p111 = scmp.eq.s32.totalorder %s40, 0
      %p112 = por %p110, %p111
      %p113 = scmp.ne.s32.totalorder %s102, %s105
      %p114 = scmp.eq.s32.totalorder %s45, 1
      %p115 = por %p113, %p114
      %p116 = scmp.ne.s32.totalorder %s105, %s106
      %p117 = scmp.eq.s32.totalorder %s45, 0
      %p118 = por %p116, %p117
      %p119 = scmp.ne.s32.totalorder %s105, %s106
      %p120 = scmp.eq.s32.totalorder %s46, 1
      %p121 = por %p119, %p120
      %p123 = scmp.ne.s32.totalorder %s106, %s122
      %p124 = scmp.eq.s32.totalorder %s46, 0
      %p125 = por %p123, %p124
      %s126 = ssub.s32 %s40, %s47
      %p127 = scmp.eq.s32.totalorder %s126, 0
      %s129 = sadd.s32 %s128, 1
      %s130 = scalar_select %p127, %s128, %s129
      %p133 = pneg %p127
      %p134 = scmp.eq.s32.totalorder %s40, 1
      %p135 = por %p133, %p134
      %p136 = scmp.ne.s32.totalorder %s128, %s131
      %p137 = scmp.eq.s32.totalorder %s40, 0
      %p138 = por %p136, %p137
      %p139 = scmp.ne.s32.totalorder %s128, %s131
      %p140 = scmp.eq.s32.totalorder %s45, 1
      %p141 = por %p139, %p140
      %p142 = scmp.ne.s32.totalorder %s131, %s132
      %p143 = scmp.eq.s32.totalorder %s45, 0
      %p144 = por %p142, %p143
      %p145 = scmp.ne.s32.totalorder %s131, %s132
      %p146 = scmp.eq.s32.totalorder %s46, 1
      %p147 = por %p145, %p146
      %p149 = scmp.ne.s32.totalorder %s132, %s148
      %p150 = scmp.eq.s32.totalorder %s46, 0
      %p151 = por %p149, %p150
      %s153 = sadd.s32 %s152, 1
      %p156 = scmp.eq.s32.totalorder %s40, 1
      %p157 = scmp.ne.s32.totalorder %s152, %s154
      %p158 = scmp.eq.s32.totalorder %s40, 0
      %p159 = por %p157, %p158
      %p160 = scmp.ne.s32.totalorder %s152, %s154
      %p161 = scmp.eq.s32.totalorder %s45, 1
      %p162 = por %p160, %p161
      %p163 = scmp.ne.s32.totalorder %s154, %s155
      %p164 = scmp.eq.s32.totalorder %s45, 0
      %p165 = por %p163, %p164
      %p166 = scmp.ne.s32.totalorder %s154, %s155
      %p167 = scmp.eq.s32.totalorder %s46, 1
      %p168 = por %p166, %p167
      %p170 = scmp.ne.s32.totalorder %s155, %s169
      %p171 = scmp.eq.s32.totalorder %s46, 0
      %p172 = por %p170, %p171
      %s174 = sadd.s32 %s173, 1
      %p177 = scmp.eq.s32.totalorder %s40, 1
      %p178 = scmp.ne.s32.totalorder %s173, %s175
      %p179 = scmp.eq.s32.totalorder %s40, 0
      %p180 = por %p178, %p179
      %p181 = scmp.ne.s32.totalorder %s173, %s175
      %p182 = scmp.eq.s32.totalorder %s45, 1
      %p183 = por %p181, %p182
      %p184 = scmp.ne.s32.totalorder %s175, %s176
      %p185 = scmp.eq.s32.totalorder %s45, 0
      %p186 = por %p184, %p185
      %p187 = scmp.ne.s32.totalorder %s175, %s176
      %p188 = scmp.eq.s32.totalorder %s46, 1
      %p189 = por %p187, %p188
      %p191 = scmp.ne.s32.totalorder %s176, %s190
      %p192 = scmp.eq.s32.totalorder %s46, 0
      %p193 = por %p191, %p192
      %s195 = sadd.s32 %s194, 1
      %p198 = scmp.eq.s32.totalorder %s40, 1
      %p199 = scmp.ne.s32.totalorder %s194, %s196
      %p200 = scmp.eq.s32.totalorder %s40, 0
      %p201 = por %p199, %p200
      %p202 = scmp.ne.s32.totalorder %s194, %s196
      %p203 = scmp.eq.s32.totalorder %s45, 1
      %p204 = por %p202, %p203
      %p205 = scmp.ne.s32.totalorder %s196, %s197
      %p206 = scmp.eq.s32.totalorder %s45, 0
      %p207 = por %p205, %p206
      %p208 = scmp.ne.s32.totalorder %s196, %s197
      %p209 = scmp.eq.s32.totalorder %s46, 1
      %p210 = por %p208, %p209
      %p212 = scmp.ne.s32.totalorder %s197, %s211
      %p213 = scmp.eq.s32.totalorder %s46, 0
      %p214 = por %p212, %p213
      %s216 = sadd.s32 %s215, 1
      %p219 = scmp.eq.s32.totalorder %s40, 1
      %p220 = scmp.ne.s32.totalorder %s215, %s217
      %p221 = scmp.eq.s32.totalorder %s40, 0
      %p222 = por %p220, %p221
      %p223 = scmp.ne.s32.totalorder %s215, %s217
      %p224 = scmp.eq.s32.totalorder %s45, 1
      %p225 = por %p223, %p224
      %p226 = scmp.ne.s32.totalorder %s217, %s218
      %p227 = scmp.eq.s32.totalorder %s45, 0
      %p228 = por %p226, %p227
      %p229 = scmp.ne.s32.totalorder %s217, %s218
      %p230 = scmp.eq.s32.totalorder %s46, 1
      %p231 = por %p229, %p230
      %p233 = scmp.ne.s32.totalorder %s218, %s232
      %p234 = scmp.eq.s32.totalorder %s46, 0
      %p235 = por %p233, %p234
      %s237 = sadd.s32 %s236, 1
      %p240 = scmp.eq.s32.totalorder %s40, 1
      %p241 = scmp.ne.s32.totalorder %s236, %s238
      %p242 = scmp.eq.s32.totalorder %s40, 0
      %p243 = por %p241, %p242
      %p244 = scmp.ne.s32.totalorder %s236, %s238
      %p245 = scmp.eq.s32.totalorder %s45, 1
      %p246 = por %p244, %p245
      %p247 = scmp.ne.s32.totalorder %s238, %s239
      %p248 = scmp.eq.s32.totalorder %s45, 0
      %p249 = por %p247, %p248
      %p250 = scmp.ne.s32.totalorder %s238, %s239
      %p251 = scmp.eq.s32.totalorder %s46, 1
      %p252 = por %p250, %p251
      %p254 = scmp.ne.s32.totalorder %s239, %s253
      %p255 = scmp.eq.s32.totalorder %s46, 0
      %p256 = por %p254, %p255
      %s258 = sadd.s32 %s257, 1
      %p261 = scmp.eq.s32.totalorder %s40, 1
      %p262 = scmp.ne.s32.totalorder %s257, %s259
      %p263 = scmp.eq.s32.totalorder %s40, 0
      %p264 = por %p262, %p263
      %p265 = scmp.ne.s32.totalorder %s257, %s259
      %p266 = scmp.eq.s32.totalorder %s45, 1
      %p267 = por %p265, %p266
      %p268 = scmp.ne.s32.totalorder %s259, %s260
      %p269 = scmp.eq.s32.totalorder %s45, 0
      %p270 = por %p268, %p269
      %p271 = scmp.ne.s32.totalorder %s259, %s260
      %p272 = scmp.eq.s32.totalorder %s46, 1
      %p273 = por %p271, %p272
      %p275 = scmp.ne.s32.totalorder %s260, %s274
      %p276 = scmp.eq.s32.totalorder %s46, 0
      %p277 = por %p275, %p276
      %s279 = sadd.s32 %s278, 1
      %p282 = scmp.eq.s32.totalorder %s40, 1
      %p283 = scmp.ne.s32.totalorder %s278, %s280
      %p284 = scmp.eq.s32.totalorder %s40, 0
      %p285 = por %p283, %p284
      %p286 = scmp.ne.s32.totalorder %s278, %s280
      %p287 = scmp.eq.s32.totalorder %s45, 1
      %p288 = por %p286, %p287
      %p289 = scmp.ne.s32.totalorder %s280, %s281
      %p290 = scmp.eq.s32.totalorder %s45, 0
      %p291 = por %p289, %p290
      %p292 = scmp.ne.s32.totalorder %s280, %s281
      %p293 = scmp.eq.s32.totalorder %s46, 1
      %p294 = por %p292, %p293
      %p296 = scmp.ne.s32.totalorder %s281, %s295
      %p297 = scmp.eq.s32.totalorder %s46, 0
      %p298 = por %p296, %p297
      %s300 = sadd.s32 %s299, 1
      %p303 = scmp.eq.s32.totalorder %s40, 1
      %p304 = scmp.ne.s32.totalorder %s299, %s301
      %p305 = scmp.eq.s32.totalorder %s40, 0
      %p306 = por %p304, %p305
      %p307 = scmp.ne.s32.totalorder %s299, %s301
      %p308 = scmp.eq.s32.totalorder %s45, 1
      %p309 = por %p307, %p308
      %p310 = scmp.ne.s32.totalorder %s301, %s302
      %p311 = scmp.eq.s32.totalorder %s45, 0
      %p312 = por %p310, %p311
      %p313 = scmp.ne.s32.totalorder %s301, %s302
      %p314 = scmp.eq.s32.totalorder %s46, 1
      %p315 = por %p313, %p314
      %p317 = scmp.ne.s32.totalorder %s302, %s316
      %p318 = scmp.eq.s32.totalorder %s46, 0
      %p319 = por %p317, %p318
      %s321 = sadd.s32 %s320, 1
      %p324 = scmp.eq.s32.totalorder %s40, 1
      %p325 = scmp.ne.s32.totalorder %s320, %s322
      %p326 = scmp.eq.s32.totalorder %s40, 0
      %p327 = por %p325, %p326
      %p328 = scmp.ne.s32.totalorder %s320, %s322
      %p329 = scmp.eq.s32.totalorder %s45, 1
      %p330 = por %p328, %p329
      %p331 = scmp.ne.s32.totalorder %s322, %s323
      %p332 = scmp.eq.s32.totalorder %s45, 0
      %p333 = por %p331, %p332
      %p334 = scmp.ne.s32.totalorder %s322, %s323
      %p335 = scmp.eq.s32.totalorder %s46, 1
      %p336 = por %p334, %p335
      %p338 = scmp.ne.s32.totalorder %s323, %s337
      %p339 = scmp.eq.s32.totalorder %s46, 0
      %p340 = por %p338, %p339
      %s342 = sadd.s32 %s341, 1
      %p345 = scmp.eq.s32.totalorder %s40, 1
      %p346 = scmp.ne.s32.totalorder %s341, %s343
      %p347 = scmp.eq.s32.totalorder %s40, 0
      %p348 = por %p346, %p347
      %p349 = scmp.ne.s32.totalorder %s341, %s343
      %p350 = scmp.eq.s32.totalorder %s45, 1
      %p351 = por %p349, %p350
      %p352 = scmp.ne.s32.totalorder %s343, %s344
      %p353 = scmp.eq.s32.totalorder %s45, 0
      %p354 = por %p352, %p353
      %p355 = scmp.ne.s32.totalorder %s343, %s344
      %p356 = scmp.eq.s32.totalorder %s46, 1
      %p357 = por %p355, %p356
      %p359 = scmp.ne.s32.totalorder %s344, %s358
      %p360 = scmp.eq.s32.totalorder %s46, 0
      %p361 = por %p359, %p360
      %s363 = sadd.s32 %s362, 1
      %p366 = scmp.eq.s32.totalorder %s40, 1
      %p367 = scmp.ne.s32.totalorder %s362, %s364
      %p368 = scmp.eq.s32.totalorder %s40, 0
      %p369 = por %p367, %p368
      %p370 = scmp.ne.s32.totalorder %s362, %s364
      %p371 = scmp.eq.s32.totalorder %s45, 1
      %p372 = por %p370, %p371
      %p373 = scmp.ne.s32.totalorder %s364, %s365
      %p374 = scmp.eq.s32.totalorder %s45, 0
      %p375 = por %p373, %p374
      %p376 = scmp.ne.s32.totalorder %s364, %s365
      %p377 = scmp.eq.s32.totalorder %s46, 1
      %p378 = por %p376, %p377
      %p380 = scmp.ne.s32.totalorder %s365, %s379
      %p381 = scmp.eq.s32.totalorder %s46, 0
      %p382 = por %p380, %p381
      %s384 = sadd.s32 %s383, 1
      %p387 = scmp.eq.s32.totalorder %s40, 1
      %p388 = scmp.ne.s32.totalorder %s383, %s385
      %p389 = scmp.eq.s32.totalorder %s40, 0
      %p390 = por %p388, %p389
      %p391 = scmp.ne.s32.totalorder %s383, %s385
      %p392 = scmp.eq.s32.totalorder %s45, 1
      %p393 = por %p391, %p392
      %p394 = scmp.ne.s32.totalorder %s385, %s386
      %p395 = scmp.eq.s32.totalorder %s45, 0
      %p396 = por %p394, %p395
      %p397 = scmp.ne.s32.totalorder %s385, %s386
      %p398 = scmp.eq.s32.totalorder %s46, 1
      %p399 = por %p397, %p398
      %p401 = scmp.ne.s32.totalorder %s386, %s400
      %p402 = scmp.eq.s32.totalorder %s46, 0
      %p403 = por %p401, %p402
      %s405 = sadd.s32 %s404, 1
      %p408 = scmp.eq.s32.totalorder %s40, 1
      %p409 = scmp.ne.s32.totalorder %s404, %s406
      %p410 = scmp.eq.s32.totalorder %s40, 0
      %p411 = por %p409, %p410
      %p412 = scmp.ne.s32.totalorder %s404, %s406
      %p413 = scmp.eq.s32.totalorder %s45, 1
      %p414 = por %p412, %p413
      %p415 = scmp.ne.s32.totalorder %s406, %s407
      %p416 = scmp.eq.s32.totalorder %s45, 0
      %p417 = por %p415, %p416
      %p418 = scmp.ne.s32.totalorder %s406, %s407
      %p419 = scmp.eq.s32.totalorder %s46, 1
      %p420 = por %p418, %p419
      %p422 = scmp.ne.s32.totalorder %s407, %s421
      %p423 = scmp.eq.s32.totalorder %s46, 0
      %p424 = por %p422, %p423
      %s425 = ssub.s32 %s40, %s47
      %p426 = scmp.eq.s32.totalorder %s425, 0
      %s428 = sadd.s32 %s427, 1
      %s429 = scalar_select %p426, %s427, %s428
      %p432 = pneg %p426
      %p433 = scmp.eq.s32.totalorder %s40, 1
      %p434 = por %p432, %p433
      %p435 = scmp.ne.s32.totalorder %s427, %s430
      %p436 = scmp.eq.s32.totalorder %s40, 0
      %p437 = por %p435, %p436
      %p438 = scmp.ne.s32.totalorder %s427, %s430
      %p439 = scmp.eq.s32.totalorder %s45, 1
      %p440 = por %p438, %p439
      %p441 = scmp.ne.s32.totalorder %s430, %s431
      %p442 = scmp.eq.s32.totalorder %s45, 0
      %p443 = por %p441, %p442
      %p444 = scmp.ne.s32.totalorder %s430, %s431
      %p445 = scmp.eq.s32.totalorder %s46, 1
      %p446 = por %p444, %p445
      %p448 = scmp.ne.s32.totalorder %s431, %s447
      %p449 = scmp.eq.s32.totalorder %s46, 0
      %p450 = por %p448, %p449
      %s451 = ssub.s32 %s40, %s47
      %p452 = scmp.eq.s32.totalorder %s451, 0
      %s454 = sadd.s32 %s453, 1
      %s455 = scalar_select %p452, %s453, %s454
      %p458 = pneg %p452
      %p459 = scmp.eq.s32.totalorder %s40, 1
      %p460 = por %p458, %p459
      %p461 = scmp.ne.s32.totalorder %s453, %s456
      %p462 = scmp.eq.s32.totalorder %s40, 0
      %p463 = por %p461, %p462
      %p464 = scmp.ne.s32.totalorder %s453, %s456
      %p465 = scmp.eq.s32.totalorder %s45, 1
      %p466 = por %p464, %p465
      %p467 = scmp.ne.s32.totalorder %s456, %s457
      %p468 = scmp.eq.s32.totalorder %s45, 0
      %p469 = por %p467, %p468
      %p470 = scmp.ne.s32.totalorder %s456, %s457
      %p471 = scmp.eq.s32.totalorder %s46, 1
      %p472 = por %p470, %p471
      %p474 = scmp.ne.s32.totalorder %s457, %s473
      %p475 = scmp.eq.s32.totalorder %s46, 0
      %p476 = por %p474, %p475
      %s477 = ssub.s32 %s40, %s47
      %p478 = scmp.eq.s32.totalorder %s477, 0
      %s480 = sadd.s32 %s479, 1
      %s481 = scalar_select %p478, %s479, %s480
      %p484 = pneg %p478
      %p485 = scmp.eq.s32.totalorder %s40, 1
      %p486 = por %p484, %p485
      %p487 = scmp.ne.s32.totalorder %s479, %s482
      %p488 = scmp.eq.s32.totalorder %s40, 0
      %p489 = por %p487, %p488
      %p490 = scmp.ne.s32.totalorder %s479, %s482
      %p491 = scmp.eq.s32.totalorder %s45, 1
      %p492 = por %p490, %p491
      %p493 = scmp.ne.s32.totalorder %s482, %s483
      %p494 = scmp.eq.s32.totalorder %s45, 0
      %p495 = por %p493, %p494
      %p496 = scmp.ne.s32.totalorder %s482, %s483
      %p497 = scmp.eq.s32.totalorder %s46, 1
      %p498 = por %p496, %p497
      %p500 = scmp.ne.s32.totalorder %s483, %s499
      %p501 = scmp.eq.s32.totalorder %s46, 0
      %p502 = por %p500, %p501
      %p503 = scmp.le.s32.totalorder 1, %s40
      %p504 = scmp.lt.s32.totalorder %s40, 3
      %p505 = pnand %p503, %p504
      %p506 = pneg %p505
      // Predicated region
      $region9: #{tpu_custom_call.1} parent=5 // pred_check
        _
      $region10: #{tpu_custom_call.1} parent=5 // pred_check_branch
        %508 = sbr.rel (%p505) target = $region12
      $region11: #{tpu_custom_call.1} parent=5 // pred_region
        %s509 = ssub.s32 %s40, 1
        // Predicated region
        $region13: #{tpu_custom_call.1} parent=11 // pred_check
          %p510 = pneg %p165
        $region14: #{tpu_custom_call.1} parent=11 // pred_check_branch
          %512 = sbr.rel (%p510) target = $region16
        $region15: #{tpu_custom_call.1} parent=11 // pred_region
          _
        $region16: #{tpu_custom_call.1} parent=11 // pred_fallthru
          _
        // Predicated region
        $region17: #{tpu_custom_call.1} parent=11 // pred_check
          %p513 = pneg %p186
        $region18: #{tpu_custom_call.1} parent=11 // pred_check_branch
          %515 = sbr.rel (%p513) target = $region20
        $region19: #{tpu_custom_call.1} parent=11 // pred_region
          _
        $region20: #{tpu_custom_call.1} parent=11 // pred_fallthru
          _
        // Predicated region
        $region21: #{tpu_custom_call.1} parent=11 // pred_check
          %p516 = pneg %p207
        $region22: #{tpu_custom_call.1} parent=11 // pred_check_branch
          %518 = sbr.rel (%p516) target = $region24
        $region23: #{tpu_custom_call.1} parent=11 // pred_region
          _
        $region24: #{tpu_custom_call.1} parent=11 // pred_fallthru
          _
        // Predicated region
        $region25: #{tpu_custom_call.1} parent=11 // pred_check
          %p519 = pneg %p228
        $region26: #{tpu_custom_call.1} parent=11 // pred_check_branch
          %521 = sbr.rel (%p519) target = $region28
        $region27: #{tpu_custom_call.1} parent=11 // pred_region
          _
        $region28: #{tpu_custom_call.1} parent=11 // pred_fallthru
          _
        // Predicated region
        $region29: #{tpu_custom_call.1} parent=11 // pred_check
          %p522 = pneg %p249
        $region30: #{tpu_custom_call.1} parent=11 // pred_check_branch
          %524 = sbr.rel (%p522) target = $region32
        $region31: #{tpu_custom_call.1} parent=11 // pred_region
          %s526 = ssub.s32 512, 512
          %527 = vsyncadd [#allocation9], %s526
          %s528 = sshll.u32 [#allocation8], 4
          %s529 = int_to_ptr.vmem [resolvable:$true] %s528
          %534 = dma.hbm_to_vmem [thread:$0]  %s8, 512, %s529, [#allocation9], 128, 128, 8
        $region32: #{tpu_custom_call.1} parent=11 // pred_fallthru
          _
        // Predicated region
        $region33: #{tpu_custom_call.1} parent=11 // pred_check
          %p535 = pneg %p270
        $region34: #{tpu_custom_call.1} parent=11 // pred_check_branch
          %537 = sbr.rel (%p535) target = $region36
        $region35: #{tpu_custom_call.1} parent=11 // pred_region
          %s539 = ssub.s32 512, 512
          %540 = vsyncadd [#allocation9], %s539
          %s541 = sshll.u32 [#allocation10], 4
          %s542 = int_to_ptr.vmem [resolvable:$true] %s541
          %547 = dma.hbm_to_vmem [thread:$0]  %s9, 512, %s542, [#allocation9], 128, 128, 8
        $region36: #{tpu_custom_call.1} parent=11 // pred_fallthru
          _
        // Predicated region
        $region37: #{tpu_custom_call.1} parent=11 // pred_check
          %p548 = pneg %p291
        $region38: #{tpu_custom_call.1} parent=11 // pred_check_branch
          %550 = sbr.rel (%p548) target = $region40
        $region39: #{tpu_custom_call.1} parent=11 // pred_region
          %s552 = ssub.s32 512, 512
          %553 = vsyncadd [#allocation12], %s552
          %s554 = sshll.u32 [#allocation11], 4
          %s555 = int_to_ptr.vmem [resolvable:$true] %s554
          %560 = dma.hbm_to_vmem [thread:$0]  %s10, 512, %s555, [#allocation12], 128, 128, 8
        $region40: #{tpu_custom_call.1} parent=11 // pred_fallthru
          _
        // Predicated region
        $region41: #{tpu_custom_call.1} parent=11 // pred_check
          %p561 = pneg %p312
        $region42: #{tpu_custom_call.1} parent=11 // pred_check_branch
          %563 = sbr.rel (%p561) target = $region44
        $region43: #{tpu_custom_call.1} parent=11 // pred_region
          _
        $region44: #{tpu_custom_call.1} parent=11 // pred_fallthru
          _
        // Predicated region
        $region45: #{tpu_custom_call.1} parent=11 // pred_check
          %p564 = pneg %p333
        $region46: #{tpu_custom_call.1} parent=11 // pred_check_branch
          %566 = sbr.rel (%p564) target = $region48
        $region47: #{tpu_custom_call.1} parent=11 // pred_region
          _
        $region48: #{tpu_custom_call.1} parent=11 // pred_fallthru
          _
        // Predicated region
        $region49: #{tpu_custom_call.1} parent=11 // pred_check
          %p567 = pneg %p354
        $region50: #{tpu_custom_call.1} parent=11 // pred_check_branch
          %569 = sbr.rel (%p567) target = $region52
        $region51: #{tpu_custom_call.1} parent=11 // pred_region
          %s571 = ssub.s32 512, 512
          %572 = vsyncadd [#allocation12], %s571
          %s573 = sshll.u32 [#allocation13], 4
          %s574 = int_to_ptr.vmem [resolvable:$true] %s573
          %579 = dma.hbm_to_vmem [thread:$0]  %s13, 512, %s574, [#allocation12], 128, 128, 8
        $region52: #{tpu_custom_call.1} parent=11 // pred_fallthru
          _
        // Predicated region
        $region53: #{tpu_custom_call.1} parent=11 // pred_check
          %p580 = pneg %p375
        $region54: #{tpu_custom_call.1} parent=11 // pred_check_branch
          %582 = sbr.rel (%p580) target = $region56
        $region55: #{tpu_custom_call.1} parent=11 // pred_region
          _
        $region56: #{tpu_custom_call.1} parent=11 // pred_fallthru
          _
        // Predicated region
        $region57: #{tpu_custom_call.1} parent=11 // pred_check
          %p583 = pneg %p396
        $region58: #{tpu_custom_call.1} parent=11 // pred_check_branch
          %585 = sbr.rel (%p583) target = $region60
        $region59: #{tpu_custom_call.1} parent=11 // pred_region
          _
        $region60: #{tpu_custom_call.1} parent=11 // pred_fallthru
          _
        // Predicated region
        $region61: #{tpu_custom_call.1} parent=11 // pred_check
          %p586 = pneg %p417
        $region62: #{tpu_custom_call.1} parent=11 // pred_check_branch
          %588 = sbr.rel (%p586) target = $region64
        $region63: #{tpu_custom_call.1} parent=11 // pred_region
          _
        $region64: #{tpu_custom_call.1} parent=11 // pred_fallthru
          _
      $region12: #{tpu_custom_call.1} parent=5 // pred_fallthru
        _
      %p589 = scmp.lt.s32.totalorder %s40, 2
      // Predicated region
      $region65: #{tpu_custom_call.1} parent=5 // pred_check
        %p590 = pneg %p589
      $region66: #{tpu_custom_call.1} parent=5 // pred_check_branch
        %592 = sbr.rel (%p590) target = $region68
      $region67: #{tpu_custom_call.1} parent=5 // pred_region
        // Predicated region
        $region69: #{tpu_custom_call.1} parent=67 // pred_check
          %p593 = pneg %p60
        $region70: #{tpu_custom_call.1} parent=67 // pred_check_branch
          %595 = sbr.rel (%p593) target = $region72
        $region71: #{tpu_custom_call.1} parent=67 // pred_region
          %s596 = sand.u32 %s50, 1
          %s597 = scalar_lea.sflag [#allocation3], %s596
          %s598 = sand.u32 %s50, 1
          %s599 = smul.addr %s598, 8
          %s600 = scalar_lea.vmem [#allocation2], %s599
          %s602 = ssub.s32 128, 128
          %603 = vsyncadd %s597, %s602
          %s604 = smul.addr %s40, 128
          %s605 = scalar_lea.hbm %s0, %s604
          %s607 = sshll.u32 %s600, 4
          %s608 = int_to_ptr.vmem [resolvable:$true] %s607
          %610 = dma.hbm_to_vmem [thread:$0]  %s605, 128, %s608, %s597
        $region72: #{tpu_custom_call.1} parent=67 // pred_fallthru
          _
        // Predicated region
        $region73: #{tpu_custom_call.1} parent=67 // pred_check
          %p611 = pneg %p86
        $region74: #{tpu_custom_call.1} parent=67 // pred_check_branch
          %613 = sbr.rel (%p611) target = $region76
        $region75: #{tpu_custom_call.1} parent=67 // pred_region
          %s614 = smul.u32 2, %s40
          %p615 = scmp.lt.s32.totalorder %s614, 3
          %s616 = scalar_select %p615, %s614, 3
          %s617 = smul.addr %s616, 8
          %s618 = scalar_lea.vmem %s1, %s617
          %s619 = smul.u32 2, %s40
        $region76: #{tpu_custom_call.1} parent=67 // pred_fallthru
          _
        // Predicated region
        $region77: #{tpu_custom_call.1} parent=67 // pred_check
          %p620 = pneg %p112
        $region78: #{tpu_custom_call.1} parent=67 // pred_check_branch
          %622 = sbr.rel (%p620) target = $region80
        $region79: #{tpu_custom_call.1} parent=67 // pred_region
          %s623 = sand.u32 %s40, 1
          %s624 = scalar_lea.sflag [#allocation6], %s623
          %s625 = sand.u32 %s102, 1
          %s626 = smul.addr %s625, 8
          %s627 = scalar_lea.vmem [#allocation5], %s626
          %s629 = ssub.s32 128, 128
          %630 = vsyncadd %s624, %s629
          %s631 = smul.addr %s40, 128
          %s632 = scalar_lea.hbm %s2, %s631
          %s634 = sshll.u32 %s627, 4
          %s635 = int_to_ptr.vmem [resolvable:$true] %s634
          %637 = dma.hbm_to_vmem [thread:$0]  %s632, 128, %s635, %s624
        $region80: #{tpu_custom_call.1} parent=67 // pred_fallthru
          _
        // Predicated region
        $region81: #{tpu_custom_call.1} parent=67 // pred_check
          %p638 = pneg %p138
        $region82: #{tpu_custom_call.1} parent=67 // pred_check_branch
          %640 = sbr.rel (%p638) target = $region84
        $region83: #{tpu_custom_call.1} parent=67 // pred_region
          %s641 = sand.u32 %s40, 1
          %s642 = scalar_lea.sflag [#allocation6], %s641
          %s643 = sand.u32 %s128, 1
          %s644 = smul.addr %s643, 8
          %s645 = scalar_lea.vmem [#allocation7], %s644
          %s647 = ssub.s32 128, 128
          %648 = vsyncadd %s642, %s647
          %s649 = smul.addr %s40, 128
          %s650 = scalar_lea.hbm %s3, %s649
          %s652 = sshll.u32 %s645, 4
          %s653 = int_to_ptr.vmem [resolvable:$true] %s652
          %655 = dma.hbm_to_vmem [thread:$0]  %s650, 128, %s653, %s642
        $region84: #{tpu_custom_call.1} parent=67 // pred_fallthru
          _
      $region68: #{tpu_custom_call.1} parent=5 // pred_fallthru
        _
      %p656 = scmp.le.s32.totalorder 1, %s40
      %p657 = scmp.lt.s32.totalorder %s40, 3
      %p658 = pnand %p656, %p657
      %p659 = pneg %p658
      // Predicated region
      $region85: #{tpu_custom_call.1} parent=5 // pred_check
        _
      $region86: #{tpu_custom_call.1} parent=5 // pred_check_branch
        %661 = sbr.rel (%p658) target = $region88
      $region87: #{tpu_custom_call.1} parent=5 // pred_region
        %s662 = ssub.s32 %s40, 1
        %s663 = sand.u32 %s53, 1
        %s664 = scalar_lea.sflag [#allocation3], %s663
        %s665 = sand.u32 %s53, 1
        %s666 = smul.addr %s665, 8
        %s667 = scalar_lea.vmem [#allocation2], %s666
        // Predicated region
        $region89: #{tpu_custom_call.1} parent=87 // pred_check
          %p668 = pneg %p66
        $region90: #{tpu_custom_call.1} parent=87 // pred_check_branch
          %670 = sbr.rel (%p668) target = $region92
        $region91: #{tpu_custom_call.1} parent=87 // pred_region
          %671 = dma.done %s664, 128
        $region92: #{tpu_custom_call.1} parent=87 // pred_fallthru
          _
        %s672 = sand.u32 %s45, 1
        %s673 = scalar_lea.sflag [#allocation6], %s672
        %s674 = sand.u32 %s105, 1
        %s675 = smul.addr %s674, 8
        %s676 = scalar_lea.vmem [#allocation5], %s675
        // Predicated region
        $region93: #{tpu_custom_call.1} parent=87 // pred_check
          %p677 = pneg %p118
        $region94: #{tpu_custom_call.1} parent=87 // pred_check_branch
          %679 = sbr.rel (%p677) target = $region96
        $region95: #{tpu_custom_call.1} parent=87 // pred_region
          %680 = dma.done %s673, 128
        $region96: #{tpu_custom_call.1} parent=87 // pred_fallthru
          _
        %s681 = sand.u32 %s45, 1
        %s682 = scalar_lea.sflag [#allocation6], %s681
        %s683 = sand.u32 %s131, 1
        %s684 = smul.addr %s683, 8
        %s685 = scalar_lea.vmem [#allocation7], %s684
        // Predicated region
        $region97: #{tpu_custom_call.1} parent=87 // pred_check
          %p686 = pneg %p144
        $region98: #{tpu_custom_call.1} parent=87 // pred_check_branch
          %688 = sbr.rel (%p686) target = $region100
        $region99: #{tpu_custom_call.1} parent=87 // pred_region
          %689 = dma.done %s682, 128
        $region100: #{tpu_custom_call.1} parent=87 // pred_fallthru
          _
        // Predicated region
        $region101: #{tpu_custom_call.1} parent=87 // pred_check
          %p690 = pneg %p249
        $region102: #{tpu_custom_call.1} parent=87 // pred_check_branch
          %692 = sbr.rel (%p690) target = $region104
        $region103: #{tpu_custom_call.1} parent=87 // pred_region
          %693 = dma.done [#allocation9], 512
        $region104: #{tpu_custom_call.1} parent=87 // pred_fallthru
          _
        // Predicated region
        $region105: #{tpu_custom_call.1} parent=87 // pred_check
          %p694 = pneg %p270
        $region106: #{tpu_custom_call.1} parent=87 // pred_check_branch
          %696 = sbr.rel (%p694) target = $region108
        $region107: #{tpu_custom_call.1} parent=87 // pred_region
          %697 = dma.done [#allocation9], 512
        $region108: #{tpu_custom_call.1} parent=87 // pred_fallthru
          _
        // Predicated region
        $region109: #{tpu_custom_call.1} parent=87 // pred_check
          %p698 = pneg %p291
        $region110: #{tpu_custom_call.1} parent=87 // pred_check_branch
          %700 = sbr.rel (%p698) target = $region112
        $region111: #{tpu_custom_call.1} parent=87 // pred_region
          %701 = dma.done [#allocation12], 512
        $region112: #{tpu_custom_call.1} parent=87 // pred_fallthru
          _
        // Predicated region
        $region113: #{tpu_custom_call.1} parent=87 // pred_check
          %p702 = pneg %p354
        $region114: #{tpu_custom_call.1} parent=87 // pred_check_branch
          %704 = sbr.rel (%p702) target = $region116
        $region115: #{tpu_custom_call.1} parent=87 // pred_region
          %705 = dma.done [#allocation12], 512
        $region116: #{tpu_custom_call.1} parent=87 // pred_fallthru
          _
        %s706 = sand.u32 %s53, 1
        %s707 = scalar_lea.sflag [#allocation3], %s706
        %s708 = sand.u32 %s53, 1
        %s709 = smul.addr %s708, 8
        %s710 = scalar_lea.vmem [#allocation2], %s709
        %p711 = pneg %p66
        %p712 = pneg %p63
        %s713 = smul.u32 2, %s45
        %p714 = scmp.lt.s32.totalorder %s713, 3
        %s715 = scalar_select %p714, %s713, 3
        %s716 = smul.addr %s715, 8
        %s717 = scalar_lea.vmem %s1, %s716
        %p718 = pneg %p92
        %p719 = pneg %p89
        %s720 = sand.u32 %s45, 1
        %s721 = scalar_lea.sflag [#allocation6], %s720
        %s722 = sand.u32 %s105, 1
        %s723 = smul.addr %s722, 8
        %s724 = scalar_lea.vmem [#allocation5], %s723
        %p725 = pneg %p118
        %p726 = pneg %p115
        %s727 = sand.u32 %s45, 1
        %s728 = scalar_lea.sflag [#allocation6], %s727
        %s729 = sand.u32 %s131, 1
        %s730 = smul.addr %s729, 8
        %s731 = scalar_lea.vmem [#allocation7], %s730
        %p732 = pneg %p144
        %p733 = pneg %p141
        %p734 = pneg %p165
        %p735 = pneg %p162
        %p736 = pneg %p186
        %p737 = pneg %p183
        %p738 = pneg %p207
        %p739 = pneg %p204
        %p740 = pneg %p228
        %p741 = pneg %p225
        %p742 = pneg %p249
        %p743 = pneg %p246
        %p744 = pneg %p270
        %p745 = pneg %p267
        %p746 = pneg %p291
        %p747 = pneg %p288
        %p748 = pneg %p312
        %p749 = pneg %p309
        %p750 = pneg %p333
        %p751 = pneg %p330
        %p752 = pneg %p354
        %p753 = pneg %p351
        %p754 = pneg %p375
        %p755 = pneg %p372
        %p756 = pneg %p396
        %p757 = pneg %p393
        %p758 = pneg %p417
        %p759 = pneg %p414
        %p760 = pneg %p443
        %p761 = pneg %p440
        %s762 = sand.u32 %s430, 1
        %s763 = scalar_lea.sflag [#allocation4], %s762
        %s764 = sand.u32 %s430, 1
        %s765 = smul.addr %s764, 8
        %s766 = scalar_lea.vmem [#allocation14], %s765
        %p767 = pneg %p469
        %p768 = pneg %p466
        %s769 = sand.u32 %s45, 1
        %s770 = scalar_lea.sflag [#allocation16], %s769
        %s771 = sand.u32 %s456, 1
        %s772 = smul.addr %s771, 32
        %s773 = scalar_lea.vmem [#allocation15], %s772
        %p774 = pneg %p495
        %p775 = pneg %p492
        %s776 = sand.u32 %s45, 1
        %s777 = scalar_lea.sflag [#allocation16], %s776
        %s778 = sand.u32 %s482, 1
        %s779 = smul.addr %s778, 32
        %s780 = scalar_lea.vmem [#allocation17], %s779
        %s781 = smul.u32 2, %s45
        %p782 = scmp.lt.s32.totalorder %s781, 3
        %s783 = scalar_select %p782, %s781, 3
        %s784 = smul.addr %s783, 8
        %s785 = scalar_lea.vmem %s1, %s784
        %s786 = smul.u32 2, %s45
        %v787 = vld [vmem:[%s667] sm:$0xff]
        %v788 = vld [vmem:[%s785] sm:$0xff]
        %v789 = vld [vmem:[%s785 + $0x8] sm:$0xff]
        %v790 = vld [vmem:[%s4] sm:$0xff]
        %v791 = vld [vmem:[%s4 + $0x8] sm:$0xff]
        %v792 = vld [vmem:[%s4 + $0x10] sm:$0xff]
        %v793 = vld [vmem:[%s4 + $0x18] sm:$0xff]
        %vm794 = vcmask 261120
        %v796 = vsel %vm794, %v787, 0
        %798 = vmatprep.subr.mxu0 0.0
        %799 = vmatpush1.msra.mxu0 %v790
        %800 = vmatprep.subr.mxu0 0.0
        %801 = vmatpush1.msra.mxu0 %v791
        %802 = vmatprep.subr.mxu0 0.0
        %803 = vmatpush1.msra.mxu0 %v792
        %804 = vmatprep.subr.mxu0 0.0
        %805 = vmatpush1.msra.mxu0 %v793
        %806 = vmatprep.subr.mxu0 0.0
        %807 = vmatpush1.msra.mxu0 0.0
        %808 = vmatprep.subr.mxu0 0.0
        %809 = vmatpush1.msra.mxu0 0.0
        %810 = vmatprep.subr.mxu0 0.0
        %811 = vmatpush1.msra.mxu0 0.0
        %812 = vmatprep.subr.mxu0 0.0
        %813 = vmatpush1.msra.mxu0 0.0
        %814 = vmatprep.subr.mxu0 0.0
        %815 = vmatpush1.msra.mxu0 0.0
        %816 = vmatprep.subr.mxu0 0.0
        %817 = vmatpush1.msra.mxu0 0.0
        %818 = vmatprep.subr.mxu0 0.0
        %819 = vmatpush1.msra.mxu0 0.0
        %820 = vmatprep.subr.mxu0 0.0
        %821 = vmatpush1.msra.mxu0 0.0
        %822 = vmatprep.subr.mxu0 0.0
        %823 = vmatpush1.msra.mxu0 0.0
        %824 = vmatprep.subr.mxu0 0.0
        %825 = vmatpush1.msra.mxu0 0.0
        %826 = vmatprep.subr.mxu0 0.0
        %827 = vmatpush1.msra.mxu0 0.0
        %828 = vmatprep.subr.mxu0 0.0
        %829 = vmatpush1.msra.mxu0 0.0
        %830 = vmatprep.subr.mxu0 0.0
        %831 = vmatpush1.msra.mxu0 0.0
        %832 = vmatprep.subr.mxu0 0.0
        %833 = vmatpush1.msra.mxu0 0.0
        %834 = vmatprep.subr.mxu0 0.0
        %835 = vmatpush1.msra.mxu0 0.0
        %836 = vmatprep.subr.mxu0 0.0
        %837 = vmatpush1.msra.mxu0 0.0
        %838 = vmatprep.subr.mxu0 0.0
        %839 = vmatpush1.msra.mxu0 0.0
        %840 = vmatprep.subr.mxu0 0.0
        %841 = vmatpush1.msra.mxu0 0.0
        %842 = vmatprep.subr.mxu0 0.0
        %843 = vmatpush1.msra.mxu0 0.0
        %844 = vmatprep.subr.mxu0 0.0
        %845 = vmatpush1.msra.mxu0 0.0
        %846 = vmatprep.subr.mxu0 0.0
        %847 = vmatpush1.msra.mxu0 0.0
        %848 = vmatprep.subr.mxu0 0.0
        %849 = vmatpush1.msra.mxu0 0.0
        %850 = vmatprep.subr.mxu0 0.0
        %851 = vmatpush1.msra.mxu0 0.0
        %852 = vmatprep.subr.mxu0 0.0
        %853 = vmatpush1.msra.mxu0 0.0
        %854 = vmatprep.subr.mxu0 0.0
        %855 = vmatpush1.msra.mxu0 0.0
        %856 = vmatprep.subr.mxu0 0.0
        %857 = vmatpush1.msra.mxu0 0.0
        %858 = vmatprep.subr.mxu0 0.0
        %859 = vmatpush1.msra.mxu0 0.0
        %860 = vmatprep.subr.mxu0 0.0
        %861 = vmatpush1.msra.mxu0 0.0
        %862 = vmatprep.mubr.f32.mxu0 0.0
        %863 = vmatmul.mubr.f32.gmra.mrb[0].mxu0 %v796
        %v864 = vpop.f32.mrb[0].mxu0
        %v865 = vadd.f32 0.0, %v864
        %v866 = vpop.f32.mrb[0].mxu0
        %867 = vdwg.mxu0
        %v868 = vmul.f32 %v865, 0.35355338
        %870 = vrot.lane.b32.xlu0 %v868, 120
        %v871 = vpop.permute.xlu0 %870
        %872 = vrot.lane.b32.xlu0 %v868, 112
        %v873 = vpop.permute.xlu0 %872
        %874 = vrot.lane.b32.xlu0 %v868, 104
        %v875 = vpop.permute.xlu0 %874
        %877 = vrot.lane.b32.xlu0 %v865, 120
        %v878 = vpop.permute.xlu0 %877
        %879 = vrot.lane.b32.xlu0 %v865, 112
        %v880 = vpop.permute.xlu0 %879
        %881 = vrot.lane.b32.xlu0 %v865, 104
        %v882 = vpop.permute.xlu0 %881
        %883 = vrot.lane.b32.xlu0 %v865, 96
        %v884 = vpop.permute.xlu0 %883
        %vm885 = vcmask 64512
        %v886 = vsel %vm885, %v868, 0
        %v888 = vsel %vm885, %v884, 0
        %890 = vmatprep.subr.mxu0 0.0
        %891 = vmatpush1.xpose.msra.mxu0 %v888
        %892 = vmatprep.subr.mxu0 0.0
        %893 = vmatpush1.xpose.msra.mxu0 0.0
        %894 = vmatprep.subr.mxu0 0.0
        %895 = vmatpush1.xpose.msra.mxu0 0.0
        %896 = vmatprep.subr.mxu0 0.0
        %897 = vmatpush1.xpose.msra.mxu0 0.0
        %898 = vmatprep.subr.mxu0 0.0
        %899 = vmatpush1.xpose.msra.mxu0 0.0
        %900 = vmatprep.subr.mxu0 0.0
        %901 = vmatpush1.xpose.msra.mxu0 0.0
        %902 = vmatprep.subr.mxu0 0.0
        %903 = vmatpush1.xpose.msra.mxu0 0.0
        %904 = vmatprep.subr.mxu0 0.0
        %905 = vmatpush1.xpose.msra.mxu0 0.0
        %906 = vmatprep.subr.mxu0 0.0
        %907 = vmatpush1.xpose.msra.mxu0 0.0
        %908 = vmatprep.subr.mxu0 0.0
        %909 = vmatpush1.xpose.msra.mxu0 0.0
        %910 = vmatprep.subr.mxu0 0.0
        %911 = vmatpush1.xpose.msra.mxu0 0.0
        %912 = vmatprep.subr.mxu0 0.0
        %913 = vmatpush1.xpose.msra.mxu0 0.0
        %914 = vmatprep.subr.mxu0 0.0
        %915 = vmatpush1.xpose.msra.mxu0 0.0
        %916 = vmatprep.subr.mxu0 0.0
        %917 = vmatpush1.xpose.msra.mxu0 0.0
        %918 = vmatprep.subr.mxu0 0.0
        %919 = vmatpush1.xpose.msra.mxu0 0.0
        %920 = vmatprep.subr.mxu0 0.0
        %921 = vmatpush1.xpose.msra.mxu0 0.0
        %922 = vmatprep.subr.mxu0 0.0
        %923 = vmatpush1.xpose.msra.mxu0 0.0
        %924 = vmatprep.subr.mxu0 0.0
        %925 = vmatpush1.xpose.msra.mxu0 0.0
        %926 = vmatprep.subr.mxu0 0.0
        %927 = vmatpush1.xpose.msra.mxu0 0.0
        %928 = vmatprep.subr.mxu0 0.0
        %929 = vmatpush1.xpose.msra.mxu0 0.0
        %930 = vmatprep.subr.mxu0 0.0
        %931 = vmatpush1.xpose.msra.mxu0 0.0
        %932 = vmatprep.subr.mxu0 0.0
        %933 = vmatpush1.xpose.msra.mxu0 0.0
        %934 = vmatprep.subr.mxu0 0.0
        %935 = vmatpush1.xpose.msra.mxu0 0.0
        %936 = vmatprep.subr.mxu0 0.0
        %937 = vmatpush1.xpose.msra.mxu0 0.0
        %938 = vmatprep.subr.mxu0 0.0
        %939 = vmatpush1.xpose.msra.mxu0 0.0
        %940 = vmatprep.subr.mxu0 0.0
        %941 = vmatpush1.xpose.msra.mxu0 0.0
        %942 = vmatprep.subr.mxu0 0.0
        %943 = vmatpush1.xpose.msra.mxu0 0.0
        %944 = vmatprep.subr.mxu0 0.0
        %945 = vmatpush1.xpose.msra.mxu0 0.0
        %946 = vmatprep.subr.mxu0 0.0
        %947 = vmatpush1.xpose.msra.mxu0 0.0
        %948 = vmatprep.subr.mxu0 0.0
        %949 = vmatpush1.xpose.msra.mxu0 0.0
        %950 = vmatprep.subr.mxu0 0.0
        %951 = vmatpush1.xpose.msra.mxu0 0.0
        %952 = vmatprep.subr.mxu0 0.0
        %953 = vmatpush1.xpose.msra.mxu0 0.0
        %954 = vmatprep.mubr.f32.mxu0 0.0
        %955 = vmatmul.mubr.f32.gmra.mrb[0].mxu0 %v886
        %v956 = vpop.f32.mrb[0].mxu0
        %v957 = vadd.f32 0.0, %v956
        %v958 = vpop.f32.mrb[0].mxu0
        %959 = vdwg.mxu0
        %960 = vrot.lane.b32.xlu0 %v878, 96
        %v961 = vpop.permute.xlu0 %960
        %v962 = vsel %vm885, %v871, 0
        %v964 = vsel %vm885, %v961, 0
        %966 = vmatprep.subr.mxu0 0.0
        %967 = vmatpush1.xpose.msra.mxu0 %v964
        %968 = vmatprep.subr.mxu0 0.0
        %969 = vmatpush1.xpose.msra.mxu0 0.0
        %970 = vmatprep.subr.mxu0 0.0
        %971 = vmatpush1.xpose.msra.mxu0 0.0
        %972 = vmatprep.subr.mxu0 0.0
        %973 = vmatpush1.xpose.msra.mxu0 0.0
        %974 = vmatprep.subr.mxu0 0.0
        %975 = vmatpush1.xpose.msra.mxu0 0.0
        %976 = vmatprep.subr.mxu0 0.0
        %977 = vmatpush1.xpose.msra.mxu0 0.0
        %978 = vmatprep.subr.mxu0 0.0
        %979 = vmatpush1.xpose.msra.mxu0 0.0
        %980 = vmatprep.subr.mxu0 0.0
        %981 = vmatpush1.xpose.msra.mxu0 0.0
        %982 = vmatprep.subr.mxu0 0.0
        %983 = vmatpush1.xpose.msra.mxu0 0.0
        %984 = vmatprep.subr.mxu0 0.0
        %985 = vmatpush1.xpose.msra.mxu0 0.0
        %986 = vmatprep.subr.mxu0 0.0
        %987 = vmatpush1.xpose.msra.mxu0 0.0
        %988 = vmatprep.subr.mxu0 0.0
        %989 = vmatpush1.xpose.msra.mxu0 0.0
        %990 = vmatprep.subr.mxu0 0.0
        %991 = vmatpush1.xpose.msra.mxu0 0.0
        %992 = vmatprep.subr.mxu0 0.0
        %993 = vmatpush1.xpose.msra.mxu0 0.0
        %994 = vmatprep.subr.mxu0 0.0
        %995 = vmatpush1.xpose.msra.mxu0 0.0
        %996 = vmatprep.subr.mxu0 0.0
        %997 = vmatpush1.xpose.msra.mxu0 0.0
        %998 = vmatprep.subr.mxu0 0.0
        %999 = vmatpush1.xpose.msra.mxu0 0.0
        %1000 = vmatprep.subr.mxu0 0.0
        %1001 = vmatpush1.xpose.msra.mxu0 0.0
        %1002 = vmatprep.subr.mxu0 0.0
        %1003 = vmatpush1.xpose.msra.mxu0 0.0
        %1004 = vmatprep.subr.mxu0 0.0
        %1005 = vmatpush1.xpose.msra.mxu0 0.0
        %1006 = vmatprep.subr.mxu0 0.0
        %1007 = vmatpush1.xpose.msra.mxu0 0.0
        %1008 = vmatprep.subr.mxu0 0.0
        %1009 = vmatpush1.xpose.msra.mxu0 0.0
        %1010 = vmatprep.subr.mxu0 0.0
        %1011 = vmatpush1.xpose.msra.mxu0 0.0
        %1012 = vmatprep.subr.mxu0 0.0
        %1013 = vmatpush1.xpose.msra.mxu0 0.0
        %1014 = vmatprep.subr.mxu0 0.0
        %1015 = vmatpush1.xpose.msra.mxu0 0.0
        %1016 = vmatprep.subr.mxu0 0.0
        %1017 = vmatpush1.xpose.msra.mxu0 0.0
        %1018 = vmatprep.subr.mxu0 0.0
        %1019 = vmatpush1.xpose.msra.mxu0 0.0
        %1020 = vmatprep.subr.mxu0 0.0
        %1021 = vmatpush1.xpose.msra.mxu0 0.0
        %1022 = vmatprep.subr.mxu0 0.0
        %1023 = vmatpush1.xpose.msra.mxu0 0.0
        %1024 = vmatprep.subr.mxu0 0.0
        %1025 = vmatpush1.xpose.msra.mxu0 0.0
        %1026 = vmatprep.subr.mxu0 0.0
        %1027 = vmatpush1.xpose.msra.mxu0 0.0
        %1028 = vmatprep.subr.mxu0 0.0
        %1029 = vmatpush1.xpose.msra.mxu0 0.0
        %1030 = vmatprep.mubr.f32.mxu0 0.0
        %1031 = vmatmul.mubr.f32.gmra.mrb[0].mxu0 %v962
        %v1032 = vpop.f32.mrb[0].mxu0
        %v1033 = vadd.f32 0.0, %v1032
        %v1034 = vpop.f32.mrb[0].mxu0
        %1035 = vdwg.mxu0
        %1036 = vrot.lane.b32.xlu0 %v880, 96
        %v1037 = vpop.permute.xlu0 %1036
        %v1038 = vsel %vm885, %v873, 0
        %v1040 = vsel %vm885, %v1037, 0
        %1042 = vmatprep.subr.mxu0 0.0
        %1043 = vmatpush1.xpose.msra.mxu0 %v1040
        %1044 = vmatprep.subr.mxu0 0.0
        %1045 = vmatpush1.xpose.msra.mxu0 0.0
        %1046 = vmatprep.subr.mxu0 0.0
        %1047 = vmatpush1.xpose.msra.mxu0 0.0
        %1048 = vmatprep.subr.mxu0 0.0
        %1049 = vmatpush1.xpose.msra.mxu0 0.0
        %1050 = vmatprep.subr.mxu0 0.0
        %1051 = vmatpush1.xpose.msra.mxu0 0.0
        %1052 = vmatprep.subr.mxu0 0.0
        %1053 = vmatpush1.xpose.msra.mxu0 0.0
        %1054 = vmatprep.subr.mxu0 0.0
        %1055 = vmatpush1.xpose.msra.mxu0 0.0
        %1056 = vmatprep.subr.mxu0 0.0
        %1057 = vmatpush1.xpose.msra.mxu0 0.0
        %1058 = vmatprep.subr.mxu0 0.0
        %1059 = vmatpush1.xpose.msra.mxu0 0.0
        %1060 = vmatprep.subr.mxu0 0.0
        %1061 = vmatpush1.xpose.msra.mxu0 0.0
        %1062 = vmatprep.subr.mxu0 0.0
        %1063 = vmatpush1.xpose.msra.mxu0 0.0
        %1064 = vmatprep.subr.mxu0 0.0
        %1065 = vmatpush1.xpose.msra.mxu0 0.0
        %1066 = vmatprep.subr.mxu0 0.0
        %1067 = vmatpush1.xpose.msra.mxu0 0.0
        %1068 = vmatprep.subr.mxu0 0.0
        %1069 = vmatpush1.xpose.msra.mxu0 0.0
        %1070 = vmatprep.subr.mxu0 0.0
        %1071 = vmatpush1.xpose.msra.mxu0 0.0
        %1072 = vmatprep.subr.mxu0 0.0
        %1073 = vmatpush1.xpose.msra.mxu0 0.0
        %1074 = vmatprep.subr.mxu0 0.0
        %1075 = vmatpush1.xpose.msra.mxu0 0.0
        %1076 = vmatprep.subr.mxu0 0.0
        %1077 = vmatpush1.xpose.msra.mxu0 0.0
        %1078 = vmatprep.subr.mxu0 0.0
        %1079 = vmatpush1.xpose.msra.mxu0 0.0
        %1080 = vmatprep.subr.mxu0 0.0
        %1081 = vmatpush1.xpose.msra.mxu0 0.0
        %1082 = vmatprep.subr.mxu0 0.0
        %1083 = vmatpush1.xpose.msra.mxu0 0.0
        %1084 = vmatprep.subr.mxu0 0.0
        %1085 = vmatpush1.xpose.msra.mxu0 0.0
        %1086 = vmatprep.subr.mxu0 0.0
        %1087 = vmatpush1.xpose.msra.mxu0 0.0
        %1088 = vmatprep.subr.mxu0 0.0
        %1089 = vmatpush1.xpose.msra.mxu0 0.0
        %1090 = vmatprep.subr.mxu0 0.0
        %1091 = vmatpush1.xpose.msra.mxu0 0.0
        %1092 = vmatprep.subr.mxu0 0.0
        %1093 = vmatpush1.xpose.msra.mxu0 0.0
        %1094 = vmatprep.subr.mxu0 0.0
        %1095 = vmatpush1.xpose.msra.mxu0 0.0
        %1096 = vmatprep.subr.mxu0 0.0
        %1097 = vmatpush1.xpose.msra.mxu0 0.0
        %1098 = vmatprep.subr.mxu0 0.0
        %1099 = vmatpush1.xpose.msra.mxu0 0.0
        %1100 = vmatprep.subr.mxu0 0.0
        %1101 = vmatpush1.xpose.msra.mxu0 0.0
        %1102 = vmatprep.subr.mxu0 0.0
        %1103 = vmatpush1.xpose.msra.mxu0 0.0
        %1104 = vmatprep.subr.mxu0 0.0
        %1105 = vmatpush1.xpose.msra.mxu0 0.0
        %1106 = vmatprep.mubr.f32.mxu0 0.0
        %1107 = vmatmul.mubr.f32.gmra.mrb[0].mxu0 %v1038
        %v1108 = vpop.f32.mrb[0].mxu0
        %v1109 = vadd.f32 0.0, %v1108
        %v1110 = vpop.f32.mrb[0].mxu0
        %1111 = vdwg.mxu0
        %1112 = vrot.lane.b32.xlu0 %v882, 96
        %v1113 = vpop.permute.xlu0 %1112
        %v1114 = vsel %vm885, %v875, 0
        %v1116 = vsel %vm885, %v1113, 0
        %1118 = vmatprep.subr.mxu0 0.0
        %1119 = vmatpush1.xpose.msra.mxu0 %v1116
        %1120 = vmatprep.subr.mxu0 0.0
        %1121 = vmatpush1.xpose.msra.mxu0 0.0
        %1122 = vmatprep.subr.mxu0 0.0
        %1123 = vmatpush1.xpose.msra.mxu0 0.0
        %1124 = vmatprep.subr.mxu0 0.0
        %1125 = vmatpush1.xpose.msra.mxu0 0.0
        %1126 = vmatprep.subr.mxu0 0.0
        %1127 = vmatpush1.xpose.msra.mxu0 0.0
        %1128 = vmatprep.subr.mxu0 0.0
        %1129 = vmatpush1.xpose.msra.mxu0 0.0
        %1130 = vmatprep.subr.mxu0 0.0
        %1131 = vmatpush1.xpose.msra.mxu0 0.0
        %1132 = vmatprep.subr.mxu0 0.0
        %1133 = vmatpush1.xpose.msra.mxu0 0.0
        %1134 = vmatprep.subr.mxu0 0.0
        %1135 = vmatpush1.xpose.msra.mxu0 0.0
        %1136 = vmatprep.subr.mxu0 0.0
        %1137 = vmatpush1.xpose.msra.mxu0 0.0
        %1138 = vmatprep.subr.mxu0 0.0
        %1139 = vmatpush1.xpose.msra.mxu0 0.0
        %1140 = vmatprep.subr.mxu0 0.0
        %1141 = vmatpush1.xpose.msra.mxu0 0.0
        %1142 = vmatprep.subr.mxu0 0.0
        %1143 = vmatpush1.xpose.msra.mxu0 0.0
        %1144 = vmatprep.subr.mxu0 0.0
        %1145 = vmatpush1.xpose.msra.mxu0 0.0
        %1146 = vmatprep.subr.mxu0 0.0
        %1147 = vmatpush1.xpose.msra.mxu0 0.0
        %1148 = vmatprep.subr.mxu0 0.0
        %1149 = vmatpush1.xpose.msra.mxu0 0.0
        %1150 = vmatprep.subr.mxu0 0.0
        %1151 = vmatpush1.xpose.msra.mxu0 0.0
        %1152 = vmatprep.subr.mxu0 0.0
        %1153 = vmatpush1.xpose.msra.mxu0 0.0
        %1154 = vmatprep.subr.mxu0 0.0
        %1155 = vmatpush1.xpose.msra.mxu0 0.0
        %1156 = vmatprep.subr.mxu0 0.0
        %1157 = vmatpush1.xpose.msra.mxu0 0.0
        %1158 = vmatprep.subr.mxu0 0.0
        %1159 = vmatpush1.xpose.msra.mxu0 0.0
        %1160 = vmatprep.subr.mxu0 0.0
        %1161 = vmatpush1.xpose.msra.mxu0 0.0
        %1162 = vmatprep.subr.mxu0 0.0
        %1163 = vmatpush1.xpose.msra.mxu0 0.0
        %1164 = vmatprep.subr.mxu0 0.0
        %1165 = vmatpush1.xpose.msra.mxu0 0.0
        %1166 = vmatprep.subr.mxu0 0.0
        %1167 = vmatpush1.xpose.msra.mxu0 0.0
        %1168 = vmatprep.subr.mxu0 0.0
        %1169 = vmatpush1.xpose.msra.mxu0 0.0
        %1170 = vmatprep.subr.mxu0 0.0
        %1171 = vmatpush1.xpose.msra.mxu0 0.0
        %1172 = vmatprep.subr.mxu0 0.0
        %1173 = vmatpush1.xpose.msra.mxu0 0.0
        %1174 = vmatprep.subr.mxu0 0.0
        %1175 = vmatpush1.xpose.msra.mxu0 0.0
        %1176 = vmatprep.subr.mxu0 0.0
        %1177 = vmatpush1.xpose.msra.mxu0 0.0
        %1178 = vmatprep.subr.mxu0 0.0
        %1179 = vmatpush1.xpose.msra.mxu0 0.0
        %1180 = vmatprep.subr.mxu0 0.0
        %1181 = vmatpush1.xpose.msra.mxu0 0.0
        %1182 = vmatprep.mubr.f32.mxu0 0.0
        %1183 = vmatmul.mubr.f32.gmra.mrb[0].mxu0 %v1114
        %v1184 = vpop.f32.mrb[0].mxu0
        %v1185 = vadd.f32 0.0, %v1184
        %v1186 = vpop.f32.mrb[0].mxu0
        %1187 = vdwg.mxu0
        %v1188 = vld [vmem:[%s676] sm:$0xff]
        %vm1189 = vcmp.gt.f32.partialorder %v1188, 0.5
        %v1190 = vsel %vm1189, 1, 0
        %vm1191 = vcmp.eq.s32.totalorder %v1190, 1
        %v1192 = vsel %vm1191, -1e+09, %v957
        %v1193 = vsel %vm1191, -1e+09, %v1033
        %v1194 = vsel %vm1191, -1e+09, %v1109
        %v1195 = vsel %vm1191, -1e+09, %v1185
        %v1196 = vsel %vm885, %v1192, -inf
        %1197 = vmax.xlane.f32.xlu0 %v1196
        %v1198 = vpop.xlane.xlu0 %1197
        %v1199 = vsel %vm885, %v1193, -inf
        %1200 = vmax.xlane.f32.xlu0 %v1199
        %v1201 = vpop.xlane.xlu0 %1200
        %v1202 = vsel %vm885, %v1194, -inf
        %1203 = vmax.xlane.f32.xlu0 %v1202
        %v1204 = vpop.xlane.xlu0 %1203
        %v1205 = vsel %vm885, %v1195, -inf
        %1206 = vmax.xlane.f32.xlu0 %v1205
        %v1207 = vpop.xlane.xlu0 %1206
        %v1208 = vsub.f32 %v1192, %v1198
        %v1209 = vsub.f32 %v1193, %v1201
        %v1210 = vsub.f32 %v1194, %v1204
        %v1211 = vsub.f32 %v1195, %v1207
        %v1212 = vmul.f32 %v1208, 1.442695
        %v1213 = vpow.pop %v1212
        %v1214 = vmul.f32 %v1209, 1.442695
        %v1215 = vpow.pop %v1214
        %v1216 = vmul.f32 %v1210, 1.442695
        %v1217 = vpow.pop %v1216
        %v1218 = vmul.f32 %v1211, 1.442695
        %v1219 = vpow.pop %v1218
        %v1220 = vsel %vm885, %v1213, 0.0
        %1221 = vadd.xlane.f32.xlu0 %v1220
        %v1222 = vpop.xlane.xlu0 %1221
        %v1223 = vsel %vm885, %v1215, 0.0
        %1224 = vadd.xlane.f32.xlu0 %v1223
        %v1225 = vpop.xlane.xlu0 %1224
        %v1226 = vsel %vm885, %v1217, 0.0
        %1227 = vadd.xlane.f32.xlu0 %v1226
        %v1228 = vpop.xlane.xlu0 %1227
        %v1229 = vsel %vm885, %v1219, 0.0
        %1230 = vadd.xlane.f32.xlu0 %v1229
        %v1231 = vpop.xlane.xlu0 %1230
        %v1232 = vrcp.pop %v1222
        %v1233 = vmul.f32 %v1213, %v1232
        %v1234 = vrcp.pop %v1225
        %v1235 = vmul.f32 %v1215, %v1234
        %v1236 = vrcp.pop %v1228
        %v1237 = vmul.f32 %v1217, %v1236
        %v1238 = vrcp.pop %v1231
        %v1239 = vmul.f32 %v1219, %v1238
        %1240 = vst.msk [vmem:[%s773] sm:$0xff] %vm885, %v1233
        %1241 = vst.msk [vmem:[%s773 + $0x8] sm:$0xff] %vm885, %v1235
        %1242 = vst.msk [vmem:[%s773 + $0x10] sm:$0xff] %vm885, %v1237
        %1243 = vst.msk [vmem:[%s773 + $0x18] sm:$0xff] %vm885, %v1239
        %1244 = vrot.lane.b32.xlu0 %v865, 64
        %v1245 = vpop.permute.xlu0 %1244
        %v1248 = vsel %vm885, %v1233, 0
        %1250 = vmatprep.subr.mxu0 0.0
        %1251 = vmatpush1.msra.mxu0 %v1245
        %1252 = vmatprep.subr.mxu0 0.0
        %1253 = vmatpush1.msra.mxu0 0.0
        %1254 = vmatprep.subr.mxu0 0.0
        %1255 = vmatpush1.msra.mxu0 0.0
        %1256 = vmatprep.subr.mxu0 0.0
        %1257 = vmatpush1.msra.mxu0 0.0
        %1258 = vmatprep.subr.mxu0 0.0
        %1259 = vmatpush1.msra.mxu0 0.0
        %1260 = vmatprep.subr.mxu0 0.0
        %1261 = vmatpush1.msra.mxu0 0.0
        %1262 = vmatprep.subr.mxu0 0.0
        %1263 = vmatpush1.msra.mxu0 0.0
        %1264 = vmatprep.subr.mxu0 0.0
        %1265 = vmatpush1.msra.mxu0 0.0
        %1266 = vmatprep.subr.mxu0 0.0
        %1267 = vmatpush1.msra.mxu0 0.0
        %1268 = vmatprep.subr.mxu0 0.0
        %1269 = vmatpush1.msra.mxu0 0.0
        %1270 = vmatprep.subr.mxu0 0.0
        %1271 = vmatpush1.msra.mxu0 0.0
        %1272 = vmatprep.subr.mxu0 0.0
        %1273 = vmatpush1.msra.mxu0 0.0
        %1274 = vmatprep.subr.mxu0 0.0
        %1275 = vmatpush1.msra.mxu0 0.0
        %1276 = vmatprep.subr.mxu0 0.0
        %1277 = vmatpush1.msra.mxu0 0.0
        %1278 = vmatprep.subr.mxu0 0.0
        %1279 = vmatpush1.msra.mxu0 0.0
        %1280 = vmatprep.subr.mxu0 0.0
        %1281 = vmatpush1.msra.mxu0 0.0
        %1282 = vmatprep.subr.mxu0 0.0
        %1283 = vmatpush1.msra.mxu0 0.0
        %1284 = vmatprep.subr.mxu0 0.0
        %1285 = vmatpush1.msra.mxu0 0.0
        %1286 = vmatprep.subr.mxu0 0.0
        %1287 = vmatpush1.msra.mxu0 0.0
        %1288 = vmatprep.subr.mxu0 0.0
        %1289 = vmatpush1.msra.mxu0 0.0
        %1290 = vmatprep.subr.mxu0 0.0
        %1291 = vmatpush1.msra.mxu0 0.0
        %1292 = vmatprep.subr.mxu0 0.0
        %1293 = vmatpush1.msra.mxu0 0.0
        %1294 = vmatprep.subr.mxu0 0.0
        %1295 = vmatpush1.msra.mxu0 0.0
        %1296 = vmatprep.subr.mxu0 0.0
        %1297 = vmatpush1.msra.mxu0 0.0
        %1298 = vmatprep.subr.mxu0 0.0
        %1299 = vmatpush1.msra.mxu0 0.0
        %1300 = vmatprep.subr.mxu0 0.0
        %1301 = vmatpush1.msra.mxu0 0.0
        %1302 = vmatprep.subr.mxu0 0.0
        %1303 = vmatpush1.msra.mxu0 0.0
        %1304 = vmatprep.subr.mxu0 0.0
        %1305 = vmatpush1.msra.mxu0 0.0
        %1306 = vmatprep.subr.mxu0 0.0
        %1307 = vmatpush1.msra.mxu0 0.0
        %1308 = vmatprep.subr.mxu0 0.0
        %1309 = vmatpush1.msra.mxu0 0.0
        %1310 = vmatprep.subr.mxu0 0.0
        %1311 = vmatpush1.msra.mxu0 0.0
        %1312 = vmatprep.subr.mxu0 0.0
        %1313 = vmatpush1.msra.mxu0 0.0
        %1314 = vmatprep.mubr.f32.mxu0 0.0
        %1315 = vmatmul.mubr.f32.gmra.mrb[0].mxu0 %v1248
        %v1316 = vpop.f32.mrb[0].mxu0
        %v1317 = vadd.f32 0.0, %v1316
        %v1318 = vpop.f32.mrb[0].mxu0
        %1319 = vdwg.mxu0
        %1320 = vrot.lane.b32.xlu0 %v878, 64
        %v1321 = vpop.permute.xlu0 %1320
        %v1324 = vsel %vm885, %v1235, 0
        %1326 = vmatprep.subr.mxu0 0.0
        %1327 = vmatpush1.msra.mxu0 %v1321
        %1328 = vmatprep.subr.mxu0 0.0
        %1329 = vmatpush1.msra.mxu0 0.0
        %1330 = vmatprep.subr.mxu0 0.0
        %1331 = vmatpush1.msra.mxu0 0.0
        %1332 = vmatprep.subr.mxu0 0.0
        %1333 = vmatpush1.msra.mxu0 0.0
        %1334 = vmatprep.subr.mxu0 0.0
        %1335 = vmatpush1.msra.mxu0 0.0
        %1336 = vmatprep.subr.mxu0 0.0
        %1337 = vmatpush1.msra.mxu0 0.0
        %1338 = vmatprep.subr.mxu0 0.0
        %1339 = vmatpush1.msra.mxu0 0.0
        %1340 = vmatprep.subr.mxu0 0.0
        %1341 = vmatpush1.msra.mxu0 0.0
        %1342 = vmatprep.subr.mxu0 0.0
        %1343 = vmatpush1.msra.mxu0 0.0
        %1344 = vmatprep.subr.mxu0 0.0
        %1345 = vmatpush1.msra.mxu0 0.0
        %1346 = vmatprep.subr.mxu0 0.0
        %1347 = vmatpush1.msra.mxu0 0.0
        %1348 = vmatprep.subr.mxu0 0.0
        %1349 = vmatpush1.msra.mxu0 0.0
        %1350 = vmatprep.subr.mxu0 0.0
        %1351 = vmatpush1.msra.mxu0 0.0
        %1352 = vmatprep.subr.mxu0 0.0
        %1353 = vmatpush1.msra.mxu0 0.0
        %1354 = vmatprep.subr.mxu0 0.0
        %1355 = vmatpush1.msra.mxu0 0.0
        %1356 = vmatprep.subr.mxu0 0.0
        %1357 = vmatpush1.msra.mxu0 0.0
        %1358 = vmatprep.subr.mxu0 0.0
        %1359 = vmatpush1.msra.mxu0 0.0
        %1360 = vmatprep.subr.mxu0 0.0
        %1361 = vmatpush1.msra.mxu0 0.0
        %1362 = vmatprep.subr.mxu0 0.0
        %1363 = vmatpush1.msra.mxu0 0.0
        %1364 = vmatprep.subr.mxu0 0.0
        %1365 = vmatpush1.msra.mxu0 0.0
        %1366 = vmatprep.subr.mxu0 0.0
        %1367 = vmatpush1.msra.mxu0 0.0
        %1368 = vmatprep.subr.mxu0 0.0
        %1369 = vmatpush1.msra.mxu0 0.0
        %1370 = vmatprep.subr.mxu0 0.0
        %1371 = vmatpush1.msra.mxu0 0.0
        %1372 = vmatprep.subr.mxu0 0.0
        %1373 = vmatpush1.msra.mxu0 0.0
        %1374 = vmatprep.subr.mxu0 0.0
        %1375 = vmatpush1.msra.mxu0 0.0
        %1376 = vmatprep.subr.mxu0 0.0
        %1377 = vmatpush1.msra.mxu0 0.0
        %1378 = vmatprep.subr.mxu0 0.0
        %1379 = vmatpush1.msra.mxu0 0.0
        %1380 = vmatprep.subr.mxu0 0.0
        %1381 = vmatpush1.msra.mxu0 0.0
        %1382 = vmatprep.subr.mxu0 0.0
        %1383 = vmatpush1.msra.mxu0 0.0
        %1384 = vmatprep.subr.mxu0 0.0
        %1385 = vmatpush1.msra.mxu0 0.0
        %1386 = vmatprep.subr.mxu0 0.0
        %1387 = vmatpush1.msra.mxu0 0.0
        %1388 = vmatprep.subr.mxu0 0.0
        %1389 = vmatpush1.msra.mxu0 0.0
        %1390 = vmatprep.mubr.f32.mxu0 0.0
        %1391 = vmatmul.mubr.f32.gmra.mrb[0].mxu0 %v1324
        %v1392 = vpop.f32.mrb[0].mxu0
        %v1393 = vadd.f32 0.0, %v1392
        %v1394 = vpop.f32.mrb[0].mxu0
        %1395 = vdwg.mxu0
        %1396 = vrot.lane.b32.xlu0 %v880, 64
        %v1397 = vpop.permute.xlu0 %1396
        %v1400 = vsel %vm885, %v1237, 0
        %1402 = vmatprep.subr.mxu0 0.0
        %1403 = vmatpush1.msra.mxu0 %v1397
        %1404 = vmatprep.subr.mxu0 0.0
        %1405 = vmatpush1.msra.mxu0 0.0
        %1406 = vmatprep.subr.mxu0 0.0
        %1407 = vmatpush1.msra.mxu0 0.0
        %1408 = vmatprep.subr.mxu0 0.0
        %1409 = vmatpush1.msra.mxu0 0.0
        %1410 = vmatprep.subr.mxu0 0.0
        %1411 = vmatpush1.msra.mxu0 0.0
        %1412 = vmatprep.subr.mxu0 0.0
        %1413 = vmatpush1.msra.mxu0 0.0
        %1414 = vmatprep.subr.mxu0 0.0
        %1415 = vmatpush1.msra.mxu0 0.0
        %1416 = vmatprep.subr.mxu0 0.0
        %1417 = vmatpush1.msra.mxu0 0.0
        %1418 = vmatprep.subr.mxu0 0.0
        %1419 = vmatpush1.msra.mxu0 0.0
        %1420 = vmatprep.subr.mxu0 0.0
        %1421 = vmatpush1.msra.mxu0 0.0
        %1422 = vmatprep.subr.mxu0 0.0
        %1423 = vmatpush1.msra.mxu0 0.0
        %1424 = vmatprep.subr.mxu0 0.0
        %1425 = vmatpush1.msra.mxu0 0.0
        %1426 = vmatprep.subr.mxu0 0.0
        %1427 = vmatpush1.msra.mxu0 0.0
        %1428 = vmatprep.subr.mxu0 0.0
        %1429 = vmatpush1.msra.mxu0 0.0
        %1430 = vmatprep.subr.mxu0 0.0
        %1431 = vmatpush1.msra.mxu0 0.0
        %1432 = vmatprep.subr.mxu0 0.0
        %1433 = vmatpush1.msra.mxu0 0.0
        %1434 = vmatprep.subr.mxu0 0.0
        %1435 = vmatpush1.msra.mxu0 0.0
        %1436 = vmatprep.subr.mxu0 0.0
        %1437 = vmatpush1.msra.mxu0 0.0
        %1438 = vmatprep.subr.mxu0 0.0
        %1439 = vmatpush1.msra.mxu0 0.0
        %1440 = vmatprep.subr.mxu0 0.0
        %1441 = vmatpush1.msra.mxu0 0.0
        %1442 = vmatprep.subr.mxu0 0.0
        %1443 = vmatpush1.msra.mxu0 0.0
        %1444 = vmatprep.subr.mxu0 0.0
        %1445 = vmatpush1.msra.mxu0 0.0
        %1446 = vmatprep.subr.mxu0 0.0
        %1447 = vmatpush1.msra.mxu0 0.0
        %1448 = vmatprep.subr.mxu0 0.0
        %1449 = vmatpush1.msra.mxu0 0.0
        %1450 = vmatprep.subr.mxu0 0.0
        %1451 = vmatpush1.msra.mxu0 0.0
        %1452 = vmatprep.subr.mxu0 0.0
        %1453 = vmatpush1.msra.mxu0 0.0
        %1454 = vmatprep.subr.mxu0 0.0
        %1455 = vmatpush1.msra.mxu0 0.0
        %1456 = vmatprep.subr.mxu0 0.0
        %1457 = vmatpush1.msra.mxu0 0.0
        %1458 = vmatprep.subr.mxu0 0.0
        %1459 = vmatpush1.msra.mxu0 0.0
        %1460 = vmatprep.subr.mxu0 0.0
        %1461 = vmatpush1.msra.mxu0 0.0
        %1462 = vmatprep.subr.mxu0 0.0
        %1463 = vmatpush1.msra.mxu0 0.0
        %1464 = vmatprep.subr.mxu0 0.0
        %1465 = vmatpush1.msra.mxu0 0.0
        %1466 = vmatprep.mubr.f32.mxu0 0.0
        %1467 = vmatmul.mubr.f32.gmra.mrb[0].mxu0 %v1400
        %v1468 = vpop.f32.mrb[0].mxu0
        %v1469 = vadd.f32 0.0, %v1468
        %v1470 = vpop.f32.mrb[0].mxu0
        %1471 = vdwg.mxu0
        %1472 = vrot.lane.b32.xlu0 %v882, 64
        %v1473 = vpop.permute.xlu0 %1472
        %v1476 = vsel %vm885, %v1239, 0
        %1478 = vmatprep.subr.mxu0 0.0
        %1479 = vmatpush1.msra.mxu0 %v1473
        %1480 = vmatprep.subr.mxu0 0.0
        %1481 = vmatpush1.msra.mxu0 0.0
        %1482 = vmatprep.subr.mxu0 0.0
        %1483 = vmatpush1.msra.mxu0 0.0
        %1484 = vmatprep.subr.mxu0 0.0
        %1485 = vmatpush1.msra.mxu0 0.0
        %1486 = vmatprep.subr.mxu0 0.0
        %1487 = vmatpush1.msra.mxu0 0.0
        %1488 = vmatprep.subr.mxu0 0.0
        %1489 = vmatpush1.msra.mxu0 0.0
        %1490 = vmatprep.subr.mxu0 0.0
        %1491 = vmatpush1.msra.mxu0 0.0
        %1492 = vmatprep.subr.mxu0 0.0
        %1493 = vmatpush1.msra.mxu0 0.0
        %1494 = vmatprep.subr.mxu0 0.0
        %1495 = vmatpush1.msra.mxu0 0.0
        %1496 = vmatprep.subr.mxu0 0.0
        %1497 = vmatpush1.msra.mxu0 0.0
        %1498 = vmatprep.subr.mxu0 0.0
        %1499 = vmatpush1.msra.mxu0 0.0
        %1500 = vmatprep.subr.mxu0 0.0
        %1501 = vmatpush1.msra.mxu0 0.0
        %1502 = vmatprep.subr.mxu0 0.0
        %1503 = vmatpush1.msra.mxu0 0.0
        %1504 = vmatprep.subr.mxu0 0.0
        %1505 = vmatpush1.msra.mxu0 0.0
        %1506 = vmatprep.subr.mxu0 0.0
        %1507 = vmatpush1.msra.mxu0 0.0
        %1508 = vmatprep.subr.mxu0 0.0
        %1509 = vmatpush1.msra.mxu0 0.0
        %1510 = vmatprep.subr.mxu0 0.0
        %1511 = vmatpush1.msra.mxu0 0.0
        %1512 = vmatprep.subr.mxu0 0.0
        %1513 = vmatpush1.msra.mxu0 0.0
        %1514 = vmatprep.subr.mxu0 0.0
        %1515 = vmatpush1.msra.mxu0 0.0
        %1516 = vmatprep.subr.mxu0 0.0
        %1517 = vmatpush1.msra.mxu0 0.0
        %1518 = vmatprep.subr.mxu0 0.0
        %1519 = vmatpush1.msra.mxu0 0.0
        %1520 = vmatprep.subr.mxu0 0.0
        %1521 = vmatpush1.msra.mxu0 0.0
        %1522 = vmatprep.subr.mxu0 0.0
        %1523 = vmatpush1.msra.mxu0 0.0
        %1524 = vmatprep.subr.mxu0 0.0
        %1525 = vmatpush1.msra.mxu0 0.0
        %1526 = vmatprep.subr.mxu0 0.0
        %1527 = vmatpush1.msra.mxu0 0.0
        %1528 = vmatprep.subr.mxu0 0.0
        %1529 = vmatpush1.msra.mxu0 0.0
        %1530 = vmatprep.subr.mxu0 0.0
        %1531 = vmatpush1.msra.mxu0 0.0
        %1532 = vmatprep.subr.mxu0 0.0
        %1533 = vmatpush1.msra.mxu0 0.0
        %1534 = vmatprep.subr.mxu0 0.0
        %1535 = vmatpush1.msra.mxu0 0.0
        %1536 = vmatprep.subr.mxu0 0.0
        %1537 = vmatpush1.msra.mxu0 0.0
        %1538 = vmatprep.subr.mxu0 0.0
        %1539 = vmatpush1.msra.mxu0 0.0
        %1540 = vmatprep.subr.mxu0 0.0
        %1541 = vmatpush1.msra.mxu0 0.0
        %1542 = vmatprep.mubr.f32.mxu0 0.0
        %1543 = vmatmul.mubr.f32.gmra.mrb[0].mxu0 %v1476
        %v1544 = vpop.f32.mrb[0].mxu0
        %v1545 = vadd.f32 0.0, %v1544
        %v1546 = vpop.f32.mrb[0].mxu0
        %1547 = vdwg.mxu0
        %1549 = vrot.lane.b32.xlu0 %v1393, 8
        %v1550 = vpop.permute.xlu0 %1549
        %1553 = vrot.lane.b32.xlu0 %v1469, 16
        %v1554 = vpop.permute.xlu0 %1553
        %1557 = vrot.lane.b32.xlu0 %v1545, 24
        %v1558 = vpop.permute.xlu0 %1557
        %v1560 = vsel %vm885, %v1317, %v1550
        %vm1561 = vcmask 130048
        %v1562 = vsel %vm1561, %v1560, %v1554
        %vm1563 = vcmask 195584
        %v1564 = vsel %vm1563, %v1562, %v1558
        %v1565 = vld [vmem:[%s5] sm:$0xff]
        %v1566 = vld [vmem:[%s5 + $0x8] sm:$0xff]
        %v1567 = vld [vmem:[%s5 + $0x10] sm:$0xff]
        %v1568 = vld [vmem:[%s5 + $0x18] sm:$0xff]
        %v1570 = vsel %vm794, %v1564, 0
        %1572 = vmatprep.subr.mxu0 0.0
        %1573 = vmatpush1.msra.mxu0 %v1565
        %1574 = vmatprep.subr.mxu0 0.0
        %1575 = vmatpush1.msra.mxu0 %v1566
        %1576 = vmatprep.subr.mxu0 0.0
        %1577 = vmatpush1.msra.mxu0 %v1567
        %1578 = vmatprep.subr.mxu0 0.0
        %1579 = vmatpush1.msra.mxu0 %v1568
        %1580 = vmatprep.subr.mxu0 0.0
        %1581 = vmatpush1.msra.mxu0 0.0
        %1582 = vmatprep.subr.mxu0 0.0
        %1583 = vmatpush1.msra.mxu0 0.0
        %1584 = vmatprep.subr.mxu0 0.0
        %1585 = vmatpush1.msra.mxu0 0.0
        %1586 = vmatprep.subr.mxu0 0.0
        %1587 = vmatpush1.msra.mxu0 0.0
        %1588 = vmatprep.subr.mxu0 0.0
        %1589 = vmatpush1.msra.mxu0 0.0
        %1590 = vmatprep.subr.mxu0 0.0
        %1591 = vmatpush1.msra.mxu0 0.0
        %1592 = vmatprep.subr.mxu0 0.0
        %1593 = vmatpush1.msra.mxu0 0.0
        %1594 = vmatprep.subr.mxu0 0.0
        %1595 = vmatpush1.msra.mxu0 0.0
        %1596 = vmatprep.subr.mxu0 0.0
        %1597 = vmatpush1.msra.mxu0 0.0
        %1598 = vmatprep.subr.mxu0 0.0
        %1599 = vmatpush1.msra.mxu0 0.0
        %1600 = vmatprep.subr.mxu0 0.0
        %1601 = vmatpush1.msra.mxu0 0.0
        %1602 = vmatprep.subr.mxu0 0.0
        %1603 = vmatpush1.msra.mxu0 0.0
        %1604 = vmatprep.subr.mxu0 0.0
        %1605 = vmatpush1.msra.mxu0 0.0
        %1606 = vmatprep.subr.mxu0 0.0
        %1607 = vmatpush1.msra.mxu0 0.0
        %1608 = vmatprep.subr.mxu0 0.0
        %1609 = vmatpush1.msra.mxu0 0.0
        %1610 = vmatprep.subr.mxu0 0.0
        %1611 = vmatpush1.msra.mxu0 0.0
        %1612 = vmatprep.subr.mxu0 0.0
        %1613 = vmatpush1.msra.mxu0 0.0
        %1614 = vmatprep.subr.mxu0 0.0
        %1615 = vmatpush1.msra.mxu0 0.0
        %1616 = vmatprep.subr.mxu0 0.0
        %1617 = vmatpush1.msra.mxu0 0.0
        %1618 = vmatprep.subr.mxu0 0.0
        %1619 = vmatpush1.msra.mxu0 0.0
        %1620 = vmatprep.subr.mxu0 0.0
        %1621 = vmatpush1.msra.mxu0 0.0
        %1622 = vmatprep.subr.mxu0 0.0
        %1623 = vmatpush1.msra.mxu0 0.0
        %1624 = vmatprep.subr.mxu0 0.0
        %1625 = vmatpush1.msra.mxu0 0.0
        %1626 = vmatprep.subr.mxu0 0.0
        %1627 = vmatpush1.msra.mxu0 0.0
        %1628 = vmatprep.subr.mxu0 0.0
        %1629 = vmatpush1.msra.mxu0 0.0
        %1630 = vmatprep.subr.mxu0 0.0
        %1631 = vmatpush1.msra.mxu0 0.0
        %1632 = vmatprep.subr.mxu0 0.0
        %1633 = vmatpush1.msra.mxu0 0.0
        %1634 = vmatprep.subr.mxu0 0.0
        %1635 = vmatpush1.msra.mxu0 0.0
        %1636 = vmatprep.mubr.f32.mxu0 0.0
        %1637 = vmatmul.mubr.f32.gmra.mrb[0].mxu0 %v1570
        %v1638 = vpop.f32.mrb[0].mxu0
        %v1639 = vadd.f32 %v787, %v1638
        %v1640 = vpop.f32.mrb[0].mxu0
        %1641 = vdwg.mxu0
        %v1642 = vsel %vm794, %v1639, 0.0
        %1643 = vadd.xlane.f32.xlu0 %v1642
        %v1644 = vpop.xlane.xlu0 %1643
        %v1645 = vrcp.pop 32.0
        %v1646 = vmul.f32 %v1644, %v1645
        %v1647 = vsub.f32 %v1639, %v1646
        %v1648 = vmul.f32 %v1647, %v1647
        %v1649 = vsel %vm794, %v1648, 0.0
        %1650 = vadd.xlane.f32.xlu0 %v1649
        %v1651 = vpop.xlane.xlu0 %1650
        %v1652 = vmul.f32 %v1651, %v1645
        %v1653 = vadd.f32 %v1652, 1e-05
        %v1654 = vrsqrt.pop %v1653
        %v1655 = vmul.f32 %v1647, %v1654
        %v1656 = vld [vmem:[%s6] sm:$0x1]
        %v1658 = vlaneseq
        %v1659 = vshrl.u32 %v1658, 7
        %v1660 = vsub.s32 0, %v1659
        %v1661 = vrot.slane %v1656, %v1660
        %v1663 = vmul.f32 %v1655, %v1661
        %v1664 = vld [vmem:[%s7] sm:$0x1]
        %v1666 = vlaneseq
        %v1667 = vshrl.u32 %v1666, 7
        %v1668 = vsub.s32 0, %v1667
        %v1669 = vrot.slane %v1664, %v1668
        %v1671 = vadd.f32 %v1663, %v1669
        %v1672 = vld [vmem:[#allocation8] sm:$0xff]
        %v1673 = vld [vmem:[#allocation8 + $0x8] sm:$0xff]
        %v1674 = vld [vmem:[#allocation8 + $0x10] sm:$0xff]
        %v1675 = vld [vmem:[#allocation8 + $0x18] sm:$0xff]
        %v1677 = vsel %vm794, %v1671, 0
        %1679 = vmatprep.subr.mxu0 0.0
        %1680 = vmatpush1.msra.mxu0 %v1672
        %1681 = vmatprep.subr.mxu0 0.0
        %1682 = vmatpush1.msra.mxu0 %v1673
        %1683 = vmatprep.subr.mxu0 0.0
        %1684 = vmatpush1.msra.mxu0 %v1674
        %1685 = vmatprep.subr.mxu0 0.0
        %1686 = vmatpush1.msra.mxu0 %v1675
        %1687 = vmatprep.subr.mxu0 0.0
        %1688 = vmatpush1.msra.mxu0 0.0
        %1689 = vmatprep.subr.mxu0 0.0
        %1690 = vmatpush1.msra.mxu0 0.0
        %1691 = vmatprep.subr.mxu0 0.0
        %1692 = vmatpush1.msra.mxu0 0.0
        %1693 = vmatprep.subr.mxu0 0.0
        %1694 = vmatpush1.msra.mxu0 0.0
        %1695 = vmatprep.subr.mxu0 0.0
        %1696 = vmatpush1.msra.mxu0 0.0
        %1697 = vmatprep.subr.mxu0 0.0
        %1698 = vmatpush1.msra.mxu0 0.0
        %1699 = vmatprep.subr.mxu0 0.0
        %1700 = vmatpush1.msra.mxu0 0.0
        %1701 = vmatprep.subr.mxu0 0.0
        %1702 = vmatpush1.msra.mxu0 0.0
        %1703 = vmatprep.subr.mxu0 0.0
        %1704 = vmatpush1.msra.mxu0 0.0
        %1705 = vmatprep.subr.mxu0 0.0
        %1706 = vmatpush1.msra.mxu0 0.0
        %1707 = vmatprep.subr.mxu0 0.0
        %1708 = vmatpush1.msra.mxu0 0.0
        %1709 = vmatprep.subr.mxu0 0.0
        %1710 = vmatpush1.msra.mxu0 0.0
        %1711 = vmatprep.subr.mxu0 0.0
        %1712 = vmatpush1.msra.mxu0 0.0
        %1713 = vmatprep.subr.mxu0 0.0
        %1714 = vmatpush1.msra.mxu0 0.0
        %1715 = vmatprep.subr.mxu0 0.0
        %1716 = vmatpush1.msra.mxu0 0.0
        %1717 = vmatprep.subr.mxu0 0.0
        %1718 = vmatpush1.msra.mxu0 0.0
        %1719 = vmatprep.subr.mxu0 0.0
        %1720 = vmatpush1.msra.mxu0 0.0
        %1721 = vmatprep.subr.mxu0 0.0
        %1722 = vmatpush1.msra.mxu0 0.0
        %1723 = vmatprep.subr.mxu0 0.0
        %1724 = vmatpush1.msra.mxu0 0.0
        %1725 = vmatprep.subr.mxu0 0.0
        %1726 = vmatpush1.msra.mxu0 0.0
        %1727 = vmatprep.subr.mxu0 0.0
        %1728 = vmatpush1.msra.mxu0 0.0
        %1729 = vmatprep.subr.mxu0 0.0
        %1730 = vmatpush1.msra.mxu0 0.0
        %1731 = vmatprep.subr.mxu0 0.0
        %1732 = vmatpush1.msra.mxu0 0.0
        %1733 = vmatprep.subr.mxu0 0.0
        %1734 = vmatpush1.msra.mxu0 0.0
        %1735 = vmatprep.subr.mxu0 0.0
        %1736 = vmatpush1.msra.mxu0 0.0
        %1737 = vmatprep.subr.mxu0 0.0
        %1738 = vmatpush1.msra.mxu0 0.0
        %1739 = vmatprep.subr.mxu0 0.0
        %1740 = vmatpush1.msra.mxu0 0.0
        %1741 = vmatprep.subr.mxu0 0.0
        %1742 = vmatpush1.msra.mxu0 0.0
        %1743 = vmatprep.mubr.f32.mxu0 0.0
        %1744 = vmatmul.mubr.f32.gmra.mrb[0].mxu0 %v1677
        %v1745 = vpop.f32.mrb[0].mxu0
        %v1746 = vadd.f32 0.0, %v1745
        %v1747 = vpop.f32.mrb[0].mxu0
        %1748 = vdwg.mxu0
        %v1749 = vmul.f32 %v1746, 0.35355338
        %v1750 = vld [vmem:[#allocation10] sm:$0xff]
        %v1751 = vld [vmem:[#allocation10 + $0x8] sm:$0xff]
        %v1752 = vld [vmem:[#allocation10 + $0x10] sm:$0xff]
        %v1753 = vld [vmem:[#allocation10 + $0x18] sm:$0xff]
        %v1755 = vsel %vm794, %v788, 0
        %v1758 = vsel %vm794, %v789, 0
        %1760 = vmatprep.subr.mxu0 0.0
        %1761 = vmatpush1.msra.mxu0 %v1750
        %1762 = vmatprep.subr.mxu0 0.0
        %1763 = vmatpush1.msra.mxu0 %v1751
        %1764 = vmatprep.subr.mxu0 0.0
        %1765 = vmatpush1.msra.mxu0 %v1752
        %1766 = vmatprep.subr.mxu0 0.0
        %1767 = vmatpush1.msra.mxu0 %v1753
        %1768 = vmatprep.subr.mxu0 0.0
        %1769 = vmatpush1.msra.mxu0 0.0
        %1770 = vmatprep.subr.mxu0 0.0
        %1771 = vmatpush1.msra.mxu0 0.0
        %1772 = vmatprep.subr.mxu0 0.0
        %1773 = vmatpush1.msra.mxu0 0.0
        %1774 = vmatprep.subr.mxu0 0.0
        %1775 = vmatpush1.msra.mxu0 0.0
        %1776 = vmatprep.subr.mxu0 0.0
        %1777 = vmatpush1.msra.mxu0 0.0
        %1778 = vmatprep.subr.mxu0 0.0
        %1779 = vmatpush1.msra.mxu0 0.0
        %1780 = vmatprep.subr.mxu0 0.0
        %1781 = vmatpush1.msra.mxu0 0.0
        %1782 = vmatprep.subr.mxu0 0.0
        %1783 = vmatpush1.msra.mxu0 0.0
        %1784 = vmatprep.subr.mxu0 0.0
        %1785 = vmatpush1.msra.mxu0 0.0
        %1786 = vmatprep.subr.mxu0 0.0
        %1787 = vmatpush1.msra.mxu0 0.0
        %1788 = vmatprep.subr.mxu0 0.0
        %1789 = vmatpush1.msra.mxu0 0.0
        %1790 = vmatprep.subr.mxu0 0.0
        %1791 = vmatpush1.msra.mxu0 0.0
        %1792 = vmatprep.subr.mxu0 0.0
        %1793 = vmatpush1.msra.mxu0 0.0
        %1794 = vmatprep.subr.mxu0 0.0
        %1795 = vmatpush1.msra.mxu0 0.0
        %1796 = vmatprep.subr.mxu0 0.0
        %1797 = vmatpush1.msra.mxu0 0.0
        %1798 = vmatprep.subr.mxu0 0.0
        %1799 = vmatpush1.msra.mxu0 0.0
        %1800 = vmatprep.subr.mxu0 0.0
        %1801 = vmatpush1.msra.mxu0 0.0
        %1802 = vmatprep.subr.mxu0 0.0
        %1803 = vmatpush1.msra.mxu0 0.0
        %1804 = vmatprep.subr.mxu0 0.0
        %1805 = vmatpush1.msra.mxu0 0.0
        %1806 = vmatprep.subr.mxu0 0.0
        %1807 = vmatpush1.msra.mxu0 0.0
        %1808 = vmatprep.subr.mxu0 0.0
        %1809 = vmatpush1.msra.mxu0 0.0
        %1810 = vmatprep.subr.mxu0 0.0
        %1811 = vmatpush1.msra.mxu0 0.0
        %1812 = vmatprep.subr.mxu0 0.0
        %1813 = vmatpush1.msra.mxu0 0.0
        %1814 = vmatprep.subr.mxu0 0.0
        %1815 = vmatpush1.msra.mxu0 0.0
        %1816 = vmatprep.subr.mxu0 0.0
        %1817 = vmatpush1.msra.mxu0 0.0
        %1818 = vmatprep.subr.mxu0 0.0
        %1819 = vmatpush1.msra.mxu0 0.0
        %1820 = vmatprep.subr.mxu0 0.0
        %1821 = vmatpush1.msra.mxu0 0.0
        %1822 = vmatprep.subr.mxu0 0.0
        %1823 = vmatpush1.msra.mxu0 0.0
        %1824 = vmatprep.mubr.f32.mxu0 0.0
        %1825 = vmatmul.mubr.f32.gmra.mrb[0].mxu0 %v1755
        %v1826 = vpop.f32.mrb[0].mxu0
        %v1827 = vadd.f32 0.0, %v1826
        %v1828 = vpop.f32.mrb[0].mxu0
        %1829 = vmatprep.mubr.f32.mxu0 0.0
        %1830 = vmatmul.mubr.f32.gmra.mrb[0].mxu0 %v1758
        %v1831 = vpop.f32.mrb[0].mxu0
        %v1832 = vadd.f32 0.0, %v1831
        %v1833 = vpop.f32.mrb[0].mxu0
        %1834 = vdwg.mxu0
        %1836 = vrot.lane.b32.xlu0 %v1749, 120
        %v1837 = vpop.permute.xlu0 %1836
        %1838 = vrot.lane.b32.xlu0 %v1749, 112
        %v1839 = vpop.permute.xlu0 %1838
        %1840 = vrot.lane.b32.xlu0 %v1749, 104
        %v1841 = vpop.permute.xlu0 %1840
        %1844 = vrot.lane.b32.xlu0 %v1827, 120
        %v1845 = vpop.permute.xlu0 %1844
        %1846 = vrot.lane.b32.xlu0 %v1832, 120
        %v1847 = vpop.permute.xlu0 %1846
        %1848 = vrot.lane.b32.xlu0 %v1827, 112
        %v1849 = vpop.permute.xlu0 %1848
        %1850 = vrot.lane.b32.xlu0 %v1832, 112
        %v1851 = vpop.permute.xlu0 %1850
        %1852 = vrot.lane.b32.xlu0 %v1827, 104
        %v1853 = vpop.permute.xlu0 %1852
        %1854 = vrot.lane.b32.xlu0 %v1832, 104
        %v1855 = vpop.permute.xlu0 %1854
        %v1856 = vsel %vm885, %v1749, 0
        %v1858 = vsel %vm885, %v1827, 0
        %v1860 = vsel %vm885, %v1832, 0
        %1862 = vmatprep.subr.mxu0 0.0
        %1863 = vmatpush1.xpose.msra.mxu0 %v1858
        %1864 = vmatprep.subr.mxu0 0.0
        %1865 = vmatpush1.xpose.msra.mxu0 %v1860
        %1866 = vmatprep.subr.mxu0 0.0
        %1867 = vmatpush1.xpose.msra.mxu0 0.0
        %1868 = vmatprep.subr.mxu0 0.0
        %1869 = vmatpush1.xpose.msra.mxu0 0.0
        %1870 = vmatprep.subr.mxu0 0.0
        %1871 = vmatpush1.xpose.msra.mxu0 0.0
        %1872 = vmatprep.subr.mxu0 0.0
        %1873 = vmatpush1.xpose.msra.mxu0 0.0
        %1874 = vmatprep.subr.mxu0 0.0
        %1875 = vmatpush1.xpose.msra.mxu0 0.0
        %1876 = vmatprep.subr.mxu0 0.0
        %1877 = vmatpush1.xpose.msra.mxu0 0.0
        %1878 = vmatprep.subr.mxu0 0.0
        %1879 = vmatpush1.xpose.msra.mxu0 0.0
        %1880 = vmatprep.subr.mxu0 0.0
        %1881 = vmatpush1.xpose.msra.mxu0 0.0
        %1882 = vmatprep.subr.mxu0 0.0
        %1883 = vmatpush1.xpose.msra.mxu0 0.0
        %1884 = vmatprep.subr.mxu0 0.0
        %1885 = vmatpush1.xpose.msra.mxu0 0.0
        %1886 = vmatprep.subr.mxu0 0.0
        %1887 = vmatpush1.xpose.msra.mxu0 0.0
        %1888 = vmatprep.subr.mxu0 0.0
        %1889 = vmatpush1.xpose.msra.mxu0 0.0
        %1890 = vmatprep.subr.mxu0 0.0
        %1891 = vmatpush1.xpose.msra.mxu0 0.0
        %1892 = vmatprep.subr.mxu0 0.0
        %1893 = vmatpush1.xpose.msra.mxu0 0.0
        %1894 = vmatprep.subr.mxu0 0.0
        %1895 = vmatpush1.xpose.msra.mxu0 0.0
        %1896 = vmatprep.subr.mxu0 0.0
        %1897 = vmatpush1.xpose.msra.mxu0 0.0
        %1898 = vmatprep.subr.mxu0 0.0
        %1899 = vmatpush1.xpose.msra.mxu0 0.0
        %1900 = vmatprep.subr.mxu0 0.0
        %1901 = vmatpush1.xpose.msra.mxu0 0.0
        %1902 = vmatprep.subr.mxu0 0.0
        %1903 = vmatpush1.xpose.msra.mxu0 0.0
        %1904 = vmatprep.subr.mxu0 0.0
        %1905 = vmatpush1.xpose.msra.mxu0 0.0
        %1906 = vmatprep.subr.mxu0 0.0
        %1907 = vmatpush1.xpose.msra.mxu0 0.0
        %1908 = vmatprep.subr.mxu0 0.0
        %1909 = vmatpush1.xpose.msra.mxu0 0.0
        %1910 = vmatprep.subr.mxu0 0.0
        %1911 = vmatpush1.xpose.msra.mxu0 0.0
        %1912 = vmatprep.subr.mxu0 0.0
        %1913 = vmatpush1.xpose.msra.mxu0 0.0
        %1914 = vmatprep.subr.mxu0 0.0
        %1915 = vmatpush1.xpose.msra.mxu0 0.0
        %1916 = vmatprep.subr.mxu0 0.0
        %1917 = vmatpush1.xpose.msra.mxu0 0.0
        %1918 = vmatprep.subr.mxu0 0.0
        %1919 = vmatpush1.xpose.msra.mxu0 0.0
        %1920 = vmatprep.subr.mxu0 0.0
        %1921 = vmatpush1.xpose.msra.mxu0 0.0
        %1922 = vmatprep.subr.mxu0 0.0
        %1923 = vmatpush1.xpose.msra.mxu0 0.0
        %1924 = vmatprep.subr.mxu0 0.0
        %1925 = vmatpush1.xpose.msra.mxu0 0.0
        %1926 = vmatprep.mubr.f32.mxu0 0.0
        %1927 = vmatmul.mubr.f32.gmra.mrb[0].mxu0 %v1856
        %v1928 = vpop.f32.mrb[0].mxu0
        %v1929 = vadd.f32 0.0, %v1928
        %v1930 = vpop.f32.mrb[0].mxu0
        %1931 = vdwg.mxu0
        %v1932 = vsel %vm885, %v1837, 0
        %v1934 = vsel %vm885, %v1845, 0
        %v1936 = vsel %vm885, %v1847, 0
        %1938 = vmatprep.subr.mxu0 0.0
        %1939 = vmatpush1.xpose.msra.mxu0 %v1934
        %1940 = vmatprep.subr.mxu0 0.0
        %1941 = vmatpush1.xpose.msra.mxu0 %v1936
        %1942 = vmatprep.subr.mxu0 0.0
        %1943 = vmatpush1.xpose.msra.mxu0 0.0
        %1944 = vmatprep.subr.mxu0 0.0
        %1945 = vmatpush1.xpose.msra.mxu0 0.0
        %1946 = vmatprep.subr.mxu0 0.0
        %1947 = vmatpush1.xpose.msra.mxu0 0.0
        %1948 = vmatprep.subr.mxu0 0.0
        %1949 = vmatpush1.xpose.msra.mxu0 0.0
        %1950 = vmatprep.subr.mxu0 0.0
        %1951 = vmatpush1.xpose.msra.mxu0 0.0
        %1952 = vmatprep.subr.mxu0 0.0
        %1953 = vmatpush1.xpose.msra.mxu0 0.0
        %1954 = vmatprep.subr.mxu0 0.0
        %1955 = vmatpush1.xpose.msra.mxu0 0.0
        %1956 = vmatprep.subr.mxu0 0.0
        %1957 = vmatpush1.xpose.msra.mxu0 0.0
        %1958 = vmatprep.subr.mxu0 0.0
        %1959 = vmatpush1.xpose.msra.mxu0 0.0
        %1960 = vmatprep.subr.mxu0 0.0
        %1961 = vmatpush1.xpose.msra.mxu0 0.0
        %1962 = vmatprep.subr.mxu0 0.0
        %1963 = vmatpush1.xpose.msra.mxu0 0.0
        %1964 = vmatprep.subr.mxu0 0.0
        %1965 = vmatpush1.xpose.msra.mxu0 0.0
        %1966 = vmatprep.subr.mxu0 0.0
        %1967 = vmatpush1.xpose.msra.mxu0 0.0
        %1968 = vmatprep.subr.mxu0 0.0
        %1969 = vmatpush1.xpose.msra.mxu0 0.0
        %1970 = vmatprep.subr.mxu0 0.0
        %1971 = vmatpush1.xpose.msra.mxu0 0.0
        %1972 = vmatprep.subr.mxu0 0.0
        %1973 = vmatpush1.xpose.msra.mxu0 0.0
        %1974 = vmatprep.subr.mxu0 0.0
        %1975 = vmatpush1.xpose.msra.mxu0 0.0
        %1976 = vmatprep.subr.mxu0 0.0
        %1977 = vmatpush1.xpose.msra.mxu0 0.0
        %1978 = vmatprep.subr.mxu0 0.0
        %1979 = vmatpush1.xpose.msra.mxu0 0.0
        %1980 = vmatprep.subr.mxu0 0.0
        %1981 = vmatpush1.xpose.msra.mxu0 0.0
        %1982 = vmatprep.subr.mxu0 0.0
        %1983 = vmatpush1.xpose.msra.mxu0 0.0
        %1984 = vmatprep.subr.mxu0 0.0
        %1985 = vmatpush1.xpose.msra.mxu0 0.0
        %1986 = vmatprep.subr.mxu0 0.0
        %1987 = vmatpush1.xpose.msra.mxu0 0.0
        %1988 = vmatprep.subr.mxu0 0.0
        %1989 = vmatpush1.xpose.msra.mxu0 0.0
        %1990 = vmatprep.subr.mxu0 0.0
        %1991 = vmatpush1.xpose.msra.mxu0 0.0
        %1992 = vmatprep.subr.mxu0 0.0
        %1993 = vmatpush1.xpose.msra.mxu0 0.0
        %1994 = vmatprep.subr.mxu0 0.0
        %1995 = vmatpush1.xpose.msra.mxu0 0.0
        %1996 = vmatprep.subr.mxu0 0.0
        %1997 = vmatpush1.xpose.msra.mxu0 0.0
        %1998 = vmatprep.subr.mxu0 0.0
        %1999 = vmatpush1.xpose.msra.mxu0 0.0
        %2000 = vmatprep.subr.mxu0 0.0
        %2001 = vmatpush1.xpose.msra.mxu0 0.0
        %2002 = vmatprep.mubr.f32.mxu0 0.0
        %2003 = vmatmul.mubr.f32.gmra.mrb[0].mxu0 %v1932
        %v2004 = vpop.f32.mrb[0].mxu0
        %v2005 = vadd.f32 0.0, %v2004
        %v2006 = vpop.f32.mrb[0].mxu0
        %2007 = vdwg.mxu0
        %v2008 = vsel %vm885, %v1839, 0
        %v2010 = vsel %vm885, %v1849, 0
        %v2012 = vsel %vm885, %v1851, 0
        %2014 = vmatprep.subr.mxu0 0.0
        %2015 = vmatpush1.xpose.msra.mxu0 %v2010
        %2016 = vmatprep.subr.mxu0 0.0
        %2017 = vmatpush1.xpose.msra.mxu0 %v2012
        %2018 = vmatprep.subr.mxu0 0.0
        %2019 = vmatpush1.xpose.msra.mxu0 0.0
        %2020 = vmatprep.subr.mxu0 0.0
        %2021 = vmatpush1.xpose.msra.mxu0 0.0
        %2022 = vmatprep.subr.mxu0 0.0
        %2023 = vmatpush1.xpose.msra.mxu0 0.0
        %2024 = vmatprep.subr.mxu0 0.0
        %2025 = vmatpush1.xpose.msra.mxu0 0.0
        %2026 = vmatprep.subr.mxu0 0.0
        %2027 = vmatpush1.xpose.msra.mxu0 0.0
        %2028 = vmatprep.subr.mxu0 0.0
        %2029 = vmatpush1.xpose.msra.mxu0 0.0
        %2030 = vmatprep.subr.mxu0 0.0
        %2031 = vmatpush1.xpose.msra.mxu0 0.0
        %2032 = vmatprep.subr.mxu0 0.0
        %2033 = vmatpush1.xpose.msra.mxu0 0.0
        %2034 = vmatprep.subr.mxu0 0.0
        %2035 = vmatpush1.xpose.msra.mxu0 0.0
        %2036 = vmatprep.subr.mxu0 0.0
        %2037 = vmatpush1.xpose.msra.mxu0 0.0
        %2038 = vmatprep.subr.mxu0 0.0
        %2039 = vmatpush1.xpose.msra.mxu0 0.0
        %2040 = vmatprep.subr.mxu0 0.0
        %2041 = vmatpush1.xpose.msra.mxu0 0.0
        %2042 = vmatprep.subr.mxu0 0.0
        %2043 = vmatpush1.xpose.msra.mxu0 0.0
        %2044 = vmatprep.subr.mxu0 0.0
        %2045 = vmatpush1.xpose.msra.mxu0 0.0
        %2046 = vmatprep.subr.mxu0 0.0
        %2047 = vmatpush1.xpose.msra.mxu0 0.0
        %2048 = vmatprep.subr.mxu0 0.0
        %2049 = vmatpush1.xpose.msra.mxu0 0.0
        %2050 = vmatprep.subr.mxu0 0.0
        %2051 = vmatpush1.xpose.msra.mxu0 0.0
        %2052 = vmatprep.subr.mxu0 0.0
        %2053 = vmatpush1.xpose.msra.mxu0 0.0
        %2054 = vmatprep.subr.mxu0 0.0
        %2055 = vmatpush1.xpose.msra.mxu0 0.0
        %2056 = vmatprep.subr.mxu0 0.0
        %2057 = vmatpush1.xpose.msra.mxu0 0.0
        %2058 = vmatprep.subr.mxu0 0.0
        %2059 = vmatpush1.xpose.msra.mxu0 0.0
        %2060 = vmatprep.subr.mxu0 0.0
        %2061 = vmatpush1.xpose.msra.mxu0 0.0
        %2062 = vmatprep.subr.mxu0 0.0
        %2063 = vmatpush1.xpose.msra.mxu0 0.0
        %2064 = vmatprep.subr.mxu0 0.0
        %2065 = vmatpush1.xpose.msra.mxu0 0.0
        %2066 = vmatprep.subr.mxu0 0.0
        %2067 = vmatpush1.xpose.msra.mxu0 0.0
        %2068 = vmatprep.subr.mxu0 0.0
        %2069 = vmatpush1.xpose.msra.mxu0 0.0
        %2070 = vmatprep.subr.mxu0 0.0
        %2071 = vmatpush1.xpose.msra.mxu0 0.0
        %2072 = vmatprep.subr.mxu0 0.0
        %2073 = vmatpush1.xpose.msra.mxu0 0.0
        %2074 = vmatprep.subr.mxu0 0.0
        %2075 = vmatpush1.xpose.msra.mxu0 0.0
        %2076 = vmatprep.subr.mxu0 0.0
        %2077 = vmatpush1.xpose.msra.mxu0 0.0
        %2078 = vmatprep.mubr.f32.mxu0 0.0
        %2079 = vmatmul.mubr.f32.gmra.mrb[0].mxu0 %v2008
        %v2080 = vpop.f32.mrb[0].mxu0
        %v2081 = vadd.f32 0.0, %v2080
        %v2082 = vpop.f32.mrb[0].mxu0
        %2083 = vdwg.mxu0
        %v2084 = vsel %vm885, %v1841, 0
        %v2086 = vsel %vm885, %v1853, 0
        %v2088 = vsel %vm885, %v1855, 0
        %2090 = vmatprep.subr.mxu0 0.0
        %2091 = vmatpush1.xpose.msra.mxu0 %v2086
        %2092 = vmatprep.subr.mxu0 0.0
        %2093 = vmatpush1.xpose.msra.mxu0 %v2088
        %2094 = vmatprep.subr.mxu0 0.0
        %2095 = vmatpush1.xpose.msra.mxu0 0.0
        %2096 = vmatprep.subr.mxu0 0.0
        %2097 = vmatpush1.xpose.msra.mxu0 0.0
        %2098 = vmatprep.subr.mxu0 0.0
        %2099 = vmatpush1.xpose.msra.mxu0 0.0
        %2100 = vmatprep.subr.mxu0 0.0
        %2101 = vmatpush1.xpose.msra.mxu0 0.0
        %2102 = vmatprep.subr.mxu0 0.0
        %2103 = vmatpush1.xpose.msra.mxu0 0.0
        %2104 = vmatprep.subr.mxu0 0.0
        %2105 = vmatpush1.xpose.msra.mxu0 0.0
        %2106 = vmatprep.subr.mxu0 0.0
        %2107 = vmatpush1.xpose.msra.mxu0 0.0
        %2108 = vmatprep.subr.mxu0 0.0
        %2109 = vmatpush1.xpose.msra.mxu0 0.0
        %2110 = vmatprep.subr.mxu0 0.0
        %2111 = vmatpush1.xpose.msra.mxu0 0.0
        %2112 = vmatprep.subr.mxu0 0.0
        %2113 = vmatpush1.xpose.msra.mxu0 0.0
        %2114 = vmatprep.subr.mxu0 0.0
        %2115 = vmatpush1.xpose.msra.mxu0 0.0
        %2116 = vmatprep.subr.mxu0 0.0
        %2117 = vmatpush1.xpose.msra.mxu0 0.0
        %2118 = vmatprep.subr.mxu0 0.0
        %2119 = vmatpush1.xpose.msra.mxu0 0.0
        %2120 = vmatprep.subr.mxu0 0.0
        %2121 = vmatpush1.xpose.msra.mxu0 0.0
        %2122 = vmatprep.subr.mxu0 0.0
        %2123 = vmatpush1.xpose.msra.mxu0 0.0
        %2124 = vmatprep.subr.mxu0 0.0
        %2125 = vmatpush1.xpose.msra.mxu0 0.0
        %2126 = vmatprep.subr.mxu0 0.0
        %2127 = vmatpush1.xpose.msra.mxu0 0.0
        %2128 = vmatprep.subr.mxu0 0.0
        %2129 = vmatpush1.xpose.msra.mxu0 0.0
        %2130 = vmatprep.subr.mxu0 0.0
        %2131 = vmatpush1.xpose.msra.mxu0 0.0
        %2132 = vmatprep.subr.mxu0 0.0
        %2133 = vmatpush1.xpose.msra.mxu0 0.0
        %2134 = vmatprep.subr.mxu0 0.0
        %2135 = vmatpush1.xpose.msra.mxu0 0.0
        %2136 = vmatprep.subr.mxu0 0.0
        %2137 = vmatpush1.xpose.msra.mxu0 0.0
        %2138 = vmatprep.subr.mxu0 0.0
        %2139 = vmatpush1.xpose.msra.mxu0 0.0
        %2140 = vmatprep.subr.mxu0 0.0
        %2141 = vmatpush1.xpose.msra.mxu0 0.0
        %2142 = vmatprep.subr.mxu0 0.0
        %2143 = vmatpush1.xpose.msra.mxu0 0.0
        %2144 = vmatprep.subr.mxu0 0.0
        %2145 = vmatpush1.xpose.msra.mxu0 0.0
        %2146 = vmatprep.subr.mxu0 0.0
        %2147 = vmatpush1.xpose.msra.mxu0 0.0
        %2148 = vmatprep.subr.mxu0 0.0
        %2149 = vmatpush1.xpose.msra.mxu0 0.0
        %2150 = vmatprep.subr.mxu0 0.0
        %2151 = vmatpush1.xpose.msra.mxu0 0.0
        %2152 = vmatprep.subr.mxu0 0.0
        %2153 = vmatpush1.xpose.msra.mxu0 0.0
        %2154 = vmatprep.mubr.f32.mxu0 0.0
        %2155 = vmatmul.mubr.f32.gmra.mrb[0].mxu0 %v2084
        %v2156 = vpop.f32.mrb[0].mxu0
        %v2157 = vadd.f32 0.0, %v2156
        %v2158 = vpop.f32.mrb[0].mxu0
        %2159 = vdwg.mxu0
        %v2160 = vld [vmem:[%s685] sm:$0xff]
        %vm2161 = vcmp.gt.f32.partialorder %v2160, 0.5
        %v2162 = vsel %vm2161, 1, 0
        %vm2163 = vcmp.eq.s32.totalorder %v2162, 1
        %v2164 = vsel %vm2163, -1e+09, %v1929
        %v2165 = vsel %vm2163, -1e+09, %v2005
        %v2166 = vsel %vm2163, -1e+09, %v2081
        %v2167 = vsel %vm2163, -1e+09, %v2157
        %v2168 = vsel %vm1561, %v2164, -inf
        %2169 = vmax.xlane.f32.xlu0 %v2168
        %v2170 = vpop.xlane.xlu0 %2169
        %v2171 = vsel %vm1561, %v2165, -inf
        %2172 = vmax.xlane.f32.xlu0 %v2171
        %v2173 = vpop.xlane.xlu0 %2172
        %v2174 = vsel %vm1561, %v2166, -inf
        %2175 = vmax.xlane.f32.xlu0 %v2174
        %v2176 = vpop.xlane.xlu0 %2175
        %v2177 = vsel %vm1561, %v2167, -inf
        %2178 = vmax.xlane.f32.xlu0 %v2177
        %v2179 = vpop.xlane.xlu0 %2178
        %v2180 = vsub.f32 %v2164, %v2170
        %v2181 = vsub.f32 %v2165, %v2173
        %v2182 = vsub.f32 %v2166, %v2176
        %v2183 = vsub.f32 %v2167, %v2179
        %v2184 = vmul.f32 %v2180, 1.442695
        %v2185 = vpow.pop %v2184
        %v2186 = vmul.f32 %v2181, 1.442695
        %v2187 = vpow.pop %v2186
        %v2188 = vmul.f32 %v2182, 1.442695
        %v2189 = vpow.pop %v2188
        %v2190 = vmul.f32 %v2183, 1.442695
        %v2191 = vpow.pop %v2190
        %v2192 = vsel %vm1561, %v2185, 0.0
        %2193 = vadd.xlane.f32.xlu0 %v2192
        %v2194 = vpop.xlane.xlu0 %2193
        %v2195 = vsel %vm1561, %v2187, 0.0
        %2196 = vadd.xlane.f32.xlu0 %v2195
        %v2197 = vpop.xlane.xlu0 %2196
        %v2198 = vsel %vm1561, %v2189, 0.0
        %2199 = vadd.xlane.f32.xlu0 %v2198
        %v2200 = vpop.xlane.xlu0 %2199
        %v2201 = vsel %vm1561, %v2191, 0.0
        %2202 = vadd.xlane.f32.xlu0 %v2201
        %v2203 = vpop.xlane.xlu0 %2202
        %v2204 = vrcp.pop %v2194
        %v2205 = vmul.f32 %v2185, %v2204
        %v2206 = vrcp.pop %v2197
        %v2207 = vmul.f32 %v2187, %v2206
        %v2208 = vrcp.pop %v2200
        %v2209 = vmul.f32 %v2189, %v2208
        %v2210 = vrcp.pop %v2203
        %v2211 = vmul.f32 %v2191, %v2210
        %2212 = vst.msk [vmem:[%s780] sm:$0xff] %vm1561, %v2205
        %2213 = vst.msk [vmem:[%s780 + $0x8] sm:$0xff] %vm1561, %v2207
        %2214 = vst.msk [vmem:[%s780 + $0x10] sm:$0xff] %vm1561, %v2209
        %2215 = vst.msk [vmem:[%s780 + $0x18] sm:$0xff] %vm1561, %v2211
        %2216 = vrot.lane.b32.xlu0 %v1827, 96
        %v2217 = vpop.permute.xlu0 %2216
        %2218 = vrot.lane.b32.xlu0 %v1832, 96
        %v2219 = vpop.permute.xlu0 %2218
        %v2223 = vsel %vm1561, %v2205, 0
        %2225 = vmatprep.subr.mxu0 0.0
        %2226 = vmatpush1.msra.mxu0 %v2217
        %2227 = vmatprep.subr.mxu0 0.0
        %2228 = vmatpush1.msra.mxu0 %v2219
        %2229 = vmatprep.subr.mxu0 0.0
        %2230 = vmatpush1.msra.mxu0 0.0
        %2231 = vmatprep.subr.mxu0 0.0
        %2232 = vmatpush1.msra.mxu0 0.0
        %2233 = vmatprep.subr.mxu0 0.0
        %2234 = vmatpush1.msra.mxu0 0.0
        %2235 = vmatprep.subr.mxu0 0.0
        %2236 = vmatpush1.msra.mxu0 0.0
        %2237 = vmatprep.subr.mxu0 0.0
        %2238 = vmatpush1.msra.mxu0 0.0
        %2239 = vmatprep.subr.mxu0 0.0
        %2240 = vmatpush1.msra.mxu0 0.0
        %2241 = vmatprep.subr.mxu0 0.0
        %2242 = vmatpush1.msra.mxu0 0.0
        %2243 = vmatprep.subr.mxu0 0.0
        %2244 = vmatpush1.msra.mxu0 0.0
        %2245 = vmatprep.subr.mxu0 0.0
        %2246 = vmatpush1.msra.mxu0 0.0
        %2247 = vmatprep.subr.mxu0 0.0
        %2248 = vmatpush1.msra.mxu0 0.0
        %2249 = vmatprep.subr.mxu0 0.0
        %2250 = vmatpush1.msra.mxu0 0.0
        %2251 = vmatprep.subr.mxu0 0.0
        %2252 = vmatpush1.msra.mxu0 0.0
        %2253 = vmatprep.subr.mxu0 0.0
        %2254 = vmatpush1.msra.mxu0 0.0
        %2255 = vmatprep.subr.mxu0 0.0
        %2256 = vmatpush1.msra.mxu0 0.0
        %2257 = vmatprep.subr.mxu0 0.0
        %2258 = vmatpush1.msra.mxu0 0.0
        %2259 = vmatprep.subr.mxu0 0.0
        %2260 = vmatpush1.msra.mxu0 0.0
        %2261 = vmatprep.subr.mxu0 0.0
        %2262 = vmatpush1.msra.mxu0 0.0
        %2263 = vmatprep.subr.mxu0 0.0
        %2264 = vmatpush1.msra.mxu0 0.0
        %2265 = vmatprep.subr.mxu0 0.0
        %2266 = vmatpush1.msra.mxu0 0.0
        %2267 = vmatprep.subr.mxu0 0.0
        %2268 = vmatpush1.msra.mxu0 0.0
        %2269 = vmatprep.subr.mxu0 0.0
        %2270 = vmatpush1.msra.mxu0 0.0
        %2271 = vmatprep.subr.mxu0 0.0
        %2272 = vmatpush1.msra.mxu0 0.0
        %2273 = vmatprep.subr.mxu0 0.0
        %2274 = vmatpush1.msra.mxu0 0.0
        %2275 = vmatprep.subr.mxu0 0.0
        %2276 = vmatpush1.msra.mxu0 0.0
        %2277 = vmatprep.subr.mxu0 0.0
        %2278 = vmatpush1.msra.mxu0 0.0
        %2279 = vmatprep.subr.mxu0 0.0
        %2280 = vmatpush1.msra.mxu0 0.0
        %2281 = vmatprep.subr.mxu0 0.0
        %2282 = vmatpush1.msra.mxu0 0.0
        %2283 = vmatprep.subr.mxu0 0.0
        %2284 = vmatpush1.msra.mxu0 0.0
        %2285 = vmatprep.subr.mxu0 0.0
        %2286 = vmatpush1.msra.mxu0 0.0
        %2287 = vmatprep.subr.mxu0 0.0
        %2288 = vmatpush1.msra.mxu0 0.0
        %2289 = vmatprep.mubr.f32.mxu0 0.0
        %2290 = vmatmul.mubr.f32.gmra.mrb[0].mxu0 %v2223
        %v2291 = vpop.f32.mrb[0].mxu0
        %v2292 = vadd.f32 0.0, %v2291
        %v2293 = vpop.f32.mrb[0].mxu0
        %2294 = vdwg.mxu0
        %2295 = vrot.lane.b32.xlu0 %v1845, 96
        %v2296 = vpop.permute.xlu0 %2295
        %2297 = vrot.lane.b32.xlu0 %v1847, 96
        %v2298 = vpop.permute.xlu0 %2297
        %v2302 = vsel %vm1561, %v2207, 0
        %2304 = vmatprep.subr.mxu0 0.0
        %2305 = vmatpush1.msra.mxu0 %v2296
        %2306 = vmatprep.subr.mxu0 0.0
        %2307 = vmatpush1.msra.mxu0 %v2298
        %2308 = vmatprep.subr.mxu0 0.0
        %2309 = vmatpush1.msra.mxu0 0.0
        %2310 = vmatprep.subr.mxu0 0.0
        %2311 = vmatpush1.msra.mxu0 0.0
        %2312 = vmatprep.subr.mxu0 0.0
        %2313 = vmatpush1.msra.mxu0 0.0
        %2314 = vmatprep.subr.mxu0 0.0
        %2315 = vmatpush1.msra.mxu0 0.0
        %2316 = vmatprep.subr.mxu0 0.0
        %2317 = vmatpush1.msra.mxu0 0.0
        %2318 = vmatprep.subr.mxu0 0.0
        %2319 = vmatpush1.msra.mxu0 0.0
        %2320 = vmatprep.subr.mxu0 0.0
        %2321 = vmatpush1.msra.mxu0 0.0
        %2322 = vmatprep.subr.mxu0 0.0
        %2323 = vmatpush1.msra.mxu0 0.0
        %2324 = vmatprep.subr.mxu0 0.0
        %2325 = vmatpush1.msra.mxu0 0.0
        %2326 = vmatprep.subr.mxu0 0.0
        %2327 = vmatpush1.msra.mxu0 0.0
        %2328 = vmatprep.subr.mxu0 0.0
        %2329 = vmatpush1.msra.mxu0 0.0
        %2330 = vmatprep.subr.mxu0 0.0
        %2331 = vmatpush1.msra.mxu0 0.0
        %2332 = vmatprep.subr.mxu0 0.0
        %2333 = vmatpush1.msra.mxu0 0.0
        %2334 = vmatprep.subr.mxu0 0.0
        %2335 = vmatpush1.msra.mxu0 0.0
        %2336 = vmatprep.subr.mxu0 0.0
        %2337 = vmatpush1.msra.mxu0 0.0
        %2338 = vmatprep.subr.mxu0 0.0
        %2339 = vmatpush1.msra.mxu0 0.0
        %2340 = vmatprep.subr.mxu0 0.0
        %2341 = vmatpush1.msra.mxu0 0.0
        %2342 = vmatprep.subr.mxu0 0.0
        %2343 = vmatpush1.msra.mxu0 0.0
        %2344 = vmatprep.subr.mxu0 0.0
        %2345 = vmatpush1.msra.mxu0 0.0
        %2346 = vmatprep.subr.mxu0 0.0
        %2347 = vmatpush1.msra.mxu0 0.0
        %2348 = vmatprep.subr.mxu0 0.0
        %2349 = vmatpush1.msra.mxu0 0.0
        %2350 = vmatprep.subr.mxu0 0.0
        %2351 = vmatpush1.msra.mxu0 0.0
        %2352 = vmatprep.subr.mxu0 0.0
        %2353 = vmatpush1.msra.mxu0 0.0
        %2354 = vmatprep.subr.mxu0 0.0
        %2355 = vmatpush1.msra.mxu0 0.0
        %2356 = vmatprep.subr.mxu0 0.0
        %2357 = vmatpush1.msra.mxu0 0.0
        %2358 = vmatprep.subr.mxu0 0.0
        %2359 = vmatpush1.msra.mxu0 0.0
        %2360 = vmatprep.subr.mxu0 0.0
        %2361 = vmatpush1.msra.mxu0 0.0
        %2362 = vmatprep.subr.mxu0 0.0
        %2363 = vmatpush1.msra.mxu0 0.0
        %2364 = vmatprep.subr.mxu0 0.0
        %2365 = vmatpush1.msra.mxu0 0.0
        %2366 = vmatprep.subr.mxu0 0.0
        %2367 = vmatpush1.msra.mxu0 0.0
        %2368 = vmatprep.mubr.f32.mxu0 0.0
        %2369 = vmatmul.mubr.f32.gmra.mrb[0].mxu0 %v2302
        %v2370 = vpop.f32.mrb[0].mxu0
        %v2371 = vadd.f32 0.0, %v2370
        %v2372 = vpop.f32.mrb[0].mxu0
        %2373 = vdwg.mxu0
        %2374 = vrot.lane.b32.xlu0 %v1849, 96
        %v2375 = vpop.permute.xlu0 %2374
        %2376 = vrot.lane.b32.xlu0 %v1851, 96
        %v2377 = vpop.permute.xlu0 %2376
        %v2381 = vsel %vm1561, %v2209, 0
        %2383 = vmatprep.subr.mxu0 0.0
        %2384 = vmatpush1.msra.mxu0 %v2375
        %2385 = vmatprep.subr.mxu0 0.0
        %2386 = vmatpush1.msra.mxu0 %v2377
        %2387 = vmatprep.subr.mxu0 0.0
        %2388 = vmatpush1.msra.mxu0 0.0
        %2389 = vmatprep.subr.mxu0 0.0
        %2390 = vmatpush1.msra.mxu0 0.0
        %2391 = vmatprep.subr.mxu0 0.0
        %2392 = vmatpush1.msra.mxu0 0.0
        %2393 = vmatprep.subr.mxu0 0.0
        %2394 = vmatpush1.msra.mxu0 0.0
        %2395 = vmatprep.subr.mxu0 0.0
        %2396 = vmatpush1.msra.mxu0 0.0
        %2397 = vmatprep.subr.mxu0 0.0
        %2398 = vmatpush1.msra.mxu0 0.0
        %2399 = vmatprep.subr.mxu0 0.0
        %2400 = vmatpush1.msra.mxu0 0.0
        %2401 = vmatprep.subr.mxu0 0.0
        %2402 = vmatpush1.msra.mxu0 0.0
        %2403 = vmatprep.subr.mxu0 0.0
        %2404 = vmatpush1.msra.mxu0 0.0
        %2405 = vmatprep.subr.mxu0 0.0
        %2406 = vmatpush1.msra.mxu0 0.0
        %2407 = vmatprep.subr.mxu0 0.0
        %2408 = vmatpush1.msra.mxu0 0.0
        %2409 = vmatprep.subr.mxu0 0.0
        %2410 = vmatpush1.msra.mxu0 0.0
        %2411 = vmatprep.subr.mxu0 0.0
        %2412 = vmatpush1.msra.mxu0 0.0
        %2413 = vmatprep.subr.mxu0 0.0
        %2414 = vmatpush1.msra.mxu0 0.0
        %2415 = vmatprep.subr.mxu0 0.0
        %2416 = vmatpush1.msra.mxu0 0.0
        %2417 = vmatprep.subr.mxu0 0.0
        %2418 = vmatpush1.msra.mxu0 0.0
        %2419 = vmatprep.subr.mxu0 0.0
        %2420 = vmatpush1.msra.mxu0 0.0
        %2421 = vmatprep.subr.mxu0 0.0
        %2422 = vmatpush1.msra.mxu0 0.0
        %2423 = vmatprep.subr.mxu0 0.0
        %2424 = vmatpush1.msra.mxu0 0.0
        %2425 = vmatprep.subr.mxu0 0.0
        %2426 = vmatpush1.msra.mxu0 0.0
        %2427 = vmatprep.subr.mxu0 0.0
        %2428 = vmatpush1.msra.mxu0 0.0
        %2429 = vmatprep.subr.mxu0 0.0
        %2430 = vmatpush1.msra.mxu0 0.0
        %2431 = vmatprep.subr.mxu0 0.0
        %2432 = vmatpush1.msra.mxu0 0.0
        %2433 = vmatprep.subr.mxu0 0.0
        %2434 = vmatpush1.msra.mxu0 0.0
        %2435 = vmatprep.subr.mxu0 0.0
        %2436 = vmatpush1.msra.mxu0 0.0
        %2437 = vmatprep.subr.mxu0 0.0
        %2438 = vmatpush1.msra.mxu0 0.0
        %2439 = vmatprep.subr.mxu0 0.0
        %2440 = vmatpush1.msra.mxu0 0.0
        %2441 = vmatprep.subr.mxu0 0.0
        %2442 = vmatpush1.msra.mxu0 0.0
        %2443 = vmatprep.subr.mxu0 0.0
        %2444 = vmatpush1.msra.mxu0 0.0
        %2445 = vmatprep.subr.mxu0 0.0
        %2446 = vmatpush1.msra.mxu0 0.0
        %2447 = vmatprep.mubr.f32.mxu0 0.0
        %2448 = vmatmul.mubr.f32.gmra.mrb[0].mxu0 %v2381
        %v2449 = vpop.f32.mrb[0].mxu0
        %v2450 = vadd.f32 0.0, %v2449
        %v2451 = vpop.f32.mrb[0].mxu0
        %2452 = vdwg.mxu0
        %2453 = vrot.lane.b32.xlu0 %v1853, 96
        %v2454 = vpop.permute.xlu0 %2453
        %2455 = vrot.lane.b32.xlu0 %v1855, 96
        %v2456 = vpop.permute.xlu0 %2455
        %v2460 = vsel %vm1561, %v2211, 0
        %2462 = vmatprep.subr.mxu0 0.0
        %2463 = vmatpush1.msra.mxu0 %v2454
        %2464 = vmatprep.subr.mxu0 0.0
        %2465 = vmatpush1.msra.mxu0 %v2456
        %2466 = vmatprep.subr.mxu0 0.0
        %2467 = vmatpush1.msra.mxu0 0.0
        %2468 = vmatprep.subr.mxu0 0.0
        %2469 = vmatpush1.msra.mxu0 0.0
        %2470 = vmatprep.subr.mxu0 0.0
        %2471 = vmatpush1.msra.mxu0 0.0
        %2472 = vmatprep.subr.mxu0 0.0
        %2473 = vmatpush1.msra.mxu0 0.0
        %2474 = vmatprep.subr.mxu0 0.0
        %2475 = vmatpush1.msra.mxu0 0.0
        %2476 = vmatprep.subr.mxu0 0.0
        %2477 = vmatpush1.msra.mxu0 0.0
        %2478 = vmatprep.subr.mxu0 0.0
        %2479 = vmatpush1.msra.mxu0 0.0
        %2480 = vmatprep.subr.mxu0 0.0
        %2481 = vmatpush1.msra.mxu0 0.0
        %2482 = vmatprep.subr.mxu0 0.0
        %2483 = vmatpush1.msra.mxu0 0.0
        %2484 = vmatprep.subr.mxu0 0.0
        %2485 = vmatpush1.msra.mxu0 0.0
        %2486 = vmatprep.subr.mxu0 0.0
        %2487 = vmatpush1.msra.mxu0 0.0
        %2488 = vmatprep.subr.mxu0 0.0
        %2489 = vmatpush1.msra.mxu0 0.0
        %2490 = vmatprep.subr.mxu0 0.0
        %2491 = vmatpush1.msra.mxu0 0.0
        %2492 = vmatprep.subr.mxu0 0.0
        %2493 = vmatpush1.msra.mxu0 0.0
        %2494 = vmatprep.subr.mxu0 0.0
        %2495 = vmatpush1.msra.mxu0 0.0
        %2496 = vmatprep.subr.mxu0 0.0
        %2497 = vmatpush1.msra.mxu0 0.0
        %2498 = vmatprep.subr.mxu0 0.0
        %2499 = vmatpush1.msra.mxu0 0.0
        %2500 = vmatprep.subr.mxu0 0.0
        %2501 = vmatpush1.msra.mxu0 0.0
        %2502 = vmatprep.subr.mxu0 0.0
        %2503 = vmatpush1.msra.mxu0 0.0
        %2504 = vmatprep.subr.mxu0 0.0
        %2505 = vmatpush1.msra.mxu0 0.0
        %2506 = vmatprep.subr.mxu0 0.0
        %2507 = vmatpush1.msra.mxu0 0.0
        %2508 = vmatprep.subr.mxu0 0.0
        %2509 = vmatpush1.msra.mxu0 0.0
        %2510 = vmatprep.subr.mxu0 0.0
        %2511 = vmatpush1.msra.mxu0 0.0
        %2512 = vmatprep.subr.mxu0 0.0
        %2513 = vmatpush1.msra.mxu0 0.0
        %2514 = vmatprep.subr.mxu0 0.0
        %2515 = vmatpush1.msra.mxu0 0.0
        %2516 = vmatprep.subr.mxu0 0.0
        %2517 = vmatpush1.msra.mxu0 0.0
        %2518 = vmatprep.subr.mxu0 0.0
        %2519 = vmatpush1.msra.mxu0 0.0
        %2520 = vmatprep.subr.mxu0 0.0
        %2521 = vmatpush1.msra.mxu0 0.0
        %2522 = vmatprep.subr.mxu0 0.0
        %2523 = vmatpush1.msra.mxu0 0.0
        %2524 = vmatprep.subr.mxu0 0.0
        %2525 = vmatpush1.msra.mxu0 0.0
        %2526 = vmatprep.mubr.f32.mxu0 0.0
        %2527 = vmatmul.mubr.f32.gmra.mrb[0].mxu0 %v2460
        %v2528 = vpop.f32.mrb[0].mxu0
        %v2529 = vadd.f32 0.0, %v2528
        %v2530 = vpop.f32.mrb[0].mxu0
        %2531 = vdwg.mxu0
        %2533 = vrot.lane.b32.xlu0 %v2371, 8
        %v2534 = vpop.permute.xlu0 %2533
        %2537 = vrot.lane.b32.xlu0 %v2450, 16
        %v2538 = vpop.permute.xlu0 %2537
        %2541 = vrot.lane.b32.xlu0 %v2529, 24
        %v2542 = vpop.permute.xlu0 %2541
        %v2544 = vsel %vm885, %v2292, %v2534
        %v2545 = vsel %vm1561, %v2544, %v2538
        %v2546 = vsel %vm1563, %v2545, %v2542
        %v2547 = vld [vmem:[#allocation11] sm:$0xff]
        %v2548 = vld [vmem:[#allocation11 + $0x8] sm:$0xff]
        %v2549 = vld [vmem:[#allocation11 + $0x10] sm:$0xff]
        %v2550 = vld [vmem:[#allocation11 + $0x18] sm:$0xff]
        %v2552 = vsel %vm794, %v2546, 0
        %2554 = vmatprep.subr.mxu0 0.0
        %2555 = vmatpush1.msra.mxu0 %v2547
        %2556 = vmatprep.subr.mxu0 0.0
        %2557 = vmatpush1.msra.mxu0 %v2548
        %2558 = vmatprep.subr.mxu0 0.0
        %2559 = vmatpush1.msra.mxu0 %v2549
        %2560 = vmatprep.subr.mxu0 0.0
        %2561 = vmatpush1.msra.mxu0 %v2550
        %2562 = vmatprep.subr.mxu0 0.0
        %2563 = vmatpush1.msra.mxu0 0.0
        %2564 = vmatprep.subr.mxu0 0.0
        %2565 = vmatpush1.msra.mxu0 0.0
        %2566 = vmatprep.subr.mxu0 0.0
        %2567 = vmatpush1.msra.mxu0 0.0
        %2568 = vmatprep.subr.mxu0 0.0
        %2569 = vmatpush1.msra.mxu0 0.0
        %2570 = vmatprep.subr.mxu0 0.0
        %2571 = vmatpush1.msra.mxu0 0.0
        %2572 = vmatprep.subr.mxu0 0.0
        %2573 = vmatpush1.msra.mxu0 0.0
        %2574 = vmatprep.subr.mxu0 0.0
        %2575 = vmatpush1.msra.mxu0 0.0
        %2576 = vmatprep.subr.mxu0 0.0
        %2577 = vmatpush1.msra.mxu0 0.0
        %2578 = vmatprep.subr.mxu0 0.0
        %2579 = vmatpush1.msra.mxu0 0.0
        %2580 = vmatprep.subr.mxu0 0.0
        %2581 = vmatpush1.msra.mxu0 0.0
        %2582 = vmatprep.subr.mxu0 0.0
        %2583 = vmatpush1.msra.mxu0 0.0
        %2584 = vmatprep.subr.mxu0 0.0
        %2585 = vmatpush1.msra.mxu0 0.0
        %2586 = vmatprep.subr.mxu0 0.0
        %2587 = vmatpush1.msra.mxu0 0.0
        %2588 = vmatprep.subr.mxu0 0.0
        %2589 = vmatpush1.msra.mxu0 0.0
        %2590 = vmatprep.subr.mxu0 0.0
        %2591 = vmatpush1.msra.mxu0 0.0
        %2592 = vmatprep.subr.mxu0 0.0
        %2593 = vmatpush1.msra.mxu0 0.0
        %2594 = vmatprep.subr.mxu0 0.0
        %2595 = vmatpush1.msra.mxu0 0.0
        %2596 = vmatprep.subr.mxu0 0.0
        %2597 = vmatpush1.msra.mxu0 0.0
        %2598 = vmatprep.subr.mxu0 0.0
        %2599 = vmatpush1.msra.mxu0 0.0
        %2600 = vmatprep.subr.mxu0 0.0
        %2601 = vmatpush1.msra.mxu0 0.0
        %2602 = vmatprep.subr.mxu0 0.0
        %2603 = vmatpush1.msra.mxu0 0.0
        %2604 = vmatprep.subr.mxu0 0.0
        %2605 = vmatpush1.msra.mxu0 0.0
        %2606 = vmatprep.subr.mxu0 0.0
        %2607 = vmatpush1.msra.mxu0 0.0
        %2608 = vmatprep.subr.mxu0 0.0
        %2609 = vmatpush1.msra.mxu0 0.0
        %2610 = vmatprep.subr.mxu0 0.0
        %2611 = vmatpush1.msra.mxu0 0.0
        %2612 = vmatprep.subr.mxu0 0.0
        %2613 = vmatpush1.msra.mxu0 0.0
        %2614 = vmatprep.subr.mxu0 0.0
        %2615 = vmatpush1.msra.mxu0 0.0
        %2616 = vmatprep.subr.mxu0 0.0
        %2617 = vmatpush1.msra.mxu0 0.0
        %2618 = vmatprep.mubr.f32.mxu0 0.0
        %2619 = vmatmul.mubr.f32.gmra.mrb[0].mxu0 %v2552
        %v2620 = vpop.f32.mrb[0].mxu0
        %v2621 = vadd.f32 %v1671, %v2620
        %v2622 = vpop.f32.mrb[0].mxu0
        %2623 = vdwg.mxu0
        %v2624 = vsel %vm794, %v2621, 0.0
        %2625 = vadd.xlane.f32.xlu0 %v2624
        %v2626 = vpop.xlane.xlu0 %2625
        %v2627 = vmul.f32 %v2626, %v1645
        %v2628 = vsub.f32 %v2621, %v2627
        %v2629 = vmul.f32 %v2628, %v2628
        %v2630 = vsel %vm794, %v2629, 0.0
        %2631 = vadd.xlane.f32.xlu0 %v2630
        %v2632 = vpop.xlane.xlu0 %2631
        %v2633 = vmul.f32 %v2632, %v1645
        %v2634 = vadd.f32 %v2633, 1e-05
        %v2635 = vrsqrt.pop %v2634
        %v2636 = vmul.f32 %v2628, %v2635
        %v2637 = vld [vmem:[%s11] sm:$0x1]
        %v2639 = vlaneseq
        %v2640 = vshrl.u32 %v2639, 7
        %v2641 = vsub.s32 0, %v2640
        %v2642 = vrot.slane %v2637, %v2641
        %v2644 = vmul.f32 %v2636, %v2642
        %v2645 = vld [vmem:[%s12] sm:$0x1]
        %v2647 = vlaneseq
        %v2648 = vshrl.u32 %v2647, 7
        %v2649 = vsub.s32 0, %v2648
        %v2650 = vrot.slane %v2645, %v2649
        %v2652 = vadd.f32 %v2644, %v2650
        %v2653 = vld [vmem:[#allocation13] sm:$0xff]
        %v2654 = vld [vmem:[#allocation13 + $0x8] sm:$0xff]
        %v2655 = vld [vmem:[#allocation13 + $0x10] sm:$0xff]
        %v2656 = vld [vmem:[#allocation13 + $0x18] sm:$0xff]
        %v2658 = vsel %vm794, %v2652, 0
        %2660 = vmatprep.subr.mxu0 0.0
        %2661 = vmatpush1.msra.mxu0 %v2653
        %2662 = vmatprep.subr.mxu0 0.0
        %2663 = vmatpush1.msra.mxu0 %v2654
        %2664 = vmatprep.subr.mxu0 0.0
        %2665 = vmatpush1.msra.mxu0 %v2655
        %2666 = vmatprep.subr.mxu0 0.0
        %2667 = vmatpush1.msra.mxu0 %v2656
        %2668 = vmatprep.subr.mxu0 0.0
        %2669 = vmatpush1.msra.mxu0 0.0
        %2670 = vmatprep.subr.mxu0 0.0
        %2671 = vmatpush1.msra.mxu0 0.0
        %2672 = vmatprep.subr.mxu0 0.0
        %2673 = vmatpush1.msra.mxu0 0.0
        %2674 = vmatprep.subr.mxu0 0.0
        %2675 = vmatpush1.msra.mxu0 0.0
        %2676 = vmatprep.subr.mxu0 0.0
        %2677 = vmatpush1.msra.mxu0 0.0
        %2678 = vmatprep.subr.mxu0 0.0
        %2679 = vmatpush1.msra.mxu0 0.0
        %2680 = vmatprep.subr.mxu0 0.0
        %2681 = vmatpush1.msra.mxu0 0.0
        %2682 = vmatprep.subr.mxu0 0.0
        %2683 = vmatpush1.msra.mxu0 0.0
        %2684 = vmatprep.subr.mxu0 0.0
        %2685 = vmatpush1.msra.mxu0 0.0
        %2686 = vmatprep.subr.mxu0 0.0
        %2687 = vmatpush1.msra.mxu0 0.0
        %2688 = vmatprep.subr.mxu0 0.0
        %2689 = vmatpush1.msra.mxu0 0.0
        %2690 = vmatprep.subr.mxu0 0.0
        %2691 = vmatpush1.msra.mxu0 0.0
        %2692 = vmatprep.subr.mxu0 0.0
        %2693 = vmatpush1.msra.mxu0 0.0
        %2694 = vmatprep.subr.mxu0 0.0
        %2695 = vmatpush1.msra.mxu0 0.0
        %2696 = vmatprep.subr.mxu0 0.0
        %2697 = vmatpush1.msra.mxu0 0.0
        %2698 = vmatprep.subr.mxu0 0.0
        %2699 = vmatpush1.msra.mxu0 0.0
        %2700 = vmatprep.subr.mxu0 0.0
        %2701 = vmatpush1.msra.mxu0 0.0
        %2702 = vmatprep.subr.mxu0 0.0
        %2703 = vmatpush1.msra.mxu0 0.0
        %2704 = vmatprep.subr.mxu0 0.0
        %2705 = vmatpush1.msra.mxu0 0.0
        %2706 = vmatprep.subr.mxu0 0.0
        %2707 = vmatpush1.msra.mxu0 0.0
        %2708 = vmatprep.subr.mxu0 0.0
        %2709 = vmatpush1.msra.mxu0 0.0
        %2710 = vmatprep.subr.mxu0 0.0
        %2711 = vmatpush1.msra.mxu0 0.0
        %2712 = vmatprep.subr.mxu0 0.0
        %2713 = vmatpush1.msra.mxu0 0.0
        %2714 = vmatprep.subr.mxu0 0.0
        %2715 = vmatpush1.msra.mxu0 0.0
        %2716 = vmatprep.subr.mxu0 0.0
        %2717 = vmatpush1.msra.mxu0 0.0
        %2718 = vmatprep.subr.mxu0 0.0
        %2719 = vmatpush1.msra.mxu0 0.0
        %2720 = vmatprep.subr.mxu0 0.0
        %2721 = vmatpush1.msra.mxu0 0.0
        %2722 = vmatprep.subr.mxu0 0.0
        %2723 = vmatpush1.msra.mxu0 0.0
        %2724 = vmatprep.mubr.f32.mxu0 0.0
        %2725 = vmatmul.mubr.f32.gmra.mrb[0].mxu0 %v2658
        %v2726 = vpop.f32.mrb[0].mxu0
        %v2727 = vadd.f32 0.0, %v2726
        %v2728 = vpop.f32.mrb[0].mxu0
        %2729 = vdwg.mxu0
        %v2730 = vmax.f32 %v2727, 0.0
        %v2731 = vld [vmem:[%s14] sm:$0xff]
        %v2732 = vld [vmem:[%s14 + $0x8] sm:$0xff]
        %v2733 = vld [vmem:[%s14 + $0x10] sm:$0xff]
        %v2734 = vld [vmem:[%s14 + $0x18] sm:$0xff]
        %v2735 = vld [vmem:[%s14 + $0x20] sm:$0xff]
        %v2736 = vld [vmem:[%s14 + $0x28] sm:$0xff]
        %v2737 = vld [vmem:[%s14 + $0x30] sm:$0xff]
        %v2738 = vld [vmem:[%s14 + $0x38] sm:$0xff]
        %vm2739 = vcmask 523264
        %v2741 = vsel %vm2739, %v2730, 0
        %2743 = vmatprep.subr.mxu0 0.0
        %2744 = vmatpush1.msra.mxu0 %v2731
        %2745 = vmatprep.subr.mxu0 0.0
        %2746 = vmatpush1.msra.mxu0 %v2732
        %2747 = vmatprep.subr.mxu0 0.0
        %2748 = vmatpush1.msra.mxu0 %v2733
        %2749 = vmatprep.subr.mxu0 0.0
        %2750 = vmatpush1.msra.mxu0 %v2734
        %2751 = vmatprep.subr.mxu0 0.0
        %2752 = vmatpush1.msra.mxu0 %v2735
        %2753 = vmatprep.subr.mxu0 0.0
        %2754 = vmatpush1.msra.mxu0 %v2736
        %2755 = vmatprep.subr.mxu0 0.0
        %2756 = vmatpush1.msra.mxu0 %v2737
        %2757 = vmatprep.subr.mxu0 0.0
        %2758 = vmatpush1.msra.mxu0 %v2738
        %2759 = vmatprep.subr.mxu0 0.0
        %2760 = vmatpush1.msra.mxu0 0.0
        %2761 = vmatprep.subr.mxu0 0.0
        %2762 = vmatpush1.msra.mxu0 0.0
        %2763 = vmatprep.subr.mxu0 0.0
        %2764 = vmatpush1.msra.mxu0 0.0
        %2765 = vmatprep.subr.mxu0 0.0
        %2766 = vmatpush1.msra.mxu0 0.0
        %2767 = vmatprep.subr.mxu0 0.0
        %2768 = vmatpush1.msra.mxu0 0.0
        %2769 = vmatprep.subr.mxu0 0.0
        %2770 = vmatpush1.msra.mxu0 0.0
        %2771 = vmatprep.subr.mxu0 0.0
        %2772 = vmatpush1.msra.mxu0 0.0
        %2773 = vmatprep.subr.mxu0 0.0
        %2774 = vmatpush1.msra.mxu0 0.0
        %2775 = vmatprep.subr.mxu0 0.0
        %2776 = vmatpush1.msra.mxu0 0.0
        %2777 = vmatprep.subr.mxu0 0.0
        %2778 = vmatpush1.msra.mxu0 0.0
        %2779 = vmatprep.subr.mxu0 0.0
        %2780 = vmatpush1.msra.mxu0 0.0
        %2781 = vmatprep.subr.mxu0 0.0
        %2782 = vmatpush1.msra.mxu0 0.0
        %2783 = vmatprep.subr.mxu0 0.0
        %2784 = vmatpush1.msra.mxu0 0.0
        %2785 = vmatprep.subr.mxu0 0.0
        %2786 = vmatpush1.msra.mxu0 0.0
        %2787 = vmatprep.subr.mxu0 0.0
        %2788 = vmatpush1.msra.mxu0 0.0
        %2789 = vmatprep.subr.mxu0 0.0
        %2790 = vmatpush1.msra.mxu0 0.0
        %2791 = vmatprep.subr.mxu0 0.0
        %2792 = vmatpush1.msra.mxu0 0.0
        %2793 = vmatprep.subr.mxu0 0.0
        %2794 = vmatpush1.msra.mxu0 0.0
        %2795 = vmatprep.subr.mxu0 0.0
        %2796 = vmatpush1.msra.mxu0 0.0
        %2797 = vmatprep.subr.mxu0 0.0
        %2798 = vmatpush1.msra.mxu0 0.0
        %2799 = vmatprep.subr.mxu0 0.0
        %2800 = vmatpush1.msra.mxu0 0.0
        %2801 = vmatprep.subr.mxu0 0.0
        %2802 = vmatpush1.msra.mxu0 0.0
        %2803 = vmatprep.subr.mxu0 0.0
        %2804 = vmatpush1.msra.mxu0 0.0
        %2805 = vmatprep.subr.mxu0 0.0
        %2806 = vmatpush1.msra.mxu0 0.0
        %2807 = vmatprep.mubr.f32.mxu0 0.0
        %2808 = vmatmul.mubr.f32.gmra.mrb[0].mxu0 %v2741
        %v2809 = vpop.f32.mrb[0].mxu0
        %v2810 = vadd.f32 %v2652, %v2809
        %v2811 = vpop.f32.mrb[0].mxu0
        %2812 = vdwg.mxu0
        %v2813 = vsel %vm794, %v2810, 0.0
        %2814 = vadd.xlane.f32.xlu0 %v2813
        %v2815 = vpop.xlane.xlu0 %2814
        %v2816 = vmul.f32 %v2815, %v1645
        %v2817 = vsub.f32 %v2810, %v2816
        %v2818 = vmul.f32 %v2817, %v2817
        %v2819 = vsel %vm794, %v2818, 0.0
        %2820 = vadd.xlane.f32.xlu0 %v2819
        %v2821 = vpop.xlane.xlu0 %2820
        %v2822 = vmul.f32 %v2821, %v1645
        %v2823 = vadd.f32 %v2822, 1e-05
        %v2824 = vrsqrt.pop %v2823
        %v2825 = vmul.f32 %v2817, %v2824
        %v2826 = vld [vmem:[%s15] sm:$0x1]
        %v2828 = vlaneseq
        %v2829 = vshrl.u32 %v2828, 7
        %v2830 = vsub.s32 0, %v2829
        %v2831 = vrot.slane %v2826, %v2830
        %v2833 = vmul.f32 %v2825, %v2831
        %v2834 = vld [vmem:[%s16] sm:$0x1]
        %v2836 = vlaneseq
        %v2837 = vshrl.u32 %v2836, 7
        %v2838 = vsub.s32 0, %v2837
        %v2839 = vrot.slane %v2834, %v2838
        %v2841 = vadd.f32 %v2833, %v2839
        %2842 = vst.msk [vmem:[%s766] sm:$0xff] %vm794, %v2841
        %s2843 = sand.u32 %s430, 1
        %s2844 = scalar_lea.sflag [#allocation4], %s2843
        %s2845 = sand.u32 %s430, 1
        %s2846 = smul.addr %s2845, 8
        %s2847 = scalar_lea.vmem [#allocation14], %s2846
        %s2848 = sand.u32 %s45, 1
        %s2849 = scalar_lea.sflag [#allocation16], %s2848
        %s2850 = sand.u32 %s456, 1
        %s2851 = smul.addr %s2850, 32
        %s2852 = scalar_lea.vmem [#allocation15], %s2851
        %s2853 = sand.u32 %s45, 1
        %s2854 = scalar_lea.sflag [#allocation16], %s2853
        %s2855 = sand.u32 %s482, 1
        %s2856 = smul.addr %s2855, 32
        %s2857 = scalar_lea.vmem [#allocation17], %s2856
        // Predicated region
        $region117: #{tpu_custom_call.1} parent=87 // pred_check
          %p2858 = pneg %p440
        $region118: #{tpu_custom_call.1} parent=87 // pred_check_branch
          %2860 = sbr.rel (%p2858) target = $region120
        $region119: #{tpu_custom_call.1} parent=87 // pred_region
          %s2862 = ssub.s32 128, 128
          %2863 = vsyncadd %s2844, %s2862
          %s2864 = smul.addr %s45, 128
          %s2865 = scalar_lea.hbm %s17, %s2864
          %s2867 = sshll.u32 %s2847, 4
          %s2868 = int_to_ptr.vmem [resolvable:$true] %s2867
          %2870 = dma.vmem_to_hbm [thread:$0]  %s2868, 128, %s2865, %s2844
        $region120: #{tpu_custom_call.1} parent=87 // pred_fallthru
          _
        // Predicated region
        $region121: #{tpu_custom_call.1} parent=87 // pred_check
          %p2871 = pneg %p466
        $region122: #{tpu_custom_call.1} parent=87 // pred_check_branch
          %2873 = sbr.rel (%p2871) target = $region124
        $region123: #{tpu_custom_call.1} parent=87 // pred_region
          %s2875 = ssub.s32 512, 512
          %2876 = vsyncadd %s2849, %s2875
          %s2877 = smul.addr %s45, 4
          %s2878 = smul.addr %s2877, 128
          %s2879 = scalar_lea.hbm %s18, %s2878
          %s2880 = sshll.u32 %s2852, 4
          %s2881 = int_to_ptr.vmem [resolvable:$true] %s2880
          %2886 = dma.vmem_to_hbm [thread:$0]  %s2881, 512, %s2879, %s2849, 128, 128, 8
        $region124: #{tpu_custom_call.1} parent=87 // pred_fallthru
          _
        // Predicated region
        $region125: #{tpu_custom_call.1} parent=87 // pred_check
          %p2887 = pneg %p492
        $region126: #{tpu_custom_call.1} parent=87 // pred_check_branch
          %2889 = sbr.rel (%p2887) target = $region128
        $region127: #{tpu_custom_call.1} parent=87 // pred_region
          %s2891 = ssub.s32 512, 512
          %2892 = vsyncadd %s2854, %s2891
          %s2893 = smul.addr %s45, 4
          %s2894 = smul.addr %s2893, 128
          %s2895 = scalar_lea.hbm %s19, %s2894
          %s2896 = sshll.u32 %s2857, 4
          %s2897 = int_to_ptr.vmem [resolvable:$true] %s2896
          %2902 = dma.vmem_to_hbm [thread:$0]  %s2897, 512, %s2895, %s2854, 128, 128, 8
        $region128: #{tpu_custom_call.1} parent=87 // pred_fallthru
          _
      $region88: #{tpu_custom_call.1} parent=5 // pred_fallthru
        _
      %p2903 = scmp.le.s32.totalorder 2, %s40
      // Predicated region
      $region129: #{tpu_custom_call.1} parent=5 // pred_check
        %p2904 = pneg %p2903
      $region130: #{tpu_custom_call.1} parent=5 // pred_check_branch
        %2906 = sbr.rel (%p2904) target = $region132
      $region131: #{tpu_custom_call.1} parent=5 // pred_region
        %s2907 = ssub.s32 %s40, 2
        // Predicated region
        $region133: #{tpu_custom_call.1} parent=131 // pred_check
          %p2908 = pneg %p446
        $region134: #{tpu_custom_call.1} parent=131 // pred_check_branch
          %2910 = sbr.rel (%p2908) target = $region136
        $region135: #{tpu_custom_call.1} parent=131 // pred_region
          %s2911 = sand.u32 %s431, 1
          %s2912 = scalar_lea.sflag [#allocation4], %s2911
          %s2913 = sand.u32 %s431, 1
          %s2914 = smul.addr %s2913, 8
          %s2915 = scalar_lea.vmem [#allocation14], %s2914
          %2916 = dma.done %s2912, 128
        $region136: #{tpu_custom_call.1} parent=131 // pred_fallthru
          _
        // Predicated region
        $region137: #{tpu_custom_call.1} parent=131 // pred_check
          %p2917 = pneg %p472
        $region138: #{tpu_custom_call.1} parent=131 // pred_check_branch
          %2919 = sbr.rel (%p2917) target = $region140
        $region139: #{tpu_custom_call.1} parent=131 // pred_region
          %s2920 = sand.u32 %s46, 1
          %s2921 = scalar_lea.sflag [#allocation16], %s2920
          %s2922 = sand.u32 %s457, 1
          %s2923 = smul.addr %s2922, 32
          %s2924 = scalar_lea.vmem [#allocation15], %s2923
          %2925 = dma.done %s2921, 512
        $region140: #{tpu_custom_call.1} parent=131 // pred_fallthru
          _
        // Predicated region
        $region141: #{tpu_custom_call.1} parent=131 // pred_check
          %p2926 = pneg %p498
        $region142: #{tpu_custom_call.1} parent=131 // pred_check_branch
          %2928 = sbr.rel (%p2926) target = $region144
        $region143: #{tpu_custom_call.1} parent=131 // pred_region
          %s2929 = sand.u32 %s46, 1
          %s2930 = scalar_lea.sflag [#allocation16], %s2929
          %s2931 = sand.u32 %s483, 1
          %s2932 = smul.addr %s2931, 32
          %s2933 = scalar_lea.vmem [#allocation17], %s2932
          %2934 = dma.done %s2930, 512
        $region144: #{tpu_custom_call.1} parent=131 // pred_fallthru
          _
      $region132: #{tpu_custom_call.1} parent=5 // pred_fallthru
        _
    $region6: #{tpu_custom_call.1} parent=1 // loop_footer
      %s44 = sadd.s32 1, %s40
    $region7: #{tpu_custom_call.1} parent=1 // loop_footer_branch
      %39 = sbr.rel target = $region3
    $region8: #{tpu_custom_call.1} parent=1 // loop_exit
      _
    %2935 = vsyncpa [#allocation3], 1
    %s2936 = scalar_lea.sflag [#allocation3], 1
    %2937 = vsyncpa %s2936, 1
    %2938 = vsyncpa [#allocation6], 1
    %s2939 = scalar_lea.sflag [#allocation6], 1
    %2940 = vsyncpa %s2939, 1
    %2941 = vsyncpa [#allocation9], 1
    %2942 = vsyncpa [#allocation12], 1
    %2943 = vsyncpa [#allocation4], 1
    %s2944 = scalar_lea.sflag [#allocation4], 1
    %2945 = vsyncpa %s2944, 1
    %2946 = vsyncpa [#allocation16], 1
    %s2947 = scalar_lea.sflag [#allocation16], 1
    %2948 = vsyncpa %s2947, 1

</llo_original>
